<compile_context>
chip_gen: v5e
topology: v5e:2x2
jax: 0.10.0
libtpu: 0.0.40
codegen_flags: <defaults>
</compile_context>

<pallas_src>
import math

import jax
import jax.numpy as jnp
from jax.experimental import pallas as pl
from jax.experimental.pallas import tpu as pltpu

D_MODEL = 32
N_HEADS = 4
D_K = D_MODEL // N_HEADS
D_FF = 64
N_LAYERS = 2
EPS = 1e-6
MASK_VALUE = 1e9          # matches torch masked_fill(mask == 0, -1e9)

# --------------------------- parameter slab layout --------------------------
# Per-layer block (ROWS_PER_LAYER rows, 128 lanes):
#   rows [  0, 32): self-attn [Wq*inv_sqrt_dk | Wk | Wv | Wo]  (32x32 each,
#                   at lane offsets 0 / 32 / 64 / 96)
#   rows [ 32, 64): src-attn  [Wq*inv_sqrt_dk | Wk | Wv | Wo]
#   rows [ 64, 96): FFN W1 (32x64, lanes 0:64)
#   rows [ 96,160): FFN W2 (64x32, lanes 0:32)
#   rows [160,176): one (1, c) vector per row at lane offset 0 (biases + LN)
_R_SA_W, _R_CA_W, _R_FF_W1, _R_FF_W2, _R_VEC = 0, 32, 64, 96, 160
(_V_SA_BQ, _V_SA_BK, _V_SA_BV, _V_SA_BO,
 _V_CA_BQ, _V_CA_BK, _V_CA_BV, _V_CA_BO,
 _V_FF_B1, _V_FF_B2,
 _V_LN1A, _V_LN1B, _V_LN2A, _V_LN2B, _V_LN3A, _V_LN3B) = range(16)
ROWS_PER_LAYER = 176
_R_FINAL = N_LAYERS * ROWS_PER_LAYER            # final LayerNorm a (row), b (row+1)
SLAB_ROWS = ((_R_FINAL + 2 + 7) // 8) * 8
SLAB_LANES = 128

# Contract the last dim of both operands: q @ k_bd.T, handled natively by the MXU.
_TRANS_B = (((1,), (1,)), ((), ()))


# ----------------------- in-kernel building blocks --------------------------

def _layer_norm(x, a, b):
    # Annotated-Transformer LayerNorm: a*(x-mean)/(std+eps)+b, std unbiased
    # (torch.Tensor.std default, ddof=1).  One exact reciprocal per row, then
    # cheap VPU multiplies (no full-width broadcast divide).
    d = x.shape[-1]
    mean = jnp.mean(x, axis=-1, keepdims=True)
    diff = x - mean
    var = jnp.sum(diff * diff, axis=-1, keepdims=True) * (1.0 / (d - 1))
    inv = 1.0 / (jnp.sqrt(var) + EPS)            # (rows, 1): one divide per row
    return a * (diff * inv) + b


def _head_structure(n_kv):
    """Constant head-block structure matrices (built once per kernel call).

    hmask   (H*n_kv, D)      : 1 where row-block h meets head-h lanes.
    seg_sum (H*n_kv, H*n_kv) : 1 where both indices fall in the same head
                               block; p @ seg_sum = per-head softmax denom,
                               already broadcast to every column of the block.
    Built from iota + compares only (no integer division) so it lowers cleanly.
    """
    n = N_HEADS * n_kv
    r = jax.lax.broadcasted_iota(jnp.int32, (n, D_MODEL), 0)
    c = jax.lax.broadcasted_iota(jnp.int32, (n, D_MODEL), 1)
    hmask = jnp.zeros((n, D_MODEL), jnp.float32)
    for h in range(N_HEADS):
        in_block = ((r >= h * n_kv) & (r < (h + 1) * n_kv) &
                    (c >= h * D_K) & (c < (h + 1) * D_K))
        hmask = hmask + in_block.astype(jnp.float32)
    # seg_sum[r1, r2] = (hmask @ hmask.T) / D_K  ->  exactly 1.0 / 0.0.
    seg_sum = jax.lax.dot_general(hmask, hmask, _TRANS_B,
                                  preferred_element_type=jnp.float32) * (1.0 / D_K)
    return hmask, seg_sum


def _attention(q, k, v, add_mask, hmask, seg_sum, wo, bo):
    """All heads / all batch rows in one shot (no per-head or per-batch loop).

    q: (Nq, D), k/v: (Nkv, D) with heads packed in lanes (q already carries
    the 1/sqrt(d_k) scale via Wq).  K/V are expanded to block-diagonal
    (H*Nkv, D) operands so scores, the denominator segment sum and PV are
    each one whole-tile MXU matmul; PV comes out head-packed in lanes.
    `add_mask` already encodes causal/src masking, the cross-batch
    block-diagonal structure and the head tiling (0 visible, -1e9 masked).
    """
    k_bd = jnp.concatenate([k] * N_HEADS, axis=0) * hmask        # (H*Nkv, D)
    v_bd = jnp.concatenate([v] * N_HEADS, axis=0) * hmask
    s = jax.lax.dot_general(q, k_bd, _TRANS_B,
                            preferred_element_type=jnp.float32)  # (Nq, H*Nkv)
    s = s + add_mask
    # A row-global max is a valid shift for every head segment (softmax is
    # shift invariant); masked entries sit at ~-1e9 and exp to exactly 0.
    p = jnp.exp(s - jnp.max(s, axis=-1, keepdims=True))
    denom = jnp.dot(p, seg_sum, preferred_element_type=jnp.float32)
    p = p / denom                                                # exact (torch parity)
    o = jnp.dot(p, v_bd, preferred_element_type=jnp.float32)     # (Nq, D) head-packed
    return jnp.dot(o, wo, preferred_element_type=jnp.float32) + bo


def _w(slab_ref, base, r, c, nrows, ncols):
    return slab_ref[base + r: base + r + nrows, c: c + ncols]


def _vec(slab_ref, base, i, ncols):
    r = base + _R_VEC + i
    return slab_ref[r: r + 1, 0: ncols]


# ------------------------------ fused kernel --------------------------------

def _decoder_kernel(x_ref, mem_ref, mask_self_ref, mask_cross_ref, slab_ref, o_ref):
    n_q = x_ref.shape[0]        # B * S_tgt
    n_kv = mem_ref.shape[0]     # B * S_src
    D = D_MODEL

    x = x_ref[...]              # (B*S_tgt, D)
    mem = mem_ref[...]          # (B*S_src, D)
    amask_self = mask_self_ref[...]
    amask_cross = mask_cross_ref[...]

    # Head-structure constants, built once and reused by every layer.
    hmask_t, segsum_t = _head_structure(n_q)
    if n_kv == n_q:
        hmask_s, segsum_s = hmask_t, segsum_t
    else:
        hmask_s, segsum_s = _head_structure(n_kv)

    for layer in range(N_LAYERS):            # static, unrolled over layers
        base = layer * ROWS_PER_LAYER

        # --- masked self-attention sublayer (pre-norm + residual) ---
        nx = _layer_norm(x, _vec(slab_ref, base, _V_LN1A, D),
                         _vec(slab_ref, base, _V_LN1B, D))
        q = jnp.dot(nx, _w(slab_ref, base, _R_SA_W, 0, D, D),
                    preferred_element_type=jnp.float32) + _vec(slab_ref, base, _V_SA_BQ, D)
        k = jnp.dot(nx, _w(slab_ref, base, _R_SA_W, 32, D, D),
                    preferred_element_type=jnp.float32) + _vec(slab_ref, base, _V_SA_BK, D)
        v = jnp.dot(nx, _w(slab_ref, base, _R_SA_W, 64, D, D),
                    preferred_element_type=jnp.float32) + _vec(slab_ref, base, _V_SA_BV, D)
        x = x + _attention(q, k, v, amask_self, hmask_t, segsum_t,
                           _w(slab_ref, base, _R_SA_W, 96, D, D),
                           _vec(slab_ref, base, _V_SA_BO, D))

        # --- source attention sublayer (K/V from encoder memory) ---
        nx = _layer_norm(x, _vec(slab_ref, base, _V_LN2A, D),
                         _vec(slab_ref, base, _V_LN2B, D))
        q = jnp.dot(nx, _w(slab_ref, base, _R_CA_W, 0, D, D),
                    preferred_element_type=jnp.float32) + _vec(slab_ref, base, _V_CA_BQ, D)
        k = jnp.dot(mem, _w(slab_ref, base, _R_CA_W, 32, D, D),
                    preferred_element_type=jnp.float32) + _vec(slab_ref, base, _V_CA_BK, D)
        v = jnp.dot(mem, _w(slab_ref, base, _R_CA_W, 64, D, D),
                    preferred_element_type=jnp.float32) + _vec(slab_ref, base, _V_CA_BV, D)
        x = x + _attention(q, k, v, amask_cross, hmask_s, segsum_s,
                           _w(slab_ref, base, _R_CA_W, 96, D, D),
                           _vec(slab_ref, base, _V_CA_BO, D))

        # --- position-wise feed-forward sublayer ---
        nx = _layer_norm(x, _vec(slab_ref, base, _V_LN3A, D),
                         _vec(slab_ref, base, _V_LN3B, D))
        h = jnp.dot(nx, _w(slab_ref, base, _R_FF_W1, 0, D, D_FF),
                    preferred_element_type=jnp.float32) + _vec(slab_ref, base, _V_FF_B1, D_FF)
        h = jnp.maximum(h, 0.0)
        x = x + jnp.dot(h, _w(slab_ref, base, _R_FF_W2, 0, D_FF, D),
                        preferred_element_type=jnp.float32) + _vec(slab_ref, base, _V_FF_B2, D)

    # Final LayerNorm of the stack.  (32-lane output store is masked but tiny.)
    o_ref[...] = _layer_norm(x,
                             slab_ref[_R_FINAL:_R_FINAL + 1, 0:D],
                             slab_ref[_R_FINAL + 1:_R_FINAL + 2, 0:D])


# ------------------------------- wrapper ------------------------------------

def _expand_additive_mask(mask, batch, s_q, s_k):
    """(B, s_q|1, s_k) 0/1 mask -> additive (B*s_q, H*B*s_k) mask that also
    encodes the cross-batch block-diagonal structure and the head tiling.
    Columns are head-major: c = h*(B*s_k) + b*s_k + j.  0 = visible, -1e9 =
    masked (or different batch)."""
    m = jnp.broadcast_to(mask.astype(jnp.float32), (batch, s_q, s_k))
    eye = jnp.eye(batch, dtype=jnp.float32)
    blk = jnp.einsum("bqk,bc->bqck", m, eye).reshape(batch * s_q, batch * s_k)
    add = (blk - 1.0) * MASK_VALUE
    return jnp.tile(add, (1, N_HEADS))


def decoder_forward(slab, x, memory, src_mask, tgt_mask):
    B, S_T, _ = x.shape
    S_S = memory.shape[1]
    x2 = x.reshape(B * S_T, D_MODEL)
    m2 = memory.reshape(B * S_S, D_MODEL)
    amask_self = _expand_additive_mask(tgt_mask, B, S_T, S_T)
    amask_cross = _expand_additive_mask(src_mask, B, S_T, S_S)

    out = pl.pallas_call(
        _decoder_kernel,
        out_shape=jax.ShapeDtypeStruct((B * S_T, D_MODEL), jnp.float32),
        # Footprint is <1 MiB; this is just explicit headroom that also fits
        # v7x's 64 MiB physical VMEM.  Re-derive if B/S/D ever grow (and add a
        # parallel batch grid axis on v7x at realistic batch sizes).
        compiler_params=pltpu.CompilerParams(vmem_limit_bytes=16 * 1024 * 1024),
    )(x2, m2, amask_self, amask_cross, slab)
    return out.reshape(B, S_T, D_MODEL)


# --------------------- params (torch layout) + packing ----------------------

def init_params(key):
    keys = iter(jax.random.split(key, 64))

    def w(shape, scale=0.05):
        return jax.random.normal(next(keys), shape, jnp.float32) * scale

    def attn():
        return {"wq": w((D_MODEL, D_MODEL)), "bq": w((D_MODEL,), 0.02),
                "wk": w((D_MODEL, D_MODEL)), "bk": w((D_MODEL,), 0.02),
                "wv": w((D_MODEL, D_MODEL)), "bv": w((D_MODEL,), 0.02),
                "wo": w((D_MODEL, D_MODEL)), "bo": w((D_MODEL,), 0.02)}

    layer = {
        "self_attn": attn(),
        "src_attn": attn(),
        "ffn": {"w1": w((D_FF, D_MODEL)), "b1": w((D_FF,), 0.02),
                "w2": w((D_MODEL, D_FF)), "b2": w((D_MODEL,), 0.02)},
    }
    for i in (1, 2, 3):
        layer[f"ln{i}_a"] = 1.0 + w((D_MODEL,), 0.1)
        layer[f"ln{i}_b"] = w((D_MODEL,), 0.1)
    # clones() deep-copies one initialized layer N times -> identical layers.
    return {"layers": [layer for _ in range(N_LAYERS)],
            "norm_a": 1.0 + w((D_MODEL,), 0.1),
            "norm_b": w((D_MODEL,), 0.1)}


def pack_params(params):
    """One-time repack into a single lane-dense (SLAB_ROWS, 128) f32 slab.
    torch Linear stores (out, in) -> transposed to (in, out); the 1/sqrt(d_k)
    attention scale is folded into Wq/bq so the kernel never multiplies it."""
    inv = 1.0 / math.sqrt(D_K)
    slab = jnp.zeros((SLAB_ROWS, SLAB_LANES), jnp.float32)

    def put(s, r, c, m):
        m = jnp.asarray(m, jnp.float32)
        if m.ndim == 1:
            m = m.reshape(1, -1)
        return s.at[r:r + m.shape[0], c:c + m.shape[1]].set(m)

    for l, lp in enumerate(params["layers"]):
        base = l * ROWS_PER_LAYER
        sa, ca, ff = lp["self_attn"], lp["src_attn"], lp["ffn"]
        slab = put(slab, base + _R_SA_W, 0, sa["wq"].T * inv)
        slab = put(slab, base + _R_SA_W, 32, sa["wk"].T)
        slab = put(slab, base + _R_SA_W, 64, sa["wv"].T)
        slab = put(slab, base + _R_SA_W, 96, sa["wo"].T)
        slab = put(slab, base + _R_CA_W, 0, ca["wq"].T * inv)
        slab = put(slab, base + _R_CA_W, 32, ca["wk"].T)
        slab = put(slab, base + _R_CA_W, 64, ca["wv"].T)
        slab = put(slab, base + _R_CA_W, 96, ca["wo"].T)
        slab = put(slab, base + _R_FF_W1, 0, ff["w1"].T)
        slab = put(slab, base + _R_FF_W2, 0, ff["w2"].T)
        vb = base + _R_VEC
        slab = put(slab, vb + _V_SA_BQ, 0, sa["bq"] * inv)
        slab = put(slab, vb + _V_SA_BK, 0, sa["bk"])
        slab = put(slab, vb + _V_SA_BV, 0, sa["bv"])
        slab = put(slab, vb + _V_SA_BO, 0, sa["bo"])
        slab = put(slab, vb + _V_CA_BQ, 0, ca["bq"] * inv)
        slab = put(slab, vb + _V_CA_BK, 0, ca["bk"])
        slab = put(slab, vb + _V_CA_BV, 0, ca["bv"])
        slab = put(slab, vb + _V_CA_BO, 0, ca["bo"])
        slab = put(slab, vb + _V_FF_B1, 0, ff["b1"])
        slab = put(slab, vb + _V_FF_B2, 0, ff["b2"])
        slab = put(slab, vb + _V_LN1A, 0, lp["ln1_a"])
        slab = put(slab, vb + _V_LN1B, 0, lp["ln1_b"])
        slab = put(slab, vb + _V_LN2A, 0, lp["ln2_a"])
        slab = put(slab, vb + _V_LN2B, 0, lp["ln2_b"])
        slab = put(slab, vb + _V_LN3A, 0, lp["ln3_a"])
        slab = put(slab, vb + _V_LN3B, 0, lp["ln3_b"])

    slab = put(slab, _R_FINAL, 0, params["norm_a"])
    slab = put(slab, _R_FINAL + 1, 0, params["norm_b"])
    return slab


# --------------------------- pure-JAX reference -----------------------------

def reference_decoder(params, x, memory, src_mask, tgt_mask):
    def layer_norm(v, a, b):
        mean = v.mean(-1, keepdims=True)
        diff = v - mean
        var = (diff * diff).sum(-1, keepdims=True) / (v.shape[-1] - 1)
        return a * diff / (jnp.sqrt(var) + EPS) + b

    def mha(p, xq, xkv, mask):
        B, Sq, _ = xq.shape
        Sk = xkv.shape[1]

        def split(t, S):
            return t.reshape(B, S, N_HEADS, D_K).transpose(0, 2, 1, 3)

        q = split(xq @ p["wq"].T + p["bq"], Sq)
        k = split(xkv @ p["wk"].T + p["bk"], Sk)
        v = split(xkv @ p["wv"].T + p["bv"], Sk)
        s = jnp.einsum("bhqd,bhkd->bhqk", q, k) / math.sqrt(D_K)
        s = jnp.where(mask[:, None] == 0, -MASK_VALUE, s)
        a = jax.nn.softmax(s, axis=-1)
        o = jnp.einsum("bhqk,bhkd->bhqd", a, v)
        o = o.transpose(0, 2, 1, 3).reshape(B, Sq, D_MODEL)
        return o @ p["wo"].T + p["bo"]

    h = x
    for lp in params["layers"]:
        nx = layer_norm(h, lp["ln1_a"], lp["ln1_b"])
        h = h + mha(lp["self_attn"], nx, nx, tgt_mask)
        nx = layer_norm(h, lp["ln2_a"], lp["ln2_b"])
        h = h + mha(lp["src_attn"], nx, memory, src_mask)
        nx = layer_norm(h, lp["ln3_a"], lp["ln3_b"])
        ff = lp["ffn"]
        hidden = jnp.maximum(nx @ ff["w1"].T + ff["b1"], 0.0)
        h = h + hidden @ ff["w2"].T + ff["b2"]
    return layer_norm(h, params["norm_a"], params["norm_b"])


# ----------------------------------- main -----------------------------------

if __name__ == "__main__":
    key = jax.random.PRNGKey(0)
    B, S_TGT, S_SRC = 2, 8, 8
    kx, km, kp = jax.random.split(key, 3)

    x = jax.random.normal(kx, (B, S_TGT, D_MODEL), jnp.float32)
    memory = jax.random.normal(km, (B, S_SRC, D_MODEL), jnp.float32)
    src_mask = jnp.ones((B, 1, S_SRC), jnp.float32)                 # all source visible
    tgt_mask = jnp.broadcast_to(
        jnp.tril(jnp.ones((S_TGT, S_TGT), jnp.float32))[None], (B, S_TGT, S_TGT))

    params = init_params(kp)
    slab = pack_params(params)                                      # one-time repack

    out = jax.jit(decoder_forward)(slab, x, memory, src_mask, tgt_mask)
    jax.block_until_ready(out)
    assert out.shape == (B, S_TGT, D_MODEL)
    assert bool(jnp.all(jnp.isfinite(out)))

    # Correctness check against a pure-JAX reference (both run at JAX default
    # matmul precision, so tolerances absorb MXU bf16 rounding).
    ref = jax.jit(reference_decoder)(params, x, memory, src_mask, tgt_mask)
    max_err = float(jnp.max(jnp.abs(out - ref)))
    assert max_err < 5e-2, f"kernel vs reference mismatch: max abs err = {max_err}"

    print("KERNEL_OK")
</pallas_src>

<mosaic_0001>
module attributes {stable_mosaic.version = 11 : i64} {
  func.func @_decoder_kernel(%arg0: memref<16x32xf32, #tpu.memory_space<vmem>>, %arg1: memref<16x32xf32, #tpu.memory_space<vmem>>, %arg2: memref<16x64xf32, #tpu.memory_space<vmem>>, %arg3: memref<16x64xf32, #tpu.memory_space<vmem>>, %arg4: memref<360x128xf32, #tpu.memory_space<vmem>>, %arg5: memref<16x32xf32, #tpu.memory_space<vmem>>) attributes {dimension_semantics = [], scalar_prefetch = 0 : i64, scratch_operands = 0 : i64, tpu.core_type = #tpu.core_type<tc>} {
    %c0 = arith.constant 0 : index
    %c0_0 = arith.constant 0 : index
    %0 = vector.load %arg0[%c0, %c0_0] : memref<16x32xf32, #tpu.memory_space<vmem>>, vector<16x32xf32>
    %c0_1 = arith.constant 0 : index
    %c0_2 = arith.constant 0 : index
    %1 = vector.load %arg1[%c0_1, %c0_2] : memref<16x32xf32, #tpu.memory_space<vmem>>, vector<16x32xf32>
    %c0_3 = arith.constant 0 : index
    %c0_4 = arith.constant 0 : index
    %2 = vector.load %arg2[%c0_3, %c0_4] : memref<16x64xf32, #tpu.memory_space<vmem>>, vector<16x64xf32>
    %c0_5 = arith.constant 0 : index
    %c0_6 = arith.constant 0 : index
    %3 = vector.load %arg3[%c0_5, %c0_6] : memref<16x64xf32, #tpu.memory_space<vmem>>, vector<16x64xf32>
    %4 = tpu.iota {dimensions = array<i32: 0>} : vector<64x32xi32>
    %5 = tpu.iota {dimensions = array<i32: 1>} : vector<64x32xi32>
    %cst = arith.constant 0.000000e+00 : f32
    %6 = vector.broadcast %cst : f32 to vector<64x32xf32>
    %c0_i32 = arith.constant 0 : i32
    %7 = vector.broadcast %c0_i32 : i32 to vector<64x32xi32>
    %8 = arith.cmpi sge, %4, %7 : vector<64x32xi32>
    %c16_i32 = arith.constant 16 : i32
    %9 = vector.broadcast %c16_i32 : i32 to vector<64x32xi32>
    %10 = arith.cmpi slt, %4, %9 : vector<64x32xi32>
    %11 = arith.andi %8, %10 : vector<64x32xi1>
    %c0_i32_7 = arith.constant 0 : i32
    %12 = vector.broadcast %c0_i32_7 : i32 to vector<64x32xi32>
    %13 = arith.cmpi sge, %5, %12 : vector<64x32xi32>
    %14 = arith.andi %11, %13 : vector<64x32xi1>
    %c8_i32 = arith.constant 8 : i32
    %15 = vector.broadcast %c8_i32 : i32 to vector<64x32xi32>
    %16 = arith.cmpi slt, %5, %15 : vector<64x32xi32>
    %17 = arith.andi %14, %16 : vector<64x32xi1>
    %18 = arith.extui %17 : vector<64x32xi1> to vector<64x32xi32>
    %19 = arith.sitofp %18 : vector<64x32xi32> to vector<64x32xf32>
    %20 = arith.addf %6, %19 : vector<64x32xf32>
    %c16_i32_8 = arith.constant 16 : i32
    %21 = vector.broadcast %c16_i32_8 : i32 to vector<64x32xi32>
    %22 = arith.cmpi sge, %4, %21 : vector<64x32xi32>
    %c32_i32 = arith.constant 32 : i32
    %23 = vector.broadcast %c32_i32 : i32 to vector<64x32xi32>
    %24 = arith.cmpi slt, %4, %23 : vector<64x32xi32>
    %25 = arith.andi %22, %24 : vector<64x32xi1>
    %c8_i32_9 = arith.constant 8 : i32
    %26 = vector.broadcast %c8_i32_9 : i32 to vector<64x32xi32>
    %27 = arith.cmpi sge, %5, %26 : vector<64x32xi32>
    %28 = arith.andi %25, %27 : vector<64x32xi1>
    %c16_i32_10 = arith.constant 16 : i32
    %29 = vector.broadcast %c16_i32_10 : i32 to vector<64x32xi32>
    %30 = arith.cmpi slt, %5, %29 : vector<64x32xi32>
    %31 = arith.andi %28, %30 : vector<64x32xi1>
    %32 = arith.extui %31 : vector<64x32xi1> to vector<64x32xi32>
    %33 = arith.sitofp %32 : vector<64x32xi32> to vector<64x32xf32>
    %34 = arith.addf %20, %33 : vector<64x32xf32>
    %c32_i32_11 = arith.constant 32 : i32
    %35 = vector.broadcast %c32_i32_11 : i32 to vector<64x32xi32>
    %36 = arith.cmpi sge, %4, %35 : vector<64x32xi32>
    %c48_i32 = arith.constant 48 : i32
    %37 = vector.broadcast %c48_i32 : i32 to vector<64x32xi32>
    %38 = arith.cmpi slt, %4, %37 : vector<64x32xi32>
    %39 = arith.andi %36, %38 : vector<64x32xi1>
    %c16_i32_12 = arith.constant 16 : i32
    %40 = vector.broadcast %c16_i32_12 : i32 to vector<64x32xi32>
    %41 = arith.cmpi sge, %5, %40 : vector<64x32xi32>
    %42 = arith.andi %39, %41 : vector<64x32xi1>
    %c24_i32 = arith.constant 24 : i32
    %43 = vector.broadcast %c24_i32 : i32 to vector<64x32xi32>
    %44 = arith.cmpi slt, %5, %43 : vector<64x32xi32>
    %45 = arith.andi %42, %44 : vector<64x32xi1>
    %46 = arith.extui %45 : vector<64x32xi1> to vector<64x32xi32>
    %47 = arith.sitofp %46 : vector<64x32xi32> to vector<64x32xf32>
    %48 = arith.addf %34, %47 : vector<64x32xf32>
    %c48_i32_13 = arith.constant 48 : i32
    %49 = vector.broadcast %c48_i32_13 : i32 to vector<64x32xi32>
    %50 = arith.cmpi sge, %4, %49 : vector<64x32xi32>
    %c64_i32 = arith.constant 64 : i32
    %51 = vector.broadcast %c64_i32 : i32 to vector<64x32xi32>
    %52 = arith.cmpi slt, %4, %51 : vector<64x32xi32>
    %53 = arith.andi %50, %52 : vector<64x32xi1>
    %c24_i32_14 = arith.constant 24 : i32
    %54 = vector.broadcast %c24_i32_14 : i32 to vector<64x32xi32>
    %55 = arith.cmpi sge, %5, %54 : vector<64x32xi32>
    %56 = arith.andi %53, %55 : vector<64x32xi1>
    %c32_i32_15 = arith.constant 32 : i32
    %57 = vector.broadcast %c32_i32_15 : i32 to vector<64x32xi32>
    %58 = arith.cmpi slt, %5, %57 : vector<64x32xi32>
    %59 = arith.andi %56, %58 : vector<64x32xi1>
    %60 = arith.extui %59 : vector<64x32xi1> to vector<64x32xi32>
    %61 = arith.sitofp %60 : vector<64x32xi32> to vector<64x32xf32>
    %62 = arith.addf %48, %61 : vector<64x32xf32>
    %cst_16 = arith.constant dense<0.000000e+00> : vector<64x64xf32>
    %63 = tpu.matmul %62, %62, %cst_16 {dimension_numbers = #tpu.dot_dimension_numbers<[1], [1], [0], [0], [0, 0, 1, 0], [], []>} : vector<64x32xf32>, vector<64x32xf32>, vector<64x64xf32> -> vector<64x64xf32>
    %cst_17 = arith.constant 1.250000e-01 : f32
    %64 = vector.broadcast %cst_17 : f32 to vector<64x64xf32>
    %65 = arith.mulf %63, %64 : vector<64x64xf32>
    %c170 = arith.constant 170 : index
    %c0_18 = arith.constant 0 : index
    %66 = vector.load %arg4[%c170, %c0_18] : memref<360x128xf32, #tpu.memory_space<vmem>>, vector<1x32xf32>
    %c171 = arith.constant 171 : index
    %c0_19 = arith.constant 0 : index
    %67 = vector.load %arg4[%c171, %c0_19] : memref<360x128xf32, #tpu.memory_space<vmem>>, vector<1x32xf32>
    %cst_20 = arith.constant dense<0.000000e+00> : vector<16xf32>
    %68 = vector.multi_reduction <add>, %0, %cst_20 [1] : vector<16x32xf32> to vector<16xf32>
    %69 = vector.shape_cast %68 : vector<16xf32> to vector<16x1xf32>
    %cst_21 = arith.constant 3.200000e+01 : f32
    %70 = vector.broadcast %cst_21 : f32 to vector<16x1xf32>
    %71 = arith.divf %69, %70 : vector<16x1xf32>
    %72 = vector.broadcast %71 : vector<16x1xf32> to vector<16x32xf32>
    %73 = arith.subf %0, %72 : vector<16x32xf32>
    %74 = arith.mulf %73, %73 : vector<16x32xf32>
    %cst_22 = arith.constant dense<0.000000e+00> : vector<16xf32>
    %75 = vector.multi_reduction <add>, %74, %cst_22 [1] : vector<16x32xf32> to vector<16xf32>
    %76 = vector.shape_cast %75 : vector<16xf32> to vector<16x1xf32>
    %cst_23 = arith.constant 0.0322580636 : f32
    %77 = vector.broadcast %cst_23 : f32 to vector<16x1xf32>
    %78 = arith.mulf %76, %77 : vector<16x1xf32>
    %79 = math.sqrt %78 : vector<16x1xf32>
    %cst_24 = arith.constant 9.99999997E-7 : f32
    %80 = vector.broadcast %cst_24 : f32 to vector<16x1xf32>
    %81 = arith.addf %79, %80 : vector<16x1xf32>
    %cst_25 = arith.constant 1.000000e+00 : f32
    %82 = vector.broadcast %cst_25 : f32 to vector<16x1xf32>
    %83 = arith.divf %82, %81 : vector<16x1xf32>
    %84 = vector.broadcast %83 : vector<16x1xf32> to vector<16x32xf32>
    %85 = arith.mulf %73, %84 : vector<16x32xf32>
    %86 = vector.broadcast %66 : vector<1x32xf32> to vector<16x32xf32>
    %87 = arith.mulf %86, %85 : vector<16x32xf32>
    %88 = vector.broadcast %67 : vector<1x32xf32> to vector<16x32xf32>
    %89 = arith.addf %87, %88 : vector<16x32xf32>
    %c0_26 = arith.constant 0 : index
    %c0_27 = arith.constant 0 : index
    %90 = vector.load %arg4[%c0_26, %c0_27] : memref<360x128xf32, #tpu.memory_space<vmem>>, vector<32x32xf32>
    %cst_28 = arith.constant dense<0.000000e+00> : vector<16x32xf32>
    %91 = tpu.matmul %89, %90, %cst_28 {dimension_numbers = #tpu.dot_dimension_numbers<[1], [0], [0], [1], [0, 0, 1, 1], [], []>} : vector<16x32xf32>, vector<32x32xf32>, vector<16x32xf32> -> vector<16x32xf32>
    %c160 = arith.constant 160 : index
    %c0_29 = arith.constant 0 : index
    %92 = vector.load %arg4[%c160, %c0_29] : memref<360x128xf32, #tpu.memory_space<vmem>>, vector<1x32xf32>
    %93 = vector.broadcast %92 : vector<1x32xf32> to vector<16x32xf32>
    %94 = arith.addf %91, %93 : vector<16x32xf32>
    %c0_30 = arith.constant 0 : index
    %c32 = arith.constant 32 : index
    %95 = vector.load %arg4[%c0_30, %c32] : memref<360x128xf32, #tpu.memory_space<vmem>>, vector<32x32xf32>
    %cst_31 = arith.constant dense<0.000000e+00> : vector<16x32xf32>
    %96 = tpu.matmul %89, %95, %cst_31 {dimension_numbers = #tpu.dot_dimension_numbers<[1], [0], [0], [1], [0, 0, 1, 1], [], []>} : vector<16x32xf32>, vector<32x32xf32>, vector<16x32xf32> -> vector<16x32xf32>
    %c161 = arith.constant 161 : index
    %c0_32 = arith.constant 0 : index
    %97 = vector.load %arg4[%c161, %c0_32] : memref<360x128xf32, #tpu.memory_space<vmem>>, vector<1x32xf32>
    %98 = vector.broadcast %97 : vector<1x32xf32> to vector<16x32xf32>
    %99 = arith.addf %96, %98 : vector<16x32xf32>
    %c0_33 = arith.constant 0 : index
    %c64 = arith.constant 64 : index
    %100 = vector.load %arg4[%c0_33, %c64] : memref<360x128xf32, #tpu.memory_space<vmem>>, vector<32x32xf32>
    %cst_34 = arith.constant dense<0.000000e+00> : vector<16x32xf32>
    %101 = tpu.matmul %89, %100, %cst_34 {dimension_numbers = #tpu.dot_dimension_numbers<[1], [0], [0], [1], [0, 0, 1, 1], [], []>} : vector<16x32xf32>, vector<32x32xf32>, vector<16x32xf32> -> vector<16x32xf32>
    %c162 = arith.constant 162 : index
    %c0_35 = arith.constant 0 : index
    %102 = vector.load %arg4[%c162, %c0_35] : memref<360x128xf32, #tpu.memory_space<vmem>>, vector<1x32xf32>
    %103 = vector.broadcast %102 : vector<1x32xf32> to vector<16x32xf32>
    %104 = arith.addf %101, %103 : vector<16x32xf32>
    %c0_36 = arith.constant 0 : index
    %c96 = arith.constant 96 : index
    %105 = vector.load %arg4[%c0_36, %c96] : memref<360x128xf32, #tpu.memory_space<vmem>>, vector<32x32xf32>
    %c163 = arith.constant 163 : index
    %c0_37 = arith.constant 0 : index
    %106 = vector.load %arg4[%c163, %c0_37] : memref<360x128xf32, #tpu.memory_space<vmem>>, vector<1x32xf32>
    %107 = tpu.concatenate %99, %99, %99, %99 in 0 : vector<16x32xf32>, vector<16x32xf32>, vector<16x32xf32>, vector<16x32xf32> -> vector<64x32xf32>
    %108 = arith.mulf %107, %62 : vector<64x32xf32>
    %109 = tpu.concatenate %104, %104, %104, %104 in 0 : vector<16x32xf32>, vector<16x32xf32>, vector<16x32xf32>, vector<16x32xf32> -> vector<64x32xf32>
    %110 = arith.mulf %109, %62 : vector<64x32xf32>
    %cst_38 = arith.constant dense<0.000000e+00> : vector<16x64xf32>
    %111 = tpu.matmul %94, %108, %cst_38 {dimension_numbers = #tpu.dot_dimension_numbers<[1], [1], [0], [0], [0, 0, 1, 0], [], []>} : vector<16x32xf32>, vector<64x32xf32>, vector<16x64xf32> -> vector<16x64xf32>
    %112 = arith.addf %111, %2 : vector<16x64xf32>
    %cst_39 = arith.constant dense<0xFF800000> : vector<16xf32>
    %113 = vector.multi_reduction <maximumf>, %112, %cst_39 [1] : vector<16x64xf32> to vector<16xf32>
    %114 = vector.shape_cast %113 : vector<16xf32> to vector<16x1xf32>
    %115 = vector.broadcast %114 : vector<16x1xf32> to vector<16x64xf32>
    %116 = arith.subf %112, %115 : vector<16x64xf32>
    %117 = math.exp %116 : vector<16x64xf32>
    %cst_40 = arith.constant dense<0.000000e+00> : vector<16x64xf32>
    %118 = tpu.matmul %117, %65, %cst_40 {dimension_numbers = #tpu.dot_dimension_numbers<[1], [0], [0], [1], [0, 0, 1, 1], [], []>} : vector<16x64xf32>, vector<64x64xf32>, vector<16x64xf32> -> vector<16x64xf32>
    %119 = arith.divf %117, %118 : vector<16x64xf32>
    %cst_41 = arith.constant dense<0.000000e+00> : vector<16x32xf32>
    %120 = tpu.matmul %119, %110, %cst_41 {dimension_numbers = #tpu.dot_dimension_numbers<[1], [0], [0], [1], [0, 0, 1, 1], [], []>} : vector<16x64xf32>, vector<64x32xf32>, vector<16x32xf32> -> vector<16x32xf32>
    %cst_42 = arith.constant dense<0.000000e+00> : vector<16x32xf32>
    %121 = tpu.matmul %120, %105, %cst_42 {dimension_numbers = #tpu.dot_dimension_numbers<[1], [0], [0], [1], [0, 0, 1, 1], [], []>} : vector<16x32xf32>, vector<32x32xf32>, vector<16x32xf32> -> vector<16x32xf32>
    %122 = vector.broadcast %106 : vector<1x32xf32> to vector<16x32xf32>
    %123 = arith.addf %121, %122 : vector<16x32xf32>
    %124 = arith.addf %0, %123 : vector<16x32xf32>
    %c172 = arith.constant 172 : index
    %c0_43 = arith.constant 0 : index
    %125 = vector.load %arg4[%c172, %c0_43] : memref<360x128xf32, #tpu.memory_space<vmem>>, vector<1x32xf32>
    %c173 = arith.constant 173 : index
    %c0_44 = arith.constant 0 : index
    %126 = vector.load %arg4[%c173, %c0_44] : memref<360x128xf32, #tpu.memory_space<vmem>>, vector<1x32xf32>
    %cst_45 = arith.constant dense<0.000000e+00> : vector<16xf32>
    %127 = vector.multi_reduction <add>, %124, %cst_45 [1] : vector<16x32xf32> to vector<16xf32>
    %128 = vector.shape_cast %127 : vector<16xf32> to vector<16x1xf32>
    %cst_46 = arith.constant 3.200000e+01 : f32
    %129 = vector.broadcast %cst_46 : f32 to vector<16x1xf32>
    %130 = arith.divf %128, %129 : vector<16x1xf32>
    %131 = vector.broadcast %130 : vector<16x1xf32> to vector<16x32xf32>
    %132 = arith.subf %124, %131 : vector<16x32xf32>
    %133 = arith.mulf %132, %132 : vector<16x32xf32>
    %cst_47 = arith.constant dense<0.000000e+00> : vector<16xf32>
    %134 = vector.multi_reduction <add>, %133, %cst_47 [1] : vector<16x32xf32> to vector<16xf32>
    %135 = vector.shape_cast %134 : vector<16xf32> to vector<16x1xf32>
    %cst_48 = arith.constant 0.0322580636 : f32
    %136 = vector.broadcast %cst_48 : f32 to vector<16x1xf32>
    %137 = arith.mulf %135, %136 : vector<16x1xf32>
    %138 = math.sqrt %137 : vector<16x1xf32>
    %cst_49 = arith.constant 9.99999997E-7 : f32
    %139 = vector.broadcast %cst_49 : f32 to vector<16x1xf32>
    %140 = arith.addf %138, %139 : vector<16x1xf32>
    %cst_50 = arith.constant 1.000000e+00 : f32
    %141 = vector.broadcast %cst_50 : f32 to vector<16x1xf32>
    %142 = arith.divf %141, %140 : vector<16x1xf32>
    %143 = vector.broadcast %142 : vector<16x1xf32> to vector<16x32xf32>
    %144 = arith.mulf %132, %143 : vector<16x32xf32>
    %145 = vector.broadcast %125 : vector<1x32xf32> to vector<16x32xf32>
    %146 = arith.mulf %145, %144 : vector<16x32xf32>
    %147 = vector.broadcast %126 : vector<1x32xf32> to vector<16x32xf32>
    %148 = arith.addf %146, %147 : vector<16x32xf32>
    %c32_51 = arith.constant 32 : index
    %c0_52 = arith.constant 0 : index
    %149 = vector.load %arg4[%c32_51, %c0_52] : memref<360x128xf32, #tpu.memory_space<vmem>>, vector<32x32xf32>
    %cst_53 = arith.constant dense<0.000000e+00> : vector<16x32xf32>
    %150 = tpu.matmul %148, %149, %cst_53 {dimension_numbers = #tpu.dot_dimension_numbers<[1], [0], [0], [1], [0, 0, 1, 1], [], []>} : vector<16x32xf32>, vector<32x32xf32>, vector<16x32xf32> -> vector<16x32xf32>
    %c164 = arith.constant 164 : index
    %c0_54 = arith.constant 0 : index
    %151 = vector.load %arg4[%c164, %c0_54] : memref<360x128xf32, #tpu.memory_space<vmem>>, vector<1x32xf32>
    %152 = vector.broadcast %151 : vector<1x32xf32> to vector<16x32xf32>
    %153 = arith.addf %150, %152 : vector<16x32xf32>
    %c32_55 = arith.constant 32 : index
    %c32_56 = arith.constant 32 : index
    %154 = vector.load %arg4[%c32_55, %c32_56] : memref<360x128xf32, #tpu.memory_space<vmem>>, vector<32x32xf32>
    %cst_57 = arith.constant dense<0.000000e+00> : vector<16x32xf32>
    %155 = tpu.matmul %1, %154, %cst_57 {dimension_numbers = #tpu.dot_dimension_numbers<[1], [0], [0], [1], [0, 0, 1, 1], [], []>} : vector<16x32xf32>, vector<32x32xf32>, vector<16x32xf32> -> vector<16x32xf32>
    %c165 = arith.constant 165 : index
    %c0_58 = arith.constant 0 : index
    %156 = vector.load %arg4[%c165, %c0_58] : memref<360x128xf32, #tpu.memory_space<vmem>>, vector<1x32xf32>
    %157 = vector.broadcast %156 : vector<1x32xf32> to vector<16x32xf32>
    %158 = arith.addf %155, %157 : vector<16x32xf32>
    %c32_59 = arith.constant 32 : index
    %c64_60 = arith.constant 64 : index
    %159 = vector.load %arg4[%c32_59, %c64_60] : memref<360x128xf32, #tpu.memory_space<vmem>>, vector<32x32xf32>
    %cst_61 = arith.constant dense<0.000000e+00> : vector<16x32xf32>
    %160 = tpu.matmul %1, %159, %cst_61 {dimension_numbers = #tpu.dot_dimension_numbers<[1], [0], [0], [1], [0, 0, 1, 1], [], []>} : vector<16x32xf32>, vector<32x32xf32>, vector<16x32xf32> -> vector<16x32xf32>
    %c166 = arith.constant 166 : index
    %c0_62 = arith.constant 0 : index
    %161 = vector.load %arg4[%c166, %c0_62] : memref<360x128xf32, #tpu.memory_space<vmem>>, vector<1x32xf32>
    %162 = vector.broadcast %161 : vector<1x32xf32> to vector<16x32xf32>
    %163 = arith.addf %160, %162 : vector<16x32xf32>
    %c32_63 = arith.constant 32 : index
    %c96_64 = arith.constant 96 : index
    %164 = vector.load %arg4[%c32_63, %c96_64] : memref<360x128xf32, #tpu.memory_space<vmem>>, vector<32x32xf32>
    %c167 = arith.constant 167 : index
    %c0_65 = arith.constant 0 : index
    %165 = vector.load %arg4[%c167, %c0_65] : memref<360x128xf32, #tpu.memory_space<vmem>>, vector<1x32xf32>
    %166 = tpu.concatenate %158, %158, %158, %158 in 0 : vector<16x32xf32>, vector<16x32xf32>, vector<16x32xf32>, vector<16x32xf32> -> vector<64x32xf32>
    %167 = arith.mulf %166, %62 : vector<64x32xf32>
    %168 = tpu.concatenate %163, %163, %163, %163 in 0 : vector<16x32xf32>, vector<16x32xf32>, vector<16x32xf32>, vector<16x32xf32> -> vector<64x32xf32>
    %169 = arith.mulf %168, %62 : vector<64x32xf32>
    %cst_66 = arith.constant dense<0.000000e+00> : vector<16x64xf32>
    %170 = tpu.matmul %153, %167, %cst_66 {dimension_numbers = #tpu.dot_dimension_numbers<[1], [1], [0], [0], [0, 0, 1, 0], [], []>} : vector<16x32xf32>, vector<64x32xf32>, vector<16x64xf32> -> vector<16x64xf32>
    %171 = arith.addf %170, %3 : vector<16x64xf32>
    %cst_67 = arith.constant dense<0xFF800000> : vector<16xf32>
    %172 = vector.multi_reduction <maximumf>, %171, %cst_67 [1] : vector<16x64xf32> to vector<16xf32>
    %173 = vector.shape_cast %172 : vector<16xf32> to vector<16x1xf32>
    %174 = vector.broadcast %173 : vector<16x1xf32> to vector<16x64xf32>
    %175 = arith.subf %171, %174 : vector<16x64xf32>
    %176 = math.exp %175 : vector<16x64xf32>
    %cst_68 = arith.constant dense<0.000000e+00> : vector<16x64xf32>
    %177 = tpu.matmul %176, %65, %cst_68 {dimension_numbers = #tpu.dot_dimension_numbers<[1], [0], [0], [1], [0, 0, 1, 1], [], []>} : vector<16x64xf32>, vector<64x64xf32>, vector<16x64xf32> -> vector<16x64xf32>
    %178 = arith.divf %176, %177 : vector<16x64xf32>
    %cst_69 = arith.constant dense<0.000000e+00> : vector<16x32xf32>
    %179 = tpu.matmul %178, %169, %cst_69 {dimension_numbers = #tpu.dot_dimension_numbers<[1], [0], [0], [1], [0, 0, 1, 1], [], []>} : vector<16x64xf32>, vector<64x32xf32>, vector<16x32xf32> -> vector<16x32xf32>
    %cst_70 = arith.constant dense<0.000000e+00> : vector<16x32xf32>
    %180 = tpu.matmul %179, %164, %cst_70 {dimension_numbers = #tpu.dot_dimension_numbers<[1], [0], [0], [1], [0, 0, 1, 1], [], []>} : vector<16x32xf32>, vector<32x32xf32>, vector<16x32xf32> -> vector<16x32xf32>
    %181 = vector.broadcast %165 : vector<1x32xf32> to vector<16x32xf32>
    %182 = arith.addf %180, %181 : vector<16x32xf32>
    %183 = arith.addf %124, %182 : vector<16x32xf32>
    %c174 = arith.constant 174 : index
    %c0_71 = arith.constant 0 : index
    %184 = vector.load %arg4[%c174, %c0_71] : memref<360x128xf32, #tpu.memory_space<vmem>>, vector<1x32xf32>
    %c175 = arith.constant 175 : index
    %c0_72 = arith.constant 0 : index
    %185 = vector.load %arg4[%c175, %c0_72] : memref<360x128xf32, #tpu.memory_space<vmem>>, vector<1x32xf32>
    %cst_73 = arith.constant dense<0.000000e+00> : vector<16xf32>
    %186 = vector.multi_reduction <add>, %183, %cst_73 [1] : vector<16x32xf32> to vector<16xf32>
    %187 = vector.shape_cast %186 : vector<16xf32> to vector<16x1xf32>
    %cst_74 = arith.constant 3.200000e+01 : f32
    %188 = vector.broadcast %cst_74 : f32 to vector<16x1xf32>
    %189 = arith.divf %187, %188 : vector<16x1xf32>
    %190 = vector.broadcast %189 : vector<16x1xf32> to vector<16x32xf32>
    %191 = arith.subf %183, %190 : vector<16x32xf32>
    %192 = arith.mulf %191, %191 : vector<16x32xf32>
    %cst_75 = arith.constant dense<0.000000e+00> : vector<16xf32>
    %193 = vector.multi_reduction <add>, %192, %cst_75 [1] : vector<16x32xf32> to vector<16xf32>
    %194 = vector.shape_cast %193 : vector<16xf32> to vector<16x1xf32>
    %cst_76 = arith.constant 0.0322580636 : f32
    %195 = vector.broadcast %cst_76 : f32 to vector<16x1xf32>
    %196 = arith.mulf %194, %195 : vector<16x1xf32>
    %197 = math.sqrt %196 : vector<16x1xf32>
    %cst_77 = arith.constant 9.99999997E-7 : f32
    %198 = vector.broadcast %cst_77 : f32 to vector<16x1xf32>
    %199 = arith.addf %197, %198 : vector<16x1xf32>
    %cst_78 = arith.constant 1.000000e+00 : f32
    %200 = vector.broadcast %cst_78 : f32 to vector<16x1xf32>
    %201 = arith.divf %200, %199 : vector<16x1xf32>
    %202 = vector.broadcast %201 : vector<16x1xf32> to vector<16x32xf32>
    %203 = arith.mulf %191, %202 : vector<16x32xf32>
    %204 = vector.broadcast %184 : vector<1x32xf32> to vector<16x32xf32>
    %205 = arith.mulf %204, %203 : vector<16x32xf32>
    %206 = vector.broadcast %185 : vector<1x32xf32> to vector<16x32xf32>
    %207 = arith.addf %205, %206 : vector<16x32xf32>
    %c64_79 = arith.constant 64 : index
    %c0_80 = arith.constant 0 : index
    %208 = vector.load %arg4[%c64_79, %c0_80] : memref<360x128xf32, #tpu.memory_space<vmem>>, vector<32x64xf32>
    %cst_81 = arith.constant dense<0.000000e+00> : vector<16x64xf32>
    %209 = tpu.matmul %207, %208, %cst_81 {dimension_numbers = #tpu.dot_dimension_numbers<[1], [0], [0], [1], [0, 0, 1, 1], [], []>} : vector<16x32xf32>, vector<32x64xf32>, vector<16x64xf32> -> vector<16x64xf32>
    %c168 = arith.constant 168 : index
    %c0_82 = arith.constant 0 : index
    %210 = vector.load %arg4[%c168, %c0_82] : memref<360x128xf32, #tpu.memory_space<vmem>>, vector<1x64xf32>
    %211 = vector.broadcast %210 : vector<1x64xf32> to vector<16x64xf32>
    %212 = arith.addf %209, %211 : vector<16x64xf32>
    %cst_83 = arith.constant 0.000000e+00 : f32
    %213 = vector.broadcast %cst_83 : f32 to vector<16x64xf32>
    %214 = arith.maximumf %212, %213 : vector<16x64xf32>
    %c96_84 = arith.constant 96 : index
    %c0_85 = arith.constant 0 : index
    %215 = vector.load %arg4[%c96_84, %c0_85] : memref<360x128xf32, #tpu.memory_space<vmem>>, vector<64x32xf32>
    %cst_86 = arith.constant dense<0.000000e+00> : vector<16x32xf32>
    %216 = tpu.matmul %214, %215, %cst_86 {dimension_numbers = #tpu.dot_dimension_numbers<[1], [0], [0], [1], [0, 0, 1, 1], [], []>} : vector<16x64xf32>, vector<64x32xf32>, vector<16x32xf32> -> vector<16x32xf32>
    %217 = arith.addf %183, %216 : vector<16x32xf32>
    %c169 = arith.constant 169 : index
    %c0_87 = arith.constant 0 : index
    %218 = vector.load %arg4[%c169, %c0_87] : memref<360x128xf32, #tpu.memory_space<vmem>>, vector<1x32xf32>
    %219 = vector.broadcast %218 : vector<1x32xf32> to vector<16x32xf32>
    %220 = arith.addf %217, %219 : vector<16x32xf32>
    %c346 = arith.constant 346 : index
    %c0_88 = arith.constant 0 : index
    %221 = vector.load %arg4[%c346, %c0_88] : memref<360x128xf32, #tpu.memory_space<vmem>>, vector<1x32xf32>
    %c347 = arith.constant 347 : index
    %c0_89 = arith.constant 0 : index
    %222 = vector.load %arg4[%c347, %c0_89] : memref<360x128xf32, #tpu.memory_space<vmem>>, vector<1x32xf32>
    %cst_90 = arith.constant dense<0.000000e+00> : vector<16xf32>
    %223 = vector.multi_reduction <add>, %220, %cst_90 [1] : vector<16x32xf32> to vector<16xf32>
    %224 = vector.shape_cast %223 : vector<16xf32> to vector<16x1xf32>
    %cst_91 = arith.constant 3.200000e+01 : f32
    %225 = vector.broadcast %cst_91 : f32 to vector<16x1xf32>
    %226 = arith.divf %224, %225 : vector<16x1xf32>
    %227 = vector.broadcast %226 : vector<16x1xf32> to vector<16x32xf32>
    %228 = arith.subf %220, %227 : vector<16x32xf32>
    %229 = arith.mulf %228, %228 : vector<16x32xf32>
    %cst_92 = arith.constant dense<0.000000e+00> : vector<16xf32>
    %230 = vector.multi_reduction <add>, %229, %cst_92 [1] : vector<16x32xf32> to vector<16xf32>
    %231 = vector.shape_cast %230 : vector<16xf32> to vector<16x1xf32>
    %cst_93 = arith.constant 0.0322580636 : f32
    %232 = vector.broadcast %cst_93 : f32 to vector<16x1xf32>
    %233 = arith.mulf %231, %232 : vector<16x1xf32>
    %234 = math.sqrt %233 : vector<16x1xf32>
    %cst_94 = arith.constant 9.99999997E-7 : f32
    %235 = vector.broadcast %cst_94 : f32 to vector<16x1xf32>
    %236 = arith.addf %234, %235 : vector<16x1xf32>
    %cst_95 = arith.constant 1.000000e+00 : f32
    %237 = vector.broadcast %cst_95 : f32 to vector<16x1xf32>
    %238 = arith.divf %237, %236 : vector<16x1xf32>
    %239 = vector.broadcast %238 : vector<16x1xf32> to vector<16x32xf32>
    %240 = arith.mulf %228, %239 : vector<16x32xf32>
    %241 = vector.broadcast %221 : vector<1x32xf32> to vector<16x32xf32>
    %242 = arith.mulf %241, %240 : vector<16x32xf32>
    %243 = vector.broadcast %222 : vector<1x32xf32> to vector<16x32xf32>
    %244 = arith.addf %242, %243 : vector<16x32xf32>
    %c176 = arith.constant 176 : index
    %c0_96 = arith.constant 0 : index
    %245 = vector.load %arg4[%c176, %c0_96] : memref<360x128xf32, #tpu.memory_space<vmem>>, vector<32x32xf32>
    %cst_97 = arith.constant dense<0.000000e+00> : vector<16x32xf32>
    %246 = tpu.matmul %244, %245, %cst_97 {dimension_numbers = #tpu.dot_dimension_numbers<[1], [0], [0], [1], [0, 0, 1, 1], [], []>} : vector<16x32xf32>, vector<32x32xf32>, vector<16x32xf32> -> vector<16x32xf32>
    %c336 = arith.constant 336 : index
    %c0_98 = arith.constant 0 : index
    %247 = vector.load %arg4[%c336, %c0_98] : memref<360x128xf32, #tpu.memory_space<vmem>>, vector<1x32xf32>
    %248 = vector.broadcast %247 : vector<1x32xf32> to vector<16x32xf32>
    %249 = arith.addf %246, %248 : vector<16x32xf32>
    %c176_99 = arith.constant 176 : index
    %c32_100 = arith.constant 32 : index
    %250 = vector.load %arg4[%c176_99, %c32_100] : memref<360x128xf32, #tpu.memory_space<vmem>>, vector<32x32xf32>
    %cst_101 = arith.constant dense<0.000000e+00> : vector<16x32xf32>
    %251 = tpu.matmul %244, %250, %cst_101 {dimension_numbers = #tpu.dot_dimension_numbers<[1], [0], [0], [1], [0, 0, 1, 1], [], []>} : vector<16x32xf32>, vector<32x32xf32>, vector<16x32xf32> -> vector<16x32xf32>
    %c337 = arith.constant 337 : index
    %c0_102 = arith.constant 0 : index
    %252 = vector.load %arg4[%c337, %c0_102] : memref<360x128xf32, #tpu.memory_space<vmem>>, vector<1x32xf32>
    %253 = vector.broadcast %252 : vector<1x32xf32> to vector<16x32xf32>
    %254 = arith.addf %251, %253 : vector<16x32xf32>
    %c176_103 = arith.constant 176 : index
    %c64_104 = arith.constant 64 : index
    %255 = vector.load %arg4[%c176_103, %c64_104] : memref<360x128xf32, #tpu.memory_space<vmem>>, vector<32x32xf32>
    %cst_105 = arith.constant dense<0.000000e+00> : vector<16x32xf32>
    %256 = tpu.matmul %244, %255, %cst_105 {dimension_numbers = #tpu.dot_dimension_numbers<[1], [0], [0], [1], [0, 0, 1, 1], [], []>} : vector<16x32xf32>, vector<32x32xf32>, vector<16x32xf32> -> vector<16x32xf32>
    %c338 = arith.constant 338 : index
    %c0_106 = arith.constant 0 : index
    %257 = vector.load %arg4[%c338, %c0_106] : memref<360x128xf32, #tpu.memory_space<vmem>>, vector<1x32xf32>
    %258 = vector.broadcast %257 : vector<1x32xf32> to vector<16x32xf32>
    %259 = arith.addf %256, %258 : vector<16x32xf32>
    %c176_107 = arith.constant 176 : index
    %c96_108 = arith.constant 96 : index
    %260 = vector.load %arg4[%c176_107, %c96_108] : memref<360x128xf32, #tpu.memory_space<vmem>>, vector<32x32xf32>
    %c339 = arith.constant 339 : index
    %c0_109 = arith.constant 0 : index
    %261 = vector.load %arg4[%c339, %c0_109] : memref<360x128xf32, #tpu.memory_space<vmem>>, vector<1x32xf32>
    %262 = tpu.concatenate %254, %254, %254, %254 in 0 : vector<16x32xf32>, vector<16x32xf32>, vector<16x32xf32>, vector<16x32xf32> -> vector<64x32xf32>
    %263 = arith.mulf %262, %62 : vector<64x32xf32>
    %264 = tpu.concatenate %259, %259, %259, %259 in 0 : vector<16x32xf32>, vector<16x32xf32>, vector<16x32xf32>, vector<16x32xf32> -> vector<64x32xf32>
    %265 = arith.mulf %264, %62 : vector<64x32xf32>
    %cst_110 = arith.constant dense<0.000000e+00> : vector<16x64xf32>
    %266 = tpu.matmul %249, %263, %cst_110 {dimension_numbers = #tpu.dot_dimension_numbers<[1], [1], [0], [0], [0, 0, 1, 0], [], []>} : vector<16x32xf32>, vector<64x32xf32>, vector<16x64xf32> -> vector<16x64xf32>
    %267 = arith.addf %266, %2 : vector<16x64xf32>
    %cst_111 = arith.constant dense<0xFF800000> : vector<16xf32>
    %268 = vector.multi_reduction <maximumf>, %267, %cst_111 [1] : vector<16x64xf32> to vector<16xf32>
    %269 = vector.shape_cast %268 : vector<16xf32> to vector<16x1xf32>
    %270 = vector.broadcast %269 : vector<16x1xf32> to vector<16x64xf32>
    %271 = arith.subf %267, %270 : vector<16x64xf32>
    %272 = math.exp %271 : vector<16x64xf32>
    %cst_112 = arith.constant dense<0.000000e+00> : vector<16x64xf32>
    %273 = tpu.matmul %272, %65, %cst_112 {dimension_numbers = #tpu.dot_dimension_numbers<[1], [0], [0], [1], [0, 0, 1, 1], [], []>} : vector<16x64xf32>, vector<64x64xf32>, vector<16x64xf32> -> vector<16x64xf32>
    %274 = arith.divf %272, %273 : vector<16x64xf32>
    %cst_113 = arith.constant dense<0.000000e+00> : vector<16x32xf32>
    %275 = tpu.matmul %274, %265, %cst_113 {dimension_numbers = #tpu.dot_dimension_numbers<[1], [0], [0], [1], [0, 0, 1, 1], [], []>} : vector<16x64xf32>, vector<64x32xf32>, vector<16x32xf32> -> vector<16x32xf32>
    %cst_114 = arith.constant dense<0.000000e+00> : vector<16x32xf32>
    %276 = tpu.matmul %275, %260, %cst_114 {dimension_numbers = #tpu.dot_dimension_numbers<[1], [0], [0], [1], [0, 0, 1, 1], [], []>} : vector<16x32xf32>, vector<32x32xf32>, vector<16x32xf32> -> vector<16x32xf32>
    %277 = vector.broadcast %261 : vector<1x32xf32> to vector<16x32xf32>
    %278 = arith.addf %276, %277 : vector<16x32xf32>
    %279 = arith.addf %220, %278 : vector<16x32xf32>
    %c348 = arith.constant 348 : index
    %c0_115 = arith.constant 0 : index
    %280 = vector.load %arg4[%c348, %c0_115] : memref<360x128xf32, #tpu.memory_space<vmem>>, vector<1x32xf32>
    %c349 = arith.constant 349 : index
    %c0_116 = arith.constant 0 : index
    %281 = vector.load %arg4[%c349, %c0_116] : memref<360x128xf32, #tpu.memory_space<vmem>>, vector<1x32xf32>
    %cst_117 = arith.constant dense<0.000000e+00> : vector<16xf32>
    %282 = vector.multi_reduction <add>, %279, %cst_117 [1] : vector<16x32xf32> to vector<16xf32>
    %283 = vector.shape_cast %282 : vector<16xf32> to vector<16x1xf32>
    %cst_118 = arith.constant 3.200000e+01 : f32
    %284 = vector.broadcast %cst_118 : f32 to vector<16x1xf32>
    %285 = arith.divf %283, %284 : vector<16x1xf32>
    %286 = vector.broadcast %285 : vector<16x1xf32> to vector<16x32xf32>
    %287 = arith.subf %279, %286 : vector<16x32xf32>
    %288 = arith.mulf %287, %287 : vector<16x32xf32>
    %cst_119 = arith.constant dense<0.000000e+00> : vector<16xf32>
    %289 = vector.multi_reduction <add>, %288, %cst_119 [1] : vector<16x32xf32> to vector<16xf32>
    %290 = vector.shape_cast %289 : vector<16xf32> to vector<16x1xf32>
    %cst_120 = arith.constant 0.0322580636 : f32
    %291 = vector.broadcast %cst_120 : f32 to vector<16x1xf32>
    %292 = arith.mulf %290, %291 : vector<16x1xf32>
    %293 = math.sqrt %292 : vector<16x1xf32>
    %cst_121 = arith.constant 9.99999997E-7 : f32
    %294 = vector.broadcast %cst_121 : f32 to vector<16x1xf32>
    %295 = arith.addf %293, %294 : vector<16x1xf32>
    %cst_122 = arith.constant 1.000000e+00 : f32
    %296 = vector.broadcast %cst_122 : f32 to vector<16x1xf32>
    %297 = arith.divf %296, %295 : vector<16x1xf32>
    %298 = vector.broadcast %297 : vector<16x1xf32> to vector<16x32xf32>
    %299 = arith.mulf %287, %298 : vector<16x32xf32>
    %300 = vector.broadcast %280 : vector<1x32xf32> to vector<16x32xf32>
    %301 = arith.mulf %300, %299 : vector<16x32xf32>
    %302 = vector.broadcast %281 : vector<1x32xf32> to vector<16x32xf32>
    %303 = arith.addf %301, %302 : vector<16x32xf32>
    %c208 = arith.constant 208 : index
    %c0_123 = arith.constant 0 : index
    %304 = vector.load %arg4[%c208, %c0_123] : memref<360x128xf32, #tpu.memory_space<vmem>>, vector<32x32xf32>
    %cst_124 = arith.constant dense<0.000000e+00> : vector<16x32xf32>
    %305 = tpu.matmul %303, %304, %cst_124 {dimension_numbers = #tpu.dot_dimension_numbers<[1], [0], [0], [1], [0, 0, 1, 1], [], []>} : vector<16x32xf32>, vector<32x32xf32>, vector<16x32xf32> -> vector<16x32xf32>
    %c340 = arith.constant 340 : index
    %c0_125 = arith.constant 0 : index
    %306 = vector.load %arg4[%c340, %c0_125] : memref<360x128xf32, #tpu.memory_space<vmem>>, vector<1x32xf32>
    %307 = vector.broadcast %306 : vector<1x32xf32> to vector<16x32xf32>
    %308 = arith.addf %305, %307 : vector<16x32xf32>
    %c208_126 = arith.constant 208 : index
    %c32_127 = arith.constant 32 : index
    %309 = vector.load %arg4[%c208_126, %c32_127] : memref<360x128xf32, #tpu.memory_space<vmem>>, vector<32x32xf32>
    %cst_128 = arith.constant dense<0.000000e+00> : vector<16x32xf32>
    %310 = tpu.matmul %1, %309, %cst_128 {dimension_numbers = #tpu.dot_dimension_numbers<[1], [0], [0], [1], [0, 0, 1, 1], [], []>} : vector<16x32xf32>, vector<32x32xf32>, vector<16x32xf32> -> vector<16x32xf32>
    %c341 = arith.constant 341 : index
    %c0_129 = arith.constant 0 : index
    %311 = vector.load %arg4[%c341, %c0_129] : memref<360x128xf32, #tpu.memory_space<vmem>>, vector<1x32xf32>
    %312 = vector.broadcast %311 : vector<1x32xf32> to vector<16x32xf32>
    %313 = arith.addf %310, %312 : vector<16x32xf32>
    %c208_130 = arith.constant 208 : index
    %c64_131 = arith.constant 64 : index
    %314 = vector.load %arg4[%c208_130, %c64_131] : memref<360x128xf32, #tpu.memory_space<vmem>>, vector<32x32xf32>
    %cst_132 = arith.constant dense<0.000000e+00> : vector<16x32xf32>
    %315 = tpu.matmul %1, %314, %cst_132 {dimension_numbers = #tpu.dot_dimension_numbers<[1], [0], [0], [1], [0, 0, 1, 1], [], []>} : vector<16x32xf32>, vector<32x32xf32>, vector<16x32xf32> -> vector<16x32xf32>
    %c342 = arith.constant 342 : index
    %c0_133 = arith.constant 0 : index
    %316 = vector.load %arg4[%c342, %c0_133] : memref<360x128xf32, #tpu.memory_space<vmem>>, vector<1x32xf32>
    %317 = vector.broadcast %316 : vector<1x32xf32> to vector<16x32xf32>
    %318 = arith.addf %315, %317 : vector<16x32xf32>
    %c208_134 = arith.constant 208 : index
    %c96_135 = arith.constant 96 : index
    %319 = vector.load %arg4[%c208_134, %c96_135] : memref<360x128xf32, #tpu.memory_space<vmem>>, vector<32x32xf32>
    %c343 = arith.constant 343 : index
    %c0_136 = arith.constant 0 : index
    %320 = vector.load %arg4[%c343, %c0_136] : memref<360x128xf32, #tpu.memory_space<vmem>>, vector<1x32xf32>
    %321 = tpu.concatenate %313, %313, %313, %313 in 0 : vector<16x32xf32>, vector<16x32xf32>, vector<16x32xf32>, vector<16x32xf32> -> vector<64x32xf32>
    %322 = arith.mulf %321, %62 : vector<64x32xf32>
    %323 = tpu.concatenate %318, %318, %318, %318 in 0 : vector<16x32xf32>, vector<16x32xf32>, vector<16x32xf32>, vector<16x32xf32> -> vector<64x32xf32>
    %324 = arith.mulf %323, %62 : vector<64x32xf32>
    %cst_137 = arith.constant dense<0.000000e+00> : vector<16x64xf32>
    %325 = tpu.matmul %308, %322, %cst_137 {dimension_numbers = #tpu.dot_dimension_numbers<[1], [1], [0], [0], [0, 0, 1, 0], [], []>} : vector<16x32xf32>, vector<64x32xf32>, vector<16x64xf32> -> vector<16x64xf32>
    %326 = arith.addf %325, %3 : vector<16x64xf32>
    %cst_138 = arith.constant dense<0xFF800000> : vector<16xf32>
    %327 = vector.multi_reduction <maximumf>, %326, %cst_138 [1] : vector<16x64xf32> to vector<16xf32>
    %328 = vector.shape_cast %327 : vector<16xf32> to vector<16x1xf32>
    %329 = vector.broadcast %328 : vector<16x1xf32> to vector<16x64xf32>
    %330 = arith.subf %326, %329 : vector<16x64xf32>
    %331 = math.exp %330 : vector<16x64xf32>
    %cst_139 = arith.constant dense<0.000000e+00> : vector<16x64xf32>
    %332 = tpu.matmul %331, %65, %cst_139 {dimension_numbers = #tpu.dot_dimension_numbers<[1], [0], [0], [1], [0, 0, 1, 1], [], []>} : vector<16x64xf32>, vector<64x64xf32>, vector<16x64xf32> -> vector<16x64xf32>
    %333 = arith.divf %331, %332 : vector<16x64xf32>
    %cst_140 = arith.constant dense<0.000000e+00> : vector<16x32xf32>
    %334 = tpu.matmul %333, %324, %cst_140 {dimension_numbers = #tpu.dot_dimension_numbers<[1], [0], [0], [1], [0, 0, 1, 1], [], []>} : vector<16x64xf32>, vector<64x32xf32>, vector<16x32xf32> -> vector<16x32xf32>
    %cst_141 = arith.constant dense<0.000000e+00> : vector<16x32xf32>
    %335 = tpu.matmul %334, %319, %cst_141 {dimension_numbers = #tpu.dot_dimension_numbers<[1], [0], [0], [1], [0, 0, 1, 1], [], []>} : vector<16x32xf32>, vector<32x32xf32>, vector<16x32xf32> -> vector<16x32xf32>
    %336 = vector.broadcast %320 : vector<1x32xf32> to vector<16x32xf32>
    %337 = arith.addf %335, %336 : vector<16x32xf32>
    %338 = arith.addf %279, %337 : vector<16x32xf32>
    %c350 = arith.constant 350 : index
    %c0_142 = arith.constant 0 : index
    %339 = vector.load %arg4[%c350, %c0_142] : memref<360x128xf32, #tpu.memory_space<vmem>>, vector<1x32xf32>
    %c351 = arith.constant 351 : index
    %c0_143 = arith.constant 0 : index
    %340 = vector.load %arg4[%c351, %c0_143] : memref<360x128xf32, #tpu.memory_space<vmem>>, vector<1x32xf32>
    %cst_144 = arith.constant dense<0.000000e+00> : vector<16xf32>
    %341 = vector.multi_reduction <add>, %338, %cst_144 [1] : vector<16x32xf32> to vector<16xf32>
    %342 = vector.shape_cast %341 : vector<16xf32> to vector<16x1xf32>
    %cst_145 = arith.constant 3.200000e+01 : f32
    %343 = vector.broadcast %cst_145 : f32 to vector<16x1xf32>
    %344 = arith.divf %342, %343 : vector<16x1xf32>
    %345 = vector.broadcast %344 : vector<16x1xf32> to vector<16x32xf32>
    %346 = arith.subf %338, %345 : vector<16x32xf32>
    %347 = arith.mulf %346, %346 : vector<16x32xf32>
    %cst_146 = arith.constant dense<0.000000e+00> : vector<16xf32>
    %348 = vector.multi_reduction <add>, %347, %cst_146 [1] : vector<16x32xf32> to vector<16xf32>
    %349 = vector.shape_cast %348 : vector<16xf32> to vector<16x1xf32>
    %cst_147 = arith.constant 0.0322580636 : f32
    %350 = vector.broadcast %cst_147 : f32 to vector<16x1xf32>
    %351 = arith.mulf %349, %350 : vector<16x1xf32>
    %352 = math.sqrt %351 : vector<16x1xf32>
    %cst_148 = arith.constant 9.99999997E-7 : f32
    %353 = vector.broadcast %cst_148 : f32 to vector<16x1xf32>
    %354 = arith.addf %352, %353 : vector<16x1xf32>
    %cst_149 = arith.constant 1.000000e+00 : f32
    %355 = vector.broadcast %cst_149 : f32 to vector<16x1xf32>
    %356 = arith.divf %355, %354 : vector<16x1xf32>
    %357 = vector.broadcast %356 : vector<16x1xf32> to vector<16x32xf32>
    %358 = arith.mulf %346, %357 : vector<16x32xf32>
    %359 = vector.broadcast %339 : vector<1x32xf32> to vector<16x32xf32>
    %360 = arith.mulf %359, %358 : vector<16x32xf32>
    %361 = vector.broadcast %340 : vector<1x32xf32> to vector<16x32xf32>
    %362 = arith.addf %360, %361 : vector<16x32xf32>
    %c240 = arith.constant 240 : index
    %c0_150 = arith.constant 0 : index
    %363 = vector.load %arg4[%c240, %c0_150] : memref<360x128xf32, #tpu.memory_space<vmem>>, vector<32x64xf32>
    %cst_151 = arith.constant dense<0.000000e+00> : vector<16x64xf32>
    %364 = tpu.matmul %362, %363, %cst_151 {dimension_numbers = #tpu.dot_dimension_numbers<[1], [0], [0], [1], [0, 0, 1, 1], [], []>} : vector<16x32xf32>, vector<32x64xf32>, vector<16x64xf32> -> vector<16x64xf32>
    %c344 = arith.constant 344 : index
    %c0_152 = arith.constant 0 : index
    %365 = vector.load %arg4[%c344, %c0_152] : memref<360x128xf32, #tpu.memory_space<vmem>>, vector<1x64xf32>
    %366 = vector.broadcast %365 : vector<1x64xf32> to vector<16x64xf32>
    %367 = arith.addf %364, %366 : vector<16x64xf32>
    %cst_153 = arith.constant 0.000000e+00 : f32
    %368 = vector.broadcast %cst_153 : f32 to vector<16x64xf32>
    %369 = arith.maximumf %367, %368 : vector<16x64xf32>
    %c272 = arith.constant 272 : index
    %c0_154 = arith.constant 0 : index
    %370 = vector.load %arg4[%c272, %c0_154] : memref<360x128xf32, #tpu.memory_space<vmem>>, vector<64x32xf32>
    %cst_155 = arith.constant dense<0.000000e+00> : vector<16x32xf32>
    %371 = tpu.matmul %369, %370, %cst_155 {dimension_numbers = #tpu.dot_dimension_numbers<[1], [0], [0], [1], [0, 0, 1, 1], [], []>} : vector<16x64xf32>, vector<64x32xf32>, vector<16x32xf32> -> vector<16x32xf32>
    %372 = arith.addf %338, %371 : vector<16x32xf32>
    %c345 = arith.constant 345 : index
    %c0_156 = arith.constant 0 : index
    %373 = vector.load %arg4[%c345, %c0_156] : memref<360x128xf32, #tpu.memory_space<vmem>>, vector<1x32xf32>
    %374 = vector.broadcast %373 : vector<1x32xf32> to vector<16x32xf32>
    %375 = arith.addf %372, %374 : vector<16x32xf32>
    %c352 = arith.constant 352 : index
    %c0_157 = arith.constant 0 : index
    %376 = vector.load %arg4[%c352, %c0_157] : memref<360x128xf32, #tpu.memory_space<vmem>>, vector<1x32xf32>
    %c353 = arith.constant 353 : index
    %c0_158 = arith.constant 0 : index
    %377 = vector.load %arg4[%c353, %c0_158] : memref<360x128xf32, #tpu.memory_space<vmem>>, vector<1x32xf32>
    %cst_159 = arith.constant dense<0.000000e+00> : vector<16xf32>
    %378 = vector.multi_reduction <add>, %375, %cst_159 [1] : vector<16x32xf32> to vector<16xf32>
    %379 = vector.shape_cast %378 : vector<16xf32> to vector<16x1xf32>
    %cst_160 = arith.constant 3.200000e+01 : f32
    %380 = vector.broadcast %cst_160 : f32 to vector<16x1xf32>
    %381 = arith.divf %379, %380 : vector<16x1xf32>
    %382 = vector.broadcast %381 : vector<16x1xf32> to vector<16x32xf32>
    %383 = arith.subf %375, %382 : vector<16x32xf32>
    %384 = arith.mulf %383, %383 : vector<16x32xf32>
    %cst_161 = arith.constant dense<0.000000e+00> : vector<16xf32>
    %385 = vector.multi_reduction <add>, %384, %cst_161 [1] : vector<16x32xf32> to vector<16xf32>
    %386 = vector.shape_cast %385 : vector<16xf32> to vector<16x1xf32>
    %cst_162 = arith.constant 0.0322580636 : f32
    %387 = vector.broadcast %cst_162 : f32 to vector<16x1xf32>
    %388 = arith.mulf %386, %387 : vector<16x1xf32>
    %389 = math.sqrt %388 : vector<16x1xf32>
    %cst_163 = arith.constant 9.99999997E-7 : f32
    %390 = vector.broadcast %cst_163 : f32 to vector<16x1xf32>
    %391 = arith.addf %389, %390 : vector<16x1xf32>
    %cst_164 = arith.constant 1.000000e+00 : f32
    %392 = vector.broadcast %cst_164 : f32 to vector<16x1xf32>
    %393 = arith.divf %392, %391 : vector<16x1xf32>
    %394 = vector.broadcast %393 : vector<16x1xf32> to vector<16x32xf32>
    %395 = arith.mulf %383, %394 : vector<16x32xf32>
    %396 = vector.broadcast %376 : vector<1x32xf32> to vector<16x32xf32>
    %397 = arith.mulf %396, %395 : vector<16x32xf32>
    %398 = vector.broadcast %377 : vector<1x32xf32> to vector<16x32xf32>
    %399 = arith.addf %397, %398 : vector<16x32xf32>
    %c0_165 = arith.constant 0 : index
    %c0_166 = arith.constant 0 : index
    %400 = vector.load %arg5[%c0_165, %c0_166] : memref<16x32xf32, #tpu.memory_space<vmem>>, vector<16x32xf32>
    tpu.vector_store %arg5[%c0_165, %c0_166], %399 {strides = array<i32>} : memref<16x32xf32, #tpu.memory_space<vmem>>, vector<16x32xf32>,
    return
  }
}

</mosaic_0001>

<llo_original>
// kernel: tile.14
$region0: #{tile.14}
  %s0 = inlined_call_operand.vmem [shape: f32[16,4,16], index: 0, kind: input, shape index: {}]
  %s1 = inlined_call_operand.vmem [shape: f32[16,64], index: 1, kind: output, shape index: {}]
  $region1: #{tile.14} parent=0
    #allocation0 [shape = 'u8[65536]{0}', space=vmem, size = 0x10000, scoped, tag = 'scoped mem for input reshape']
    %s3 = ssub.s32 16, 1
    %s4 = scalar_lea.vmem %s0, 60
    %v5 = vld [vmem:[%s4] sm:%s3]
    %s6 = scalar_lea.vmem [#allocation0], 120
    %7 = vst [vmem:[%s6] sm:%s3] %v5
    %s8 = scalar_lea.vmem %s0, 56
    %v9 = vld [vmem:[%s8] sm:%s3]
    %s10 = scalar_lea.vmem [#allocation0], 112
    %11 = vst [vmem:[%s10] sm:%s3] %v9
    %s12 = scalar_lea.vmem %s0, 52
    %v13 = vld [vmem:[%s12] sm:%s3]
    %s14 = scalar_lea.vmem [#allocation0], 104
    %15 = vst [vmem:[%s14] sm:%s3] %v13
    %s16 = scalar_lea.vmem %s0, 48
    %v17 = vld [vmem:[%s16] sm:%s3]
    %s18 = scalar_lea.vmem [#allocation0], 96
    %19 = vst [vmem:[%s18] sm:%s3] %v17
    %s20 = scalar_lea.vmem %s0, 44
    %v21 = vld [vmem:[%s20] sm:%s3]
    %s22 = scalar_lea.vmem [#allocation0], 88
    %23 = vst [vmem:[%s22] sm:%s3] %v21
    %s24 = scalar_lea.vmem %s0, 40
    %v25 = vld [vmem:[%s24] sm:%s3]
    %s26 = scalar_lea.vmem [#allocation0], 80
    %27 = vst [vmem:[%s26] sm:%s3] %v25
    %s28 = scalar_lea.vmem %s0, 36
    %v29 = vld [vmem:[%s28] sm:%s3]
    %s30 = scalar_lea.vmem [#allocation0], 72
    %31 = vst [vmem:[%s30] sm:%s3] %v29
    %s32 = scalar_lea.vmem %s0, 32
    %v33 = vld [vmem:[%s32] sm:%s3]
    %s34 = scalar_lea.vmem [#allocation0], 64
    %35 = vst [vmem:[%s34] sm:%s3] %v33
    %s36 = scalar_lea.vmem %s0, 28
    %v37 = vld [vmem:[%s36] sm:%s3]
    %s38 = scalar_lea.vmem [#allocation0], 56
    %39 = vst [vmem:[%s38] sm:%s3] %v37
    %s40 = scalar_lea.vmem %s0, 24
    %v41 = vld [vmem:[%s40] sm:%s3]
    %s42 = scalar_lea.vmem [#allocation0], 48
    %43 = vst [vmem:[%s42] sm:%s3] %v41
    %s44 = scalar_lea.vmem %s0, 20
    %v45 = vld [vmem:[%s44] sm:%s3]
    %s46 = scalar_lea.vmem [#allocation0], 40
    %47 = vst [vmem:[%s46] sm:%s3] %v45
    %s48 = scalar_lea.vmem %s0, 16
    %v49 = vld [vmem:[%s48] sm:%s3]
    %s50 = scalar_lea.vmem [#allocation0], 32
    %51 = vst [vmem:[%s50] sm:%s3] %v49
    %s52 = scalar_lea.vmem %s0, 12
    %v53 = vld [vmem:[%s52] sm:%s3]
    %s54 = scalar_lea.vmem [#allocation0], 24
    %55 = vst [vmem:[%s54] sm:%s3] %v53
    %s56 = scalar_lea.vmem %s0, 8
    %v57 = vld [vmem:[%s56] sm:%s3]
    %s58 = scalar_lea.vmem [#allocation0], 16
    %59 = vst [vmem:[%s58] sm:%s3] %v57
    %s60 = scalar_lea.vmem %s0, 4
    %v61 = vld [vmem:[%s60] sm:%s3]
    %s62 = scalar_lea.vmem [#allocation0], 8
    %63 = vst [vmem:[%s62] sm:%s3] %v61
    %v64 = vld [vmem:[%s0] sm:%s3]
    %65 = vst [vmem:[#allocation0] sm:%s3] %v64
    %v66 = vld [vmem:[#allocation0] ss:$8 sm:$0xf]
    %v67 = vld [vmem:[#allocation0] ss:$8 sm:$0xf0]
    %vm68 = vcmask 1047556
    %v69 = vsel %vm68, %v67, %v66
    %vm70 = vcmask 130048
    %71 = vst.msk [vmem:[%s1] sm:$0xff] %vm70, %v69
    %s72 = scalar_lea.vmem [#allocation0], 64
    %v73 = vld [vmem:[%s72] ss:$8 sm:$0xf]
    %s74 = scalar_lea.vmem [#allocation0], 64
    %v75 = vld [vmem:[%s74] ss:$8 sm:$0xf0]
    %vm76 = vcmask 1047556
    %v77 = vsel %vm76, %v75, %v73
    %vm78 = vcmask 130048
    %s79 = scalar_lea.vmem %s1, 8
    %80 = vst.msk [vmem:[%s79] sm:$0xff] %vm78, %v77
    %s81 = scalar_lea.vmem [#allocation0], 3
    %v82 = vld [vmem:[%s81] ss:$8 sm:$0xf]
    %s83 = scalar_lea.vmem [#allocation0], 3
    %v84 = vld [vmem:[%s83] ss:$8 sm:$0xf0]
    %vm85 = vcmask 1047556
    %v86 = vsel %vm85, %v84, %v82
    %87 = vrot.lane.b32.xlu0 %v86, 48
    %v88 = vpop.permute.xlu0 %87
    %vm89 = vcmask 523648
    %90 = vst.msk [vmem:[%s1] sm:$0xff] %vm89, %v88
    %s91 = scalar_lea.vmem [#allocation0], 67
    %v92 = vld [vmem:[%s91] ss:$8 sm:$0xf]
    %s93 = scalar_lea.vmem [#allocation0], 67
    %v94 = vld [vmem:[%s93] ss:$8 sm:$0xf0]
    %vm95 = vcmask 1047556
    %v96 = vsel %vm95, %v94, %v92
    %97 = vrot.lane.b32.xlu0 %v96, 48
    %v98 = vpop.permute.xlu0 %97
    %vm99 = vcmask 523648
    %s100 = scalar_lea.vmem %s1, 8
    %101 = vst.msk [vmem:[%s100] sm:$0xff] %vm99, %v98
    %s102 = scalar_lea.vmem [#allocation0], 2
    %v103 = vld [vmem:[%s102] ss:$8 sm:$0xf]
    %s104 = scalar_lea.vmem [#allocation0], 2
    %v105 = vld [vmem:[%s104] ss:$8 sm:$0xf0]
    %vm106 = vcmask 1047556
    %v107 = vsel %vm106, %v105, %v103
    %108 = vrot.lane.b32.xlu0 %v107, 32
    %v109 = vpop.permute.xlu0 %108
    %vm110 = vcmask 392448
    %111 = vst.msk [vmem:[%s1] sm:$0xff] %vm110, %v109
    %s112 = scalar_lea.vmem [#allocation0], 66
    %v113 = vld [vmem:[%s112] ss:$8 sm:$0xf]
    %s114 = scalar_lea.vmem [#allocation0], 66
    %v115 = vld [vmem:[%s114] ss:$8 sm:$0xf0]
    %vm116 = vcmask 1047556
    %v117 = vsel %vm116, %v115, %v113
    %118 = vrot.lane.b32.xlu0 %v117, 32
    %v119 = vpop.permute.xlu0 %118
    %vm120 = vcmask 392448
    %s121 = scalar_lea.vmem %s1, 8
    %122 = vst.msk [vmem:[%s121] sm:$0xff] %vm120, %v119
    %s123 = scalar_lea.vmem [#allocation0], 1
    %v124 = vld [vmem:[%s123] ss:$8 sm:$0xf]
    %s125 = scalar_lea.vmem [#allocation0], 1
    %v126 = vld [vmem:[%s125] ss:$8 sm:$0xf0]
    %vm127 = vcmask 1047556
    %v128 = vsel %vm127, %v126, %v124
    %129 = vrot.lane.b32.xlu0 %v128, 16
    %v130 = vpop.permute.xlu0 %129
    %vm131 = vcmask 261248
    %132 = vst.msk [vmem:[%s1] sm:$0xff] %vm131, %v130
    %s133 = scalar_lea.vmem [#allocation0], 65
    %v134 = vld [vmem:[%s133] ss:$8 sm:$0xf]
    %s135 = scalar_lea.vmem [#allocation0], 65
    %v136 = vld [vmem:[%s135] ss:$8 sm:$0xf0]
    %vm137 = vcmask 1047556
    %v138 = vsel %vm137, %v136, %v134
    %139 = vrot.lane.b32.xlu0 %v138, 16
    %v140 = vpop.permute.xlu0 %139
    %vm141 = vcmask 261248
    %s142 = scalar_lea.vmem %s1, 8
    %143 = vst.msk [vmem:[%s142] sm:$0xff] %vm141, %v140

// kernel: decoder_forward.1
$region0: #{decoder_forward.1}
  #allocation0 [shape = 'u32[]', space=smem, size = 0x4, offset = 0x4, fixed_abs, tag = 'smem constant byte address 0x4 - core index']
  #allocation1 [shape = 'u32[72,128]{1,0:T(1,128)}', space=vmem, size = 0x9000, scoped, tag = 'internal scratch']
  %s0 = inlined_call_operand.vmem [shape: f32[16,32], index: 0, kind: input, shape index: {}]
  %s1 = inlined_call_operand.vmem [shape: f32[16,32], index: 1, kind: input, shape index: {}]
  %s2 = inlined_call_operand.vmem [shape: f32[16,64], index: 2, kind: input, shape index: {}]
  %s3 = inlined_call_operand.vmem [shape: f32[16,64], index: 3, kind: input, shape index: {}]
  %s4 = inlined_call_operand.vmem [shape: f32[360,128], index: 4, kind: input, shape index: {}]
  %s5 = inlined_call_operand.hbm [shape: f32[16,32], index: 5, kind: output, shape index: {}]
  %s6 = sld [smem:[#allocation0]]
  $region30: #{decoder_forward.1} parent=0
    _
  %s8 = ssub.s32 1, %s6
  %s9 = scalar_select 0, %s8, %s6
  $region1: #{decoder_forward.1} parent=0
    #allocation2 [shape = 'u8[8192]{0}', space=vmem, size = 0x2000, scoped, tag = 'output window, operand 0, single buffered']
    #allocation3 [shape = 's32[1]{0}', space=sflag, size = 0x4, scoped, tag = 'scoped memory for decoder_forward.1']
    %10 = vsyncpa [#allocation3], 0
    // Predicated region
    $region2: #{decoder_forward.1} parent=1 // pred_check
      _
    $region3: #{decoder_forward.1} parent=1 // pred_check_branch
      %12 = sbr.rel (0) target = $region5
    $region4: #{decoder_forward.1} parent=1 // pred_region
      _
    $region5: #{decoder_forward.1} parent=1 // pred_fallthru
      _
    // Predicated region
    $region6: #{decoder_forward.1} parent=1 // pred_check
      _
    $region7: #{decoder_forward.1} parent=1 // pred_check_branch
      %14 = sbr.rel (0) target = $region9
    $region8: #{decoder_forward.1} parent=1 // pred_region
      _
    $region9: #{decoder_forward.1} parent=1 // pred_fallthru
      _
    // Predicated region
    $region10: #{decoder_forward.1} parent=1 // pred_check
      _
    $region11: #{decoder_forward.1} parent=1 // pred_check_branch
      %16 = sbr.rel (0) target = $region13
    $region12: #{decoder_forward.1} parent=1 // pred_region
      _
    $region13: #{decoder_forward.1} parent=1 // pred_fallthru
      _
    // Predicated region
    $region14: #{decoder_forward.1} parent=1 // pred_check
      _
    $region15: #{decoder_forward.1} parent=1 // pred_check_branch
      %18 = sbr.rel (0) target = $region17
    $region16: #{decoder_forward.1} parent=1 // pred_region
      _
    $region17: #{decoder_forward.1} parent=1 // pred_fallthru
      _
    // Predicated region
    $region18: #{decoder_forward.1} parent=1 // pred_check
      _
    $region19: #{decoder_forward.1} parent=1 // pred_check_branch
      %20 = sbr.rel (0) target = $region21
    $region20: #{decoder_forward.1} parent=1 // pred_region
      _
    $region21: #{decoder_forward.1} parent=1 // pred_fallthru
      _
    %v21 = vld [vmem:[%s0] sm:$0xff]
    %v22 = vld [vmem:[%s0 + $0x8] sm:$0xff]
    %v23 = vld [vmem:[%s1] sm:$0xff]
    %v24 = vld [vmem:[%s1 + $0x8] sm:$0xff]
    %v25 = vld [vmem:[%s2] sm:$0xff]
    %v26 = vld [vmem:[%s2 + $0x8] sm:$0xff]
    %v27 = vld [vmem:[%s3] sm:$0xff]
    %v28 = vld [vmem:[%s3 + $0x8] sm:$0xff]
    %v29 = vlaneseq
    %v30 = vshrl.u32 %v29, 7
    %v31 = vadd.s32 %v30, 8
    %v32 = vadd.s32 %v30, 16
    %v33 = vadd.s32 %v30, 24
    %v34 = vadd.s32 %v30, 32
    %v35 = vadd.s32 %v30, 40
    %v36 = vadd.s32 %v30, 48
    %v37 = vadd.s32 %v30, 56
    %v38 = vlaneseq
    %v39 = vand.u32 %v38, 127
    %vm40 = vcmp.ge.s32.totalorder %v30, 0
    %vm41 = vcmp.ge.s32.totalorder %v31, 0
    %vm42 = vcmp.ge.s32.totalorder %v32, 0
    %vm43 = vcmp.ge.s32.totalorder %v33, 0
    %vm44 = vcmp.ge.s32.totalorder %v34, 0
    %vm45 = vcmp.ge.s32.totalorder %v35, 0
    %vm46 = vcmp.ge.s32.totalorder %v36, 0
    %vm47 = vcmp.ge.s32.totalorder %v37, 0
    %vm48 = vcmp.lt.s32.totalorder %v30, 16
    %vm49 = vcmp.lt.s32.totalorder %v31, 16
    %vm50 = vcmp.lt.s32.totalorder %v32, 16
    %vm51 = vcmp.lt.s32.totalorder %v33, 16
    %vm52 = vcmp.lt.s32.totalorder %v34, 16
    %vm53 = vcmp.lt.s32.totalorder %v35, 16
    %vm54 = vcmp.lt.s32.totalorder %v36, 16
    %vm55 = vcmp.lt.s32.totalorder %v37, 16
    %vm56 = vmand %vm40, %vm48
    %vm57 = vmand %vm41, %vm49
    %vm58 = vmand %vm42, %vm50
    %vm59 = vmand %vm43, %vm51
    %vm60 = vmand %vm44, %vm52
    %vm61 = vmand %vm45, %vm53
    %vm62 = vmand %vm46, %vm54
    %vm63 = vmand %vm47, %vm55
    %vm64 = vcmp.ge.s32.totalorder %v39, 0
    %vm65 = vmand %vm56, %vm64
    %vm66 = vmand %vm57, %vm64
    %vm67 = vmand %vm58, %vm64
    %vm68 = vmand %vm59, %vm64
    %vm69 = vmand %vm60, %vm64
    %vm70 = vmand %vm61, %vm64
    %vm71 = vmand %vm62, %vm64
    %vm72 = vmand %vm63, %vm64
    %vm73 = vcmp.lt.s32.totalorder %v39, 8
    %vm74 = vmand %vm65, %vm73
    %vm75 = vmand %vm66, %vm73
    %vm76 = vmand %vm67, %vm73
    %vm77 = vmand %vm68, %vm73
    %vm78 = vmand %vm69, %vm73
    %vm79 = vmand %vm70, %vm73
    %vm80 = vmand %vm71, %vm73
    %vm81 = vmand %vm72, %vm73
    %v82 = vsel %vm74, 1, 0
    %v83 = vsel %vm75, 1, 0
    %v84 = vsel %vm76, 1, 0
    %v85 = vsel %vm77, 1, 0
    %v86 = vsel %vm78, 1, 0
    %v87 = vsel %vm79, 1, 0
    %v88 = vsel %vm80, 1, 0
    %v89 = vsel %vm81, 1, 0
    %v90 = vcvt.s32.f32 %v82
    %v91 = vcvt.s32.f32 %v83
    %v92 = vcvt.s32.f32 %v84
    %v93 = vcvt.s32.f32 %v85
    %v94 = vcvt.s32.f32 %v86
    %v95 = vcvt.s32.f32 %v87
    %v96 = vcvt.s32.f32 %v88
    %v97 = vcvt.s32.f32 %v89
    %v98 = vadd.f32 %v90, 0.0
    %v99 = vadd.f32 %v91, 0.0
    %v100 = vadd.f32 %v92, 0.0
    %v101 = vadd.f32 %v93, 0.0
    %v102 = vadd.f32 %v94, 0.0
    %v103 = vadd.f32 %v95, 0.0
    %v104 = vadd.f32 %v96, 0.0
    %v105 = vadd.f32 %v97, 0.0
    %vm106 = vcmp.ge.s32.totalorder %v30, 16
    %vm107 = vcmp.ge.s32.totalorder %v31, 16
    %vm108 = vcmp.ge.s32.totalorder %v32, 16
    %vm109 = vcmp.ge.s32.totalorder %v33, 16
    %vm110 = vcmp.ge.s32.totalorder %v34, 16
    %vm111 = vcmp.ge.s32.totalorder %v35, 16
    %vm112 = vcmp.ge.s32.totalorder %v36, 16
    %vm113 = vcmp.ge.s32.totalorder %v37, 16
    %vm114 = vcmp.lt.s32.totalorder %v30, 32
    %vm115 = vcmp.lt.s32.totalorder %v31, 32
    %vm116 = vcmp.lt.s32.totalorder %v32, 32
    %vm117 = vcmp.lt.s32.totalorder %v33, 32
    %vm118 = vcmp.lt.s32.totalorder %v34, 32
    %vm119 = vcmp.lt.s32.totalorder %v35, 32
    %vm120 = vcmp.lt.s32.totalorder %v36, 32
    %vm121 = vcmp.lt.s32.totalorder %v37, 32
    %vm122 = vmand %vm106, %vm114
    %vm123 = vmand %vm107, %vm115
    %vm124 = vmand %vm108, %vm116
    %vm125 = vmand %vm109, %vm117
    %vm126 = vmand %vm110, %vm118
    %vm127 = vmand %vm111, %vm119
    %vm128 = vmand %vm112, %vm120
    %vm129 = vmand %vm113, %vm121
    %vm130 = vcmp.ge.s32.totalorder %v39, 8
    %vm131 = vmand %vm122, %vm130
    %vm132 = vmand %vm123, %vm130
    %vm133 = vmand %vm124, %vm130
    %vm134 = vmand %vm125, %vm130
    %vm135 = vmand %vm126, %vm130
    %vm136 = vmand %vm127, %vm130
    %vm137 = vmand %vm128, %vm130
    %vm138 = vmand %vm129, %vm130
    %vm139 = vcmp.lt.s32.totalorder %v39, 16
    %vm140 = vmand %vm131, %vm139
    %vm141 = vmand %vm132, %vm139
    %vm142 = vmand %vm133, %vm139
    %vm143 = vmand %vm134, %vm139
    %vm144 = vmand %vm135, %vm139
    %vm145 = vmand %vm136, %vm139
    %vm146 = vmand %vm137, %vm139
    %vm147 = vmand %vm138, %vm139
    %v148 = vsel %vm140, 1, 0
    %v149 = vsel %vm141, 1, 0
    %v150 = vsel %vm142, 1, 0
    %v151 = vsel %vm143, 1, 0
    %v152 = vsel %vm144, 1, 0
    %v153 = vsel %vm145, 1, 0
    %v154 = vsel %vm146, 1, 0
    %v155 = vsel %vm147, 1, 0
    %v156 = vcvt.s32.f32 %v148
    %v157 = vcvt.s32.f32 %v149
    %v158 = vcvt.s32.f32 %v150
    %v159 = vcvt.s32.f32 %v151
    %v160 = vcvt.s32.f32 %v152
    %v161 = vcvt.s32.f32 %v153
    %v162 = vcvt.s32.f32 %v154
    %v163 = vcvt.s32.f32 %v155
    %v164 = vadd.f32 %v98, %v156
    %v165 = vadd.f32 %v99, %v157
    %v166 = vadd.f32 %v100, %v158
    %v167 = vadd.f32 %v101, %v159
    %v168 = vadd.f32 %v102, %v160
    %v169 = vadd.f32 %v103, %v161
    %v170 = vadd.f32 %v104, %v162
    %v171 = vadd.f32 %v105, %v163
    %vm172 = vcmp.ge.s32.totalorder %v30, 32
    %vm173 = vcmp.ge.s32.totalorder %v31, 32
    %vm174 = vcmp.ge.s32.totalorder %v32, 32
    %vm175 = vcmp.ge.s32.totalorder %v33, 32
    %vm176 = vcmp.ge.s32.totalorder %v34, 32
    %vm177 = vcmp.ge.s32.totalorder %v35, 32
    %vm178 = vcmp.ge.s32.totalorder %v36, 32
    %vm179 = vcmp.ge.s32.totalorder %v37, 32
    %vm180 = vcmp.lt.s32.totalorder %v30, 48
    %vm181 = vcmp.lt.s32.totalorder %v31, 48
    %vm182 = vcmp.lt.s32.totalorder %v32, 48
    %vm183 = vcmp.lt.s32.totalorder %v33, 48
    %vm184 = vcmp.lt.s32.totalorder %v34, 48
    %vm185 = vcmp.lt.s32.totalorder %v35, 48
    %vm186 = vcmp.lt.s32.totalorder %v36, 48
    %vm187 = vcmp.lt.s32.totalorder %v37, 48
    %vm188 = vmand %vm172, %vm180
    %vm189 = vmand %vm173, %vm181
    %vm190 = vmand %vm174, %vm182
    %vm191 = vmand %vm175, %vm183
    %vm192 = vmand %vm176, %vm184
    %vm193 = vmand %vm177, %vm185
    %vm194 = vmand %vm178, %vm186
    %vm195 = vmand %vm179, %vm187
    %vm196 = vcmp.ge.s32.totalorder %v39, 16
    %vm197 = vmand %vm188, %vm196
    %vm198 = vmand %vm189, %vm196
    %vm199 = vmand %vm190, %vm196
    %vm200 = vmand %vm191, %vm196
    %vm201 = vmand %vm192, %vm196
    %vm202 = vmand %vm193, %vm196
    %vm203 = vmand %vm194, %vm196
    %vm204 = vmand %vm195, %vm196
    %vm205 = vcmp.lt.s32.totalorder %v39, 24
    %vm206 = vmand %vm197, %vm205
    %vm207 = vmand %vm198, %vm205
    %vm208 = vmand %vm199, %vm205
    %vm209 = vmand %vm200, %vm205
    %vm210 = vmand %vm201, %vm205
    %vm211 = vmand %vm202, %vm205
    %vm212 = vmand %vm203, %vm205
    %vm213 = vmand %vm204, %vm205
    %v214 = vsel %vm206, 1, 0
    %v215 = vsel %vm207, 1, 0
    %v216 = vsel %vm208, 1, 0
    %v217 = vsel %vm209, 1, 0
    %v218 = vsel %vm210, 1, 0
    %v219 = vsel %vm211, 1, 0
    %v220 = vsel %vm212, 1, 0
    %v221 = vsel %vm213, 1, 0
    %v222 = vcvt.s32.f32 %v214
    %v223 = vcvt.s32.f32 %v215
    %v224 = vcvt.s32.f32 %v216
    %v225 = vcvt.s32.f32 %v217
    %v226 = vcvt.s32.f32 %v218
    %v227 = vcvt.s32.f32 %v219
    %v228 = vcvt.s32.f32 %v220
    %v229 = vcvt.s32.f32 %v221
    %v230 = vadd.f32 %v164, %v222
    %v231 = vadd.f32 %v165, %v223
    %v232 = vadd.f32 %v166, %v224
    %v233 = vadd.f32 %v167, %v225
    %v234 = vadd.f32 %v168, %v226
    %v235 = vadd.f32 %v169, %v227
    %v236 = vadd.f32 %v170, %v228
    %v237 = vadd.f32 %v171, %v229
    %vm238 = vcmp.ge.s32.totalorder %v30, 48
    %vm239 = vcmp.ge.s32.totalorder %v31, 48
    %vm240 = vcmp.ge.s32.totalorder %v32, 48
    %vm241 = vcmp.ge.s32.totalorder %v33, 48
    %vm242 = vcmp.ge.s32.totalorder %v34, 48
    %vm243 = vcmp.ge.s32.totalorder %v35, 48
    %vm244 = vcmp.ge.s32.totalorder %v36, 48
    %vm245 = vcmp.ge.s32.totalorder %v37, 48
    %vm246 = vcmp.lt.s32.totalorder %v30, 64
    %vm247 = vcmp.lt.s32.totalorder %v31, 64
    %vm248 = vcmp.lt.s32.totalorder %v32, 64
    %vm249 = vcmp.lt.s32.totalorder %v33, 64
    %vm250 = vcmp.lt.s32.totalorder %v34, 64
    %vm251 = vcmp.lt.s32.totalorder %v35, 64
    %vm252 = vcmp.lt.s32.totalorder %v36, 64
    %vm253 = vcmp.lt.s32.totalorder %v37, 64
    %vm254 = vmand %vm238, %vm246
    %vm255 = vmand %vm239, %vm247
    %vm256 = vmand %vm240, %vm248
    %vm257 = vmand %vm241, %vm249
    %vm258 = vmand %vm242, %vm250
    %vm259 = vmand %vm243, %vm251
    %vm260 = vmand %vm244, %vm252
    %vm261 = vmand %vm245, %vm253
    %vm262 = vcmp.ge.s32.totalorder %v39, 24
    %vm263 = vmand %vm254, %vm262
    %vm264 = vmand %vm255, %vm262
    %vm265 = vmand %vm256, %vm262
    %vm266 = vmand %vm257, %vm262
    %vm267 = vmand %vm258, %vm262
    %vm268 = vmand %vm259, %vm262
    %vm269 = vmand %vm260, %vm262
    %vm270 = vmand %vm261, %vm262
    %vm271 = vcmp.lt.s32.totalorder %v39, 32
    %vm272 = vmand %vm263, %vm271
    %vm273 = vmand %vm264, %vm271
    %vm274 = vmand %vm265, %vm271
    %vm275 = vmand %vm266, %vm271
    %vm276 = vmand %vm267, %vm271
    %vm277 = vmand %vm268, %vm271
    %vm278 = vmand %vm269, %vm271
    %vm279 = vmand %vm270, %vm271
    %v280 = vsel %vm272, 1, 0
    %v281 = vsel %vm273, 1, 0
    %v282 = vsel %vm274, 1, 0
    %v283 = vsel %vm275, 1, 0
    %v284 = vsel %vm276, 1, 0
    %v285 = vsel %vm277, 1, 0
    %v286 = vsel %vm278, 1, 0
    %v287 = vsel %vm279, 1, 0
    %v288 = vcvt.s32.f32 %v280
    %v289 = vcvt.s32.f32 %v281
    %v290 = vcvt.s32.f32 %v282
    %v291 = vcvt.s32.f32 %v283
    %v292 = vcvt.s32.f32 %v284
    %v293 = vcvt.s32.f32 %v285
    %v294 = vcvt.s32.f32 %v286
    %v295 = vcvt.s32.f32 %v287
    %v296 = vadd.f32 %v230, %v288
    %v297 = vadd.f32 %v231, %v289
    %v298 = vadd.f32 %v232, %v290
    %v299 = vadd.f32 %v233, %v291
    %v300 = vadd.f32 %v234, %v292
    %v301 = vadd.f32 %v235, %v293
    %v302 = vadd.f32 %v236, %v294
    %v303 = vadd.f32 %v237, %v295
    %vm304 = vcmask 261120
    %v306 = vsel %vm304, %v296, 0
    %v309 = vsel %vm304, %v297, 0
    %v312 = vsel %vm304, %v298, 0
    %v315 = vsel %vm304, %v299, 0
    %v318 = vsel %vm304, %v300, 0
    %v321 = vsel %vm304, %v301, 0
    %v324 = vsel %vm304, %v302, 0
    %v327 = vsel %vm304, %v303, 0
    %329 = vmatpush.xpose.msra.mxu0 0.0
    %330 = vmatpush.xpose.msra.mxu0 0.0
    %331 = vmatpush.xpose.msra.mxu0 0.0
    %332 = vmatpush.xpose.msra.mxu0 0.0
    %333 = vmatpush.xpose.msra.mxu0 0.0
    %334 = vmatpush.xpose.msra.mxu0 0.0
    %335 = vmatpush.xpose.msra.mxu0 0.0
    %336 = vmatpush.xpose.msra.mxu0 0.0
    %337 = vmatpush.xpose.msra.mxu0 %v327
    %338 = vmatpush.xpose.msra.mxu0 %v324
    %339 = vmatpush.xpose.msra.mxu0 %v321
    %340 = vmatpush.xpose.msra.mxu0 %v318
    %341 = vmatpush.xpose.msra.mxu0 %v315
    %342 = vmatpush.xpose.msra.mxu0 %v312
    %343 = vmatpush.xpose.msra.mxu0 %v309
    %344 = vmatpush.xpose.msra.mxu0 %v306
    %345 = vmatmul.f32.gmra.mxu0 %v306
    %v346 = vpop.f32.mrf.mxu0
    %v347 = vadd.f32 0.0, %v346
    %348 = vmatmul.f32.gmra.mxu0 %v309
    %v349 = vpop.f32.mrf.mxu0
    %v350 = vadd.f32 0.0, %v349
    %351 = vmatmul.f32.gmra.mxu0 %v312
    %v352 = vpop.f32.mrf.mxu0
    %v353 = vadd.f32 0.0, %v352
    %354 = vmatmul.f32.gmra.mxu0 %v315
    %v355 = vpop.f32.mrf.mxu0
    %v356 = vadd.f32 0.0, %v355
    %357 = vmatmul.f32.gmra.mxu0 %v318
    %v358 = vpop.f32.mrf.mxu0
    %v359 = vadd.f32 0.0, %v358
    %360 = vmatmul.f32.gmra.mxu0 %v321
    %v361 = vpop.f32.mrf.mxu0
    %v362 = vadd.f32 0.0, %v361
    %363 = vmatmul.f32.gmra.mxu0 %v324
    %v364 = vpop.f32.mrf.mxu0
    %v365 = vadd.f32 0.0, %v364
    %366 = vmatmul.f32.gmra.mxu0 %v327
    %v367 = vpop.f32.mrf.mxu0
    %v368 = vadd.f32 0.0, %v367
    %369 = vdwg.mxu0
    %v370 = vmul.f32 %v347, 0.125
    %v371 = vmul.f32 %v350, 0.125
    %v372 = vmul.f32 %v353, 0.125
    %v373 = vmul.f32 %v356, 0.125
    %v374 = vmul.f32 %v359, 0.125
    %v375 = vmul.f32 %v362, 0.125
    %v376 = vmul.f32 %v365, 0.125
    %v377 = vmul.f32 %v368, 0.125
    %v378 = vld [vmem:[%s4 + $0xaa] sm:$0x1]
    %v379 = vld [vmem:[%s4 + $0xab] sm:$0x1]
    %v380 = vsel %vm304, %v21, 0.0
    %381 = vadd.xlane.f32.xlu0 %v380
    %v382 = vpop.xlane.xlu0 %381
    %v383 = vsel %vm304, %v22, 0.0
    %384 = vadd.xlane.f32.xlu0 %v383
    %v385 = vpop.xlane.xlu0 %384
    %v386 = vrcp.pop 32.0
    %v387 = vmul.f32 32.0, %v386
    %v388 = vsub.f32 1.0, %v387
    %v389 = vmul.f32 %v386, %v388
    %v390 = vadd.f32 %v386, %v389
    %vm391 = vweird.f32 %v386
    %v392 = vsel %vm391, %v386, %v390
    %v393 = vmul.f32 %v382, %v392
    %v394 = vmul.f32 %v385, %v392
    %v395 = vsub.f32 %v21, %v393
    %v396 = vsub.f32 %v22, %v394
    %v397 = vmul.f32 %v395, %v395
    %v398 = vmul.f32 %v396, %v396
    %v399 = vsel %vm304, %v397, 0.0
    %400 = vadd.xlane.f32.xlu0 %v399
    %v401 = vpop.xlane.xlu0 %400
    %v402 = vsel %vm304, %v398, 0.0
    %403 = vadd.xlane.f32.xlu0 %v402
    %v404 = vpop.xlane.xlu0 %403
    %v405 = vmul.f32 %v401, 0.032258064
    %v406 = vmul.f32 %v404, 0.032258064
    %v407 = vrsqrt.pop %v405
    %v408 = vmul.f32 %v407, %v405
    %v409 = vmul.f32 %v408, %v407
    %v410 = vmul.f32 0.5, %v409
    %v411 = vsub.f32 1.5, %v410
    %v412 = vmul.f32 %v407, %v411
    %v413 = vmul.f32 %v405, %v412
    %vm414 = vcmp.eq.f32.partialorder %v405, inf
    %v415 = vsel %vm414, %v405, %v413
    %vm416 = vcmp.eq.f32.partialorder %v405, 0.0
    %v417 = vand.u32 %v405, 2147483648
    %v418 = vsel %vm416, %v417, %v415
    %v419 = vrsqrt.pop %v406
    %v420 = vmul.f32 %v419, %v406
    %v421 = vmul.f32 %v420, %v419
    %v422 = vmul.f32 0.5, %v421
    %v423 = vsub.f32 1.5, %v422
    %v424 = vmul.f32 %v419, %v423
    %v425 = vmul.f32 %v406, %v424
    %vm426 = vcmp.eq.f32.partialorder %v406, inf
    %v427 = vsel %vm426, %v406, %v425
    %vm428 = vcmp.eq.f32.partialorder %v406, 0.0
    %v429 = vand.u32 %v406, 2147483648
    %v430 = vsel %vm428, %v429, %v427
    %v431 = vadd.f32 %v418, 1e-06
    %v432 = vadd.f32 %v430, 1e-06
    %v433 = vrcp.pop %v431
    %v434 = vmul.f32 %v431, %v433
    %v435 = vsub.f32 1.0, %v434
    %v436 = vmul.f32 %v433, %v435
    %v437 = vadd.f32 %v433, %v436
    %vm438 = vweird.f32 %v431
    %vm439 = vweird.f32 %v433
    %vm440 = vmor %vm438, %vm439
    %v441 = vsel %vm440, %v433, %v437
    %v442 = vand.u32 2147483647, %v431
    %vm443 = vcmp.eq.f32.partialorder %v442, 8.507059e+37
    %v444 = vand.u32 %v431, 2147483648
    %v445 = vor.u32 1.1754944e-38, %v444
    %v446 = vsel %vm443, %v445, %v441
    %v447 = vmul.f32 1.0, %v446
    %v448 = vrcp.pop %v432
    %v449 = vmul.f32 %v432, %v448
    %v450 = vsub.f32 1.0, %v449
    %v451 = vmul.f32 %v448, %v450
    %v452 = vadd.f32 %v448, %v451
    %vm453 = vweird.f32 %v432
    %vm454 = vweird.f32 %v448
    %vm455 = vmor %vm453, %vm454
    %v456 = vsel %vm455, %v448, %v452
    %v457 = vand.u32 2147483647, %v432
    %vm458 = vcmp.eq.f32.partialorder %v457, 8.507059e+37
    %v459 = vand.u32 %v432, 2147483648
    %v460 = vor.u32 1.1754944e-38, %v459
    %v461 = vsel %vm458, %v460, %v456
    %v462 = vmul.f32 1.0, %v461
    %v463 = vmul.f32 %v395, %v447
    %v464 = vmul.f32 %v396, %v462
    %v465 = vperm.slane %v378, 0
    %v466 = vmul.f32 %v465, %v463
    %v467 = vmul.f32 %v465, %v464
    %v468 = vperm.slane %v379, 0
    %v469 = vadd.f32 %v466, %v468
    %v470 = vadd.f32 %v467, %v468
    %v471 = vld [vmem:[%s4] sm:$0xff]
    %v472 = vld [vmem:[%s4 + $0x8] sm:$0xff]
    %v473 = vld [vmem:[%s4 + $0x10] sm:$0xff]
    %v474 = vld [vmem:[%s4 + $0x18] sm:$0xff]
    %v475 = vld [vmem:[%s4 + $0xa0] sm:$0x1]
    %v476 = vperm.slane %v475, 0
    %v478 = vsel %vm304, %v469, 0
    %v481 = vsel %vm304, %v470, 0
    %483 = vmatpush.msra.mxu0 0.0
    %484 = vmatpush.msra.mxu0 0.0
    %485 = vmatpush.msra.mxu0 0.0
    %486 = vmatpush.msra.mxu0 0.0
    %487 = vmatpush.msra.mxu0 0.0
    %488 = vmatpush.msra.mxu0 0.0
    %489 = vmatpush.msra.mxu0 0.0
    %490 = vmatpush.msra.mxu0 0.0
    %491 = vmatpush.msra.mxu0 0.0
    %492 = vmatpush.msra.mxu0 0.0
    %493 = vmatpush.msra.mxu0 0.0
    %494 = vmatpush.msra.mxu0 0.0
    %495 = vmatpush.msra.mxu0 %v474
    %496 = vmatpush.msra.mxu0 %v473
    %497 = vmatpush.msra.mxu0 %v472
    %498 = vmatpush.msra.mxu0 %v471
    %499 = vmatmul.f32.gmra.mxu0 %v478
    %v500 = vpop.f32.mrf.mxu0
    %v501 = vadd.f32 %v476, %v500
    %502 = vmatmul.f32.gmra.mxu0 %v481
    %v503 = vpop.f32.mrf.mxu0
    %v504 = vadd.f32 %v476, %v503
    %505 = vdwg.mxu0
    %v506 = vld [vmem:[%s4 + $0xa1] sm:$0x1]
    %v507 = vperm.slane %v506, 0
    %512 = vrot.lane.b32.xlu0 %v471, 96
    %v513 = vpop.permute.xlu0 %512
    %514 = vrot.lane.b32.xlu0 %v472, 96
    %v515 = vpop.permute.xlu0 %514
    %516 = vrot.lane.b32.xlu0 %v473, 96
    %v517 = vpop.permute.xlu0 %516
    %518 = vrot.lane.b32.xlu0 %v474, 96
    %v519 = vpop.permute.xlu0 %518
    %524 = vmatpush.msra.mxu0 0.0
    %525 = vmatpush.msra.mxu0 0.0
    %526 = vmatpush.msra.mxu0 0.0
    %527 = vmatpush.msra.mxu0 0.0
    %528 = vmatpush.msra.mxu0 0.0
    %529 = vmatpush.msra.mxu0 0.0
    %530 = vmatpush.msra.mxu0 0.0
    %531 = vmatpush.msra.mxu0 0.0
    %532 = vmatpush.msra.mxu0 0.0
    %533 = vmatpush.msra.mxu0 0.0
    %534 = vmatpush.msra.mxu0 0.0
    %535 = vmatpush.msra.mxu0 0.0
    %536 = vmatpush.msra.mxu0 %v519
    %537 = vmatpush.msra.mxu0 %v517
    %538 = vmatpush.msra.mxu0 %v515
    %539 = vmatpush.msra.mxu0 %v513
    %540 = vmatmul.f32.gmra.mxu0 %v478
    %v541 = vpop.f32.mrf.mxu0
    %v542 = vadd.f32 %v507, %v541
    %543 = vmatmul.f32.gmra.mxu0 %v481
    %v544 = vpop.f32.mrf.mxu0
    %v545 = vadd.f32 %v507, %v544
    %546 = vdwg.mxu0
    %v547 = vld [vmem:[%s4 + $0xa2] sm:$0x1]
    %v548 = vperm.slane %v547, 0
    %549 = vrot.lane.b32.xlu0 %v471, 64
    %v550 = vpop.permute.xlu0 %549
    %551 = vrot.lane.b32.xlu0 %v472, 64
    %v552 = vpop.permute.xlu0 %551
    %553 = vrot.lane.b32.xlu0 %v473, 64
    %v554 = vpop.permute.xlu0 %553
    %555 = vrot.lane.b32.xlu0 %v474, 64
    %v556 = vpop.permute.xlu0 %555
    %561 = vmatpush.msra.mxu0 0.0
    %562 = vmatpush.msra.mxu0 0.0
    %563 = vmatpush.msra.mxu0 0.0
    %564 = vmatpush.msra.mxu0 0.0
    %565 = vmatpush.msra.mxu0 0.0
    %566 = vmatpush.msra.mxu0 0.0
    %567 = vmatpush.msra.mxu0 0.0
    %568 = vmatpush.msra.mxu0 0.0
    %569 = vmatpush.msra.mxu0 0.0
    %570 = vmatpush.msra.mxu0 0.0
    %571 = vmatpush.msra.mxu0 0.0
    %572 = vmatpush.msra.mxu0 0.0
    %573 = vmatpush.msra.mxu0 %v556
    %574 = vmatpush.msra.mxu0 %v554
    %575 = vmatpush.msra.mxu0 %v552
    %576 = vmatpush.msra.mxu0 %v550
    %577 = vmatmul.f32.gmra.mxu0 %v478
    %v578 = vpop.f32.mrf.mxu0
    %v579 = vadd.f32 %v548, %v578
    %580 = vmatmul.f32.gmra.mxu0 %v481
    %v581 = vpop.f32.mrf.mxu0
    %v582 = vadd.f32 %v548, %v581
    %583 = vdwg.mxu0
    %v584 = vld [vmem:[%s4 + $0xa3] sm:$0x1]
    %v585 = vmul.f32 %v542, %v296
    %v586 = vmul.f32 %v545, %v297
    %v587 = vmul.f32 %v542, %v298
    %v588 = vmul.f32 %v545, %v299
    %v589 = vmul.f32 %v542, %v300
    %v590 = vmul.f32 %v545, %v301
    %v591 = vmul.f32 %v542, %v302
    %v592 = vmul.f32 %v545, %v303
    %v593 = vmul.f32 %v579, %v296
    %v594 = vmul.f32 %v582, %v297
    %v595 = vmul.f32 %v579, %v298
    %v596 = vmul.f32 %v582, %v299
    %v597 = vmul.f32 %v579, %v300
    %v598 = vmul.f32 %v582, %v301
    %v599 = vmul.f32 %v579, %v302
    %v600 = vmul.f32 %v582, %v303
    %v602 = vsel %vm304, %v501, 0
    %v605 = vsel %vm304, %v504, 0
    %v608 = vsel %vm304, %v585, 0
    %v611 = vsel %vm304, %v586, 0
    %v614 = vsel %vm304, %v587, 0
    %v617 = vsel %vm304, %v588, 0
    %v620 = vsel %vm304, %v589, 0
    %v623 = vsel %vm304, %v590, 0
    %v626 = vsel %vm304, %v591, 0
    %v629 = vsel %vm304, %v592, 0
    %631 = vmatpush.xpose.msra.mxu0 0.0
    %632 = vmatpush.xpose.msra.mxu0 0.0
    %633 = vmatpush.xpose.msra.mxu0 0.0
    %634 = vmatpush.xpose.msra.mxu0 0.0
    %635 = vmatpush.xpose.msra.mxu0 0.0
    %636 = vmatpush.xpose.msra.mxu0 0.0
    %637 = vmatpush.xpose.msra.mxu0 0.0
    %638 = vmatpush.xpose.msra.mxu0 0.0
    %639 = vmatpush.xpose.msra.mxu0 %v629
    %640 = vmatpush.xpose.msra.mxu0 %v626
    %641 = vmatpush.xpose.msra.mxu0 %v623
    %642 = vmatpush.xpose.msra.mxu0 %v620
    %643 = vmatpush.xpose.msra.mxu0 %v617
    %644 = vmatpush.xpose.msra.mxu0 %v614
    %645 = vmatpush.xpose.msra.mxu0 %v611
    %646 = vmatpush.xpose.msra.mxu0 %v608
    %647 = vmatmul.f32.gmra.mxu0 %v602
    %v648 = vpop.f32.mrf.mxu0
    %v649 = vadd.f32 %v25, %v648
    %650 = vmatmul.f32.gmra.mxu0 %v605
    %v651 = vpop.f32.mrf.mxu0
    %v652 = vadd.f32 %v26, %v651
    %653 = vdwg.mxu0
    %vm654 = vcmask 523264
    %v655 = vsel %vm654, %v649, -inf
    %656 = vmax.xlane.f32.xlu0 %v655
    %v657 = vpop.xlane.xlu0 %656
    %v658 = vsel %vm654, %v652, -inf
    %659 = vmax.xlane.f32.xlu0 %v658
    %v660 = vpop.xlane.xlu0 %659
    %v661 = vsub.f32 %v649, %v657
    %v662 = vsub.f32 %v652, %v660
    %v663 = vmul.f32 %v661, 1.442695
    %v664 = vpow.pop %v663
    %v665 = vmul.f32 %v662, 1.442695
    %v666 = vpow.pop %v665
    %v668 = vsel %vm654, %v664, 0
    %v671 = vsel %vm654, %v666, 0
    %673 = vmatpush.msra.mxu0 0.0
    %674 = vmatpush.msra.mxu0 0.0
    %675 = vmatpush.msra.mxu0 0.0
    %676 = vmatpush.msra.mxu0 0.0
    %677 = vmatpush.msra.mxu0 0.0
    %678 = vmatpush.msra.mxu0 0.0
    %679 = vmatpush.msra.mxu0 0.0
    %680 = vmatpush.msra.mxu0 0.0
    %681 = vmatpush.msra.mxu0 %v377
    %682 = vmatpush.msra.mxu0 %v376
    %683 = vmatpush.msra.mxu0 %v375
    %684 = vmatpush.msra.mxu0 %v374
    %685 = vmatpush.msra.mxu0 %v373
    %686 = vmatpush.msra.mxu0 %v372
    %687 = vmatpush.msra.mxu0 %v371
    %688 = vmatpush.msra.mxu0 %v370
    %689 = vmatmul.f32.gmra.mxu0 %v668
    %v690 = vpop.f32.mrf.mxu0
    %v691 = vadd.f32 0.0, %v690
    %692 = vmatmul.f32.gmra.mxu0 %v671
    %v693 = vpop.f32.mrf.mxu0
    %v694 = vadd.f32 0.0, %v693
    %695 = vdwg.mxu0
    %v696 = vrcp.pop %v691
    %v697 = vmul.f32 %v691, %v696
    %v698 = vsub.f32 1.0, %v697
    %v699 = vmul.f32 %v696, %v698
    %v700 = vadd.f32 %v696, %v699
    %vm701 = vweird.f32 %v691
    %vm702 = vweird.f32 %v696
    %vm703 = vmor %vm701, %vm702
    %v704 = vsel %vm703, %v696, %v700
    %v705 = vand.u32 2147483647, %v691
    %vm706 = vcmp.eq.f32.partialorder %v705, 8.507059e+37
    %v707 = vand.u32 %v691, 2147483648
    %v708 = vor.u32 1.1754944e-38, %v707
    %v709 = vsel %vm706, %v708, %v704
    %v710 = vmul.f32 %v664, %v709
    %v711 = vrcp.pop %v694
    %v712 = vmul.f32 %v694, %v711
    %v713 = vsub.f32 1.0, %v712
    %v714 = vmul.f32 %v711, %v713
    %v715 = vadd.f32 %v711, %v714
    %vm716 = vweird.f32 %v694
    %vm717 = vweird.f32 %v711
    %vm718 = vmor %vm716, %vm717
    %v719 = vsel %vm718, %v711, %v715
    %v720 = vand.u32 2147483647, %v694
    %vm721 = vcmp.eq.f32.partialorder %v720, 8.507059e+37
    %v722 = vand.u32 %v694, 2147483648
    %v723 = vor.u32 1.1754944e-38, %v722
    %v724 = vsel %vm721, %v723, %v719
    %v725 = vmul.f32 %v666, %v724
    %v727 = vsel %vm654, %v710, 0
    %v730 = vsel %vm654, %v725, 0
    %732 = vmatpush.msra.mxu0 0.0
    %733 = vmatpush.msra.mxu0 0.0
    %734 = vmatpush.msra.mxu0 0.0
    %735 = vmatpush.msra.mxu0 0.0
    %736 = vmatpush.msra.mxu0 0.0
    %737 = vmatpush.msra.mxu0 0.0
    %738 = vmatpush.msra.mxu0 0.0
    %739 = vmatpush.msra.mxu0 0.0
    %740 = vmatpush.msra.mxu0 %v600
    %741 = vmatpush.msra.mxu0 %v599
    %742 = vmatpush.msra.mxu0 %v598
    %743 = vmatpush.msra.mxu0 %v597
    %744 = vmatpush.msra.mxu0 %v596
    %745 = vmatpush.msra.mxu0 %v595
    %746 = vmatpush.msra.mxu0 %v594
    %747 = vmatpush.msra.mxu0 %v593
    %748 = vmatmul.f32.gmra.mxu0 %v727
    %v749 = vpop.f32.mrf.mxu0
    %v750 = vadd.f32 0.0, %v749
    %751 = vmatmul.f32.gmra.mxu0 %v730
    %v752 = vpop.f32.mrf.mxu0
    %v753 = vadd.f32 0.0, %v752
    %754 = vdwg.mxu0
    %v755 = vperm.slane %v584, 0
    %756 = vrot.lane.b32.xlu0 %v471, 32
    %v757 = vpop.permute.xlu0 %756
    %758 = vrot.lane.b32.xlu0 %v472, 32
    %v759 = vpop.permute.xlu0 %758
    %760 = vrot.lane.b32.xlu0 %v473, 32
    %v761 = vpop.permute.xlu0 %760
    %762 = vrot.lane.b32.xlu0 %v474, 32
    %v763 = vpop.permute.xlu0 %762
    %v769 = vsel %vm304, %v750, 0
    %v772 = vsel %vm304, %v753, 0
    %774 = vmatpush.msra.mxu0 0.0
    %775 = vmatpush.msra.mxu0 0.0
    %776 = vmatpush.msra.mxu0 0.0
    %777 = vmatpush.msra.mxu0 0.0
    %778 = vmatpush.msra.mxu0 0.0
    %779 = vmatpush.msra.mxu0 0.0
    %780 = vmatpush.msra.mxu0 0.0
    %781 = vmatpush.msra.mxu0 0.0
    %782 = vmatpush.msra.mxu0 0.0
    %783 = vmatpush.msra.mxu0 0.0
    %784 = vmatpush.msra.mxu0 0.0
    %785 = vmatpush.msra.mxu0 0.0
    %786 = vmatpush.msra.mxu0 %v763
    %787 = vmatpush.msra.mxu0 %v761
    %788 = vmatpush.msra.mxu0 %v759
    %789 = vmatpush.msra.mxu0 %v757
    %790 = vmatmul.f32.gmra.mxu0 %v769
    %v791 = vpop.f32.mrf.mxu0
    %v792 = vadd.f32 %v755, %v791
    %793 = vmatmul.f32.gmra.mxu0 %v772
    %v794 = vpop.f32.mrf.mxu0
    %v795 = vadd.f32 %v755, %v794
    %796 = vdwg.mxu0
    %v797 = vadd.f32 %v21, %v792
    %v798 = vadd.f32 %v22, %v795
    %v799 = vld [vmem:[%s4 + $0xac] sm:$0x1]
    %v800 = vld [vmem:[%s4 + $0xad] sm:$0x1]
    %v801 = vsel %vm304, %v797, 0.0
    %802 = vadd.xlane.f32.xlu0 %v801
    %v803 = vpop.xlane.xlu0 %802
    %v804 = vsel %vm304, %v798, 0.0
    %805 = vadd.xlane.f32.xlu0 %v804
    %v806 = vpop.xlane.xlu0 %805
    %v807 = vmul.f32 %v803, %v392
    %v808 = vmul.f32 %v806, %v392
    %v809 = vsub.f32 %v797, %v807
    %v810 = vsub.f32 %v798, %v808
    %v811 = vmul.f32 %v809, %v809
    %v812 = vmul.f32 %v810, %v810
    %v813 = vsel %vm304, %v811, 0.0
    %814 = vadd.xlane.f32.xlu0 %v813
    %v815 = vpop.xlane.xlu0 %814
    %v816 = vsel %vm304, %v812, 0.0
    %817 = vadd.xlane.f32.xlu0 %v816
    %v818 = vpop.xlane.xlu0 %817
    %v819 = vmul.f32 %v815, 0.032258064
    %v820 = vmul.f32 %v818, 0.032258064
    %v821 = vrsqrt.pop %v819
    %v822 = vmul.f32 %v821, %v819
    %v823 = vmul.f32 %v822, %v821
    %v824 = vmul.f32 0.5, %v823
    %v825 = vsub.f32 1.5, %v824
    %v826 = vmul.f32 %v821, %v825
    %v827 = vmul.f32 %v819, %v826
    %vm828 = vcmp.eq.f32.partialorder %v819, inf
    %v829 = vsel %vm828, %v819, %v827
    %vm830 = vcmp.eq.f32.partialorder %v819, 0.0
    %v831 = vand.u32 %v819, 2147483648
    %v832 = vsel %vm830, %v831, %v829
    %v833 = vrsqrt.pop %v820
    %v834 = vmul.f32 %v833, %v820
    %v835 = vmul.f32 %v834, %v833
    %v836 = vmul.f32 0.5, %v835
    %v837 = vsub.f32 1.5, %v836
    %v838 = vmul.f32 %v833, %v837
    %v839 = vmul.f32 %v820, %v838
    %vm840 = vcmp.eq.f32.partialorder %v820, inf
    %v841 = vsel %vm840, %v820, %v839
    %vm842 = vcmp.eq.f32.partialorder %v820, 0.0
    %v843 = vand.u32 %v820, 2147483648
    %v844 = vsel %vm842, %v843, %v841
    %v845 = vadd.f32 %v832, 1e-06
    %v846 = vadd.f32 %v844, 1e-06
    %v847 = vrcp.pop %v845
    %v848 = vmul.f32 %v845, %v847
    %v849 = vsub.f32 1.0, %v848
    %v850 = vmul.f32 %v847, %v849
    %v851 = vadd.f32 %v847, %v850
    %vm852 = vweird.f32 %v845
    %vm853 = vweird.f32 %v847
    %vm854 = vmor %vm852, %vm853
    %v855 = vsel %vm854, %v847, %v851
    %v856 = vand.u32 2147483647, %v845
    %vm857 = vcmp.eq.f32.partialorder %v856, 8.507059e+37
    %v858 = vand.u32 %v845, 2147483648
    %v859 = vor.u32 1.1754944e-38, %v858
    %v860 = vsel %vm857, %v859, %v855
    %v861 = vmul.f32 1.0, %v860
    %v862 = vrcp.pop %v846
    %v863 = vmul.f32 %v846, %v862
    %v864 = vsub.f32 1.0, %v863
    %v865 = vmul.f32 %v862, %v864
    %v866 = vadd.f32 %v862, %v865
    %vm867 = vweird.f32 %v846
    %vm868 = vweird.f32 %v862
    %vm869 = vmor %vm867, %vm868
    %v870 = vsel %vm869, %v862, %v866
    %v871 = vand.u32 2147483647, %v846
    %vm872 = vcmp.eq.f32.partialorder %v871, 8.507059e+37
    %v873 = vand.u32 %v846, 2147483648
    %v874 = vor.u32 1.1754944e-38, %v873
    %v875 = vsel %vm872, %v874, %v870
    %v876 = vmul.f32 1.0, %v875
    %v877 = vmul.f32 %v809, %v861
    %v878 = vmul.f32 %v810, %v876
    %v879 = vperm.slane %v799, 0
    %v880 = vmul.f32 %v879, %v877
    %v881 = vmul.f32 %v879, %v878
    %v882 = vperm.slane %v800, 0
    %v883 = vadd.f32 %v880, %v882
    %v884 = vadd.f32 %v881, %v882
    %v885 = vld [vmem:[%s4 + $0x20] sm:$0xff]
    %v886 = vld [vmem:[%s4 + $0x28] sm:$0xff]
    %v887 = vld [vmem:[%s4 + $0x30] sm:$0xff]
    %v888 = vld [vmem:[%s4 + $0x38] sm:$0xff]
    %v889 = vld [vmem:[%s4 + $0xa4] sm:$0x1]
    %v890 = vperm.slane %v889, 0
    %v892 = vsel %vm304, %v883, 0
    %v895 = vsel %vm304, %v884, 0
    %897 = vmatpush.msra.mxu0 0.0
    %898 = vmatpush.msra.mxu0 0.0
    %899 = vmatpush.msra.mxu0 0.0
    %900 = vmatpush.msra.mxu0 0.0
    %901 = vmatpush.msra.mxu0 0.0
    %902 = vmatpush.msra.mxu0 0.0
    %903 = vmatpush.msra.mxu0 0.0
    %904 = vmatpush.msra.mxu0 0.0
    %905 = vmatpush.msra.mxu0 0.0
    %906 = vmatpush.msra.mxu0 0.0
    %907 = vmatpush.msra.mxu0 0.0
    %908 = vmatpush.msra.mxu0 0.0
    %909 = vmatpush.msra.mxu0 %v888
    %910 = vmatpush.msra.mxu0 %v887
    %911 = vmatpush.msra.mxu0 %v886
    %912 = vmatpush.msra.mxu0 %v885
    %913 = vmatmul.f32.gmra.mxu0 %v892
    %v914 = vpop.f32.mrf.mxu0
    %v915 = vadd.f32 %v890, %v914
    %916 = vmatmul.f32.gmra.mxu0 %v895
    %v917 = vpop.f32.mrf.mxu0
    %v918 = vadd.f32 %v890, %v917
    %919 = vdwg.mxu0
    %v920 = vld [vmem:[%s4 + $0xa5] sm:$0x1]
    %v921 = vperm.slane %v920, 0
    %926 = vrot.lane.b32.xlu0 %v885, 96
    %v927 = vpop.permute.xlu0 %926
    %928 = vrot.lane.b32.xlu0 %v886, 96
    %v929 = vpop.permute.xlu0 %928
    %930 = vrot.lane.b32.xlu0 %v887, 96
    %v931 = vpop.permute.xlu0 %930
    %932 = vrot.lane.b32.xlu0 %v888, 96
    %v933 = vpop.permute.xlu0 %932
    %v939 = vsel %vm304, %v23, 0
    %v942 = vsel %vm304, %v24, 0
    %944 = vmatpush.msra.mxu0 0.0
    %945 = vmatpush.msra.mxu0 0.0
    %946 = vmatpush.msra.mxu0 0.0
    %947 = vmatpush.msra.mxu0 0.0
    %948 = vmatpush.msra.mxu0 0.0
    %949 = vmatpush.msra.mxu0 0.0
    %950 = vmatpush.msra.mxu0 0.0
    %951 = vmatpush.msra.mxu0 0.0
    %952 = vmatpush.msra.mxu0 0.0
    %953 = vmatpush.msra.mxu0 0.0
    %954 = vmatpush.msra.mxu0 0.0
    %955 = vmatpush.msra.mxu0 0.0
    %956 = vmatpush.msra.mxu0 %v933
    %957 = vmatpush.msra.mxu0 %v931
    %958 = vmatpush.msra.mxu0 %v929
    %959 = vmatpush.msra.mxu0 %v927
    %960 = vmatmul.f32.gmra.mxu0 %v939
    %v961 = vpop.f32.mrf.mxu0
    %v962 = vadd.f32 %v921, %v961
    %963 = vmatmul.f32.gmra.mxu0 %v942
    %v964 = vpop.f32.mrf.mxu0
    %v965 = vadd.f32 %v921, %v964
    %966 = vdwg.mxu0
    %v967 = vld [vmem:[%s4 + $0xa6] sm:$0x1]
    %v968 = vperm.slane %v967, 0
    %969 = vrot.lane.b32.xlu0 %v885, 64
    %v970 = vpop.permute.xlu0 %969
    %971 = vrot.lane.b32.xlu0 %v886, 64
    %v972 = vpop.permute.xlu0 %971
    %973 = vrot.lane.b32.xlu0 %v887, 64
    %v974 = vpop.permute.xlu0 %973
    %975 = vrot.lane.b32.xlu0 %v888, 64
    %v976 = vpop.permute.xlu0 %975
    %981 = vmatpush.msra.mxu0 0.0
    %982 = vmatpush.msra.mxu0 0.0
    %983 = vmatpush.msra.mxu0 0.0
    %984 = vmatpush.msra.mxu0 0.0
    %985 = vmatpush.msra.mxu0 0.0
    %986 = vmatpush.msra.mxu0 0.0
    %987 = vmatpush.msra.mxu0 0.0
    %988 = vmatpush.msra.mxu0 0.0
    %989 = vmatpush.msra.mxu0 0.0
    %990 = vmatpush.msra.mxu0 0.0
    %991 = vmatpush.msra.mxu0 0.0
    %992 = vmatpush.msra.mxu0 0.0
    %993 = vmatpush.msra.mxu0 %v976
    %994 = vmatpush.msra.mxu0 %v974
    %995 = vmatpush.msra.mxu0 %v972
    %996 = vmatpush.msra.mxu0 %v970
    %997 = vmatmul.f32.gmra.mxu0 %v939
    %v998 = vpop.f32.mrf.mxu0
    %v999 = vadd.f32 %v968, %v998
    %1000 = vmatmul.f32.gmra.mxu0 %v942
    %v1001 = vpop.f32.mrf.mxu0
    %v1002 = vadd.f32 %v968, %v1001
    %1003 = vdwg.mxu0
    %v1004 = vld [vmem:[%s4 + $0xa7] sm:$0x1]
    %v1005 = vmul.f32 %v962, %v296
    %v1006 = vmul.f32 %v965, %v297
    %v1007 = vmul.f32 %v962, %v298
    %v1008 = vmul.f32 %v965, %v299
    %v1009 = vmul.f32 %v962, %v300
    %v1010 = vmul.f32 %v965, %v301
    %v1011 = vmul.f32 %v962, %v302
    %v1012 = vmul.f32 %v965, %v303
    %v1013 = vmul.f32 %v999, %v296
    %v1014 = vmul.f32 %v1002, %v297
    %v1015 = vmul.f32 %v999, %v298
    %v1016 = vmul.f32 %v1002, %v299
    %v1017 = vmul.f32 %v999, %v300
    %v1018 = vmul.f32 %v1002, %v301
    %v1019 = vmul.f32 %v999, %v302
    %v1020 = vmul.f32 %v1002, %v303
    %v1022 = vsel %vm304, %v915, 0
    %v1025 = vsel %vm304, %v918, 0
    %v1028 = vsel %vm304, %v1005, 0
    %v1031 = vsel %vm304, %v1006, 0
    %v1034 = vsel %vm304, %v1007, 0
    %v1037 = vsel %vm304, %v1008, 0
    %v1040 = vsel %vm304, %v1009, 0
    %v1043 = vsel %vm304, %v1010, 0
    %v1046 = vsel %vm304, %v1011, 0
    %v1049 = vsel %vm304, %v1012, 0
    %1051 = vmatpush.xpose.msra.mxu0 0.0
    %1052 = vmatpush.xpose.msra.mxu0 0.0
    %1053 = vmatpush.xpose.msra.mxu0 0.0
    %1054 = vmatpush.xpose.msra.mxu0 0.0
    %1055 = vmatpush.xpose.msra.mxu0 0.0
    %1056 = vmatpush.xpose.msra.mxu0 0.0
    %1057 = vmatpush.xpose.msra.mxu0 0.0
    %1058 = vmatpush.xpose.msra.mxu0 0.0
    %1059 = vmatpush.xpose.msra.mxu0 %v1049
    %1060 = vmatpush.xpose.msra.mxu0 %v1046
    %1061 = vmatpush.xpose.msra.mxu0 %v1043
    %1062 = vmatpush.xpose.msra.mxu0 %v1040
    %1063 = vmatpush.xpose.msra.mxu0 %v1037
    %1064 = vmatpush.xpose.msra.mxu0 %v1034
    %1065 = vmatpush.xpose.msra.mxu0 %v1031
    %1066 = vmatpush.xpose.msra.mxu0 %v1028
    %1067 = vmatmul.f32.gmra.mxu0 %v1022
    %v1068 = vpop.f32.mrf.mxu0
    %v1069 = vadd.f32 %v27, %v1068
    %1070 = vmatmul.f32.gmra.mxu0 %v1025
    %v1071 = vpop.f32.mrf.mxu0
    %v1072 = vadd.f32 %v28, %v1071
    %1073 = vdwg.mxu0
    %v1074 = vsel %vm654, %v1069, -inf
    %1075 = vmax.xlane.f32.xlu0 %v1074
    %v1076 = vpop.xlane.xlu0 %1075
    %v1077 = vsel %vm654, %v1072, -inf
    %1078 = vmax.xlane.f32.xlu0 %v1077
    %v1079 = vpop.xlane.xlu0 %1078
    %v1080 = vsub.f32 %v1069, %v1076
    %v1081 = vsub.f32 %v1072, %v1079
    %v1082 = vmul.f32 %v1080, 1.442695
    %v1083 = vpow.pop %v1082
    %v1084 = vmul.f32 %v1081, 1.442695
    %v1085 = vpow.pop %v1084
    %v1087 = vsel %vm654, %v1083, 0
    %v1090 = vsel %vm654, %v1085, 0
    %1092 = vmatpush.msra.mxu0 0.0
    %1093 = vmatpush.msra.mxu0 0.0
    %1094 = vmatpush.msra.mxu0 0.0
    %1095 = vmatpush.msra.mxu0 0.0
    %1096 = vmatpush.msra.mxu0 0.0
    %1097 = vmatpush.msra.mxu0 0.0
    %1098 = vmatpush.msra.mxu0 0.0
    %1099 = vmatpush.msra.mxu0 0.0
    %1100 = vmatpush.msra.mxu0 %v377
    %1101 = vmatpush.msra.mxu0 %v376
    %1102 = vmatpush.msra.mxu0 %v375
    %1103 = vmatpush.msra.mxu0 %v374
    %1104 = vmatpush.msra.mxu0 %v373
    %1105 = vmatpush.msra.mxu0 %v372
    %1106 = vmatpush.msra.mxu0 %v371
    %1107 = vmatpush.msra.mxu0 %v370
    %1108 = vmatmul.f32.gmra.mxu0 %v1087
    %v1109 = vpop.f32.mrf.mxu0
    %v1110 = vadd.f32 0.0, %v1109
    %1111 = vmatmul.f32.gmra.mxu0 %v1090
    %v1112 = vpop.f32.mrf.mxu0
    %v1113 = vadd.f32 0.0, %v1112
    %1114 = vdwg.mxu0
    %v1115 = vrcp.pop %v1110
    %v1116 = vmul.f32 %v1110, %v1115
    %v1117 = vsub.f32 1.0, %v1116
    %v1118 = vmul.f32 %v1115, %v1117
    %v1119 = vadd.f32 %v1115, %v1118
    %vm1120 = vweird.f32 %v1110
    %vm1121 = vweird.f32 %v1115
    %vm1122 = vmor %vm1120, %vm1121
    %v1123 = vsel %vm1122, %v1115, %v1119
    %v1124 = vand.u32 2147483647, %v1110
    %vm1125 = vcmp.eq.f32.partialorder %v1124, 8.507059e+37
    %v1126 = vand.u32 %v1110, 2147483648
    %v1127 = vor.u32 1.1754944e-38, %v1126
    %v1128 = vsel %vm1125, %v1127, %v1123
    %v1129 = vmul.f32 %v1083, %v1128
    %v1130 = vrcp.pop %v1113
    %v1131 = vmul.f32 %v1113, %v1130
    %v1132 = vsub.f32 1.0, %v1131
    %v1133 = vmul.f32 %v1130, %v1132
    %v1134 = vadd.f32 %v1130, %v1133
    %vm1135 = vweird.f32 %v1113
    %vm1136 = vweird.f32 %v1130
    %vm1137 = vmor %vm1135, %vm1136
    %v1138 = vsel %vm1137, %v1130, %v1134
    %v1139 = vand.u32 2147483647, %v1113
    %vm1140 = vcmp.eq.f32.partialorder %v1139, 8.507059e+37
    %v1141 = vand.u32 %v1113, 2147483648
    %v1142 = vor.u32 1.1754944e-38, %v1141
    %v1143 = vsel %vm1140, %v1142, %v1138
    %v1144 = vmul.f32 %v1085, %v1143
    %v1146 = vsel %vm654, %v1129, 0
    %v1149 = vsel %vm654, %v1144, 0
    %1151 = vmatpush.msra.mxu0 0.0
    %1152 = vmatpush.msra.mxu0 0.0
    %1153 = vmatpush.msra.mxu0 0.0
    %1154 = vmatpush.msra.mxu0 0.0
    %1155 = vmatpush.msra.mxu0 0.0
    %1156 = vmatpush.msra.mxu0 0.0
    %1157 = vmatpush.msra.mxu0 0.0
    %1158 = vmatpush.msra.mxu0 0.0
    %1159 = vmatpush.msra.mxu0 %v1020
    %1160 = vmatpush.msra.mxu0 %v1019
    %1161 = vmatpush.msra.mxu0 %v1018
    %1162 = vmatpush.msra.mxu0 %v1017
    %1163 = vmatpush.msra.mxu0 %v1016
    %1164 = vmatpush.msra.mxu0 %v1015
    %1165 = vmatpush.msra.mxu0 %v1014
    %1166 = vmatpush.msra.mxu0 %v1013
    %1167 = vmatmul.f32.gmra.mxu0 %v1146
    %v1168 = vpop.f32.mrf.mxu0
    %v1169 = vadd.f32 0.0, %v1168
    %1170 = vmatmul.f32.gmra.mxu0 %v1149
    %v1171 = vpop.f32.mrf.mxu0
    %v1172 = vadd.f32 0.0, %v1171
    %1173 = vdwg.mxu0
    %v1174 = vperm.slane %v1004, 0
    %1175 = vrot.lane.b32.xlu0 %v885, 32
    %v1176 = vpop.permute.xlu0 %1175
    %1177 = vrot.lane.b32.xlu0 %v886, 32
    %v1178 = vpop.permute.xlu0 %1177
    %1179 = vrot.lane.b32.xlu0 %v887, 32
    %v1180 = vpop.permute.xlu0 %1179
    %1181 = vrot.lane.b32.xlu0 %v888, 32
    %v1182 = vpop.permute.xlu0 %1181
    %v1188 = vsel %vm304, %v1169, 0
    %v1191 = vsel %vm304, %v1172, 0
    %1193 = vmatpush.msra.mxu0 0.0
    %1194 = vmatpush.msra.mxu0 0.0
    %1195 = vmatpush.msra.mxu0 0.0
    %1196 = vmatpush.msra.mxu0 0.0
    %1197 = vmatpush.msra.mxu0 0.0
    %1198 = vmatpush.msra.mxu0 0.0
    %1199 = vmatpush.msra.mxu0 0.0
    %1200 = vmatpush.msra.mxu0 0.0
    %1201 = vmatpush.msra.mxu0 0.0
    %1202 = vmatpush.msra.mxu0 0.0
    %1203 = vmatpush.msra.mxu0 0.0
    %1204 = vmatpush.msra.mxu0 0.0
    %1205 = vmatpush.msra.mxu0 %v1182
    %1206 = vmatpush.msra.mxu0 %v1180
    %1207 = vmatpush.msra.mxu0 %v1178
    %1208 = vmatpush.msra.mxu0 %v1176
    %1209 = vmatmul.f32.gmra.mxu0 %v1188
    %v1210 = vpop.f32.mrf.mxu0
    %v1211 = vadd.f32 %v1174, %v1210
    %1212 = vmatmul.f32.gmra.mxu0 %v1191
    %v1213 = vpop.f32.mrf.mxu0
    %v1214 = vadd.f32 %v1174, %v1213
    %1215 = vdwg.mxu0
    %v1216 = vadd.f32 %v797, %v1211
    %v1217 = vadd.f32 %v798, %v1214
    %v1218 = vld [vmem:[%s4 + $0xae] sm:$0x1]
    %v1219 = vld [vmem:[%s4 + $0xaf] sm:$0x1]
    %v1220 = vsel %vm304, %v1216, 0.0
    %1221 = vadd.xlane.f32.xlu0 %v1220
    %v1222 = vpop.xlane.xlu0 %1221
    %v1223 = vsel %vm304, %v1217, 0.0
    %1224 = vadd.xlane.f32.xlu0 %v1223
    %v1225 = vpop.xlane.xlu0 %1224
    %v1226 = vmul.f32 %v1222, %v392
    %v1227 = vmul.f32 %v1225, %v392
    %v1228 = vsub.f32 %v1216, %v1226
    %v1229 = vsub.f32 %v1217, %v1227
    %v1230 = vmul.f32 %v1228, %v1228
    %v1231 = vmul.f32 %v1229, %v1229
    %v1232 = vsel %vm304, %v1230, 0.0
    %1233 = vadd.xlane.f32.xlu0 %v1232
    %v1234 = vpop.xlane.xlu0 %1233
    %v1235 = vsel %vm304, %v1231, 0.0
    %1236 = vadd.xlane.f32.xlu0 %v1235
    %v1237 = vpop.xlane.xlu0 %1236
    %v1238 = vmul.f32 %v1234, 0.032258064
    %v1239 = vmul.f32 %v1237, 0.032258064
    %v1240 = vrsqrt.pop %v1238
    %v1241 = vmul.f32 %v1240, %v1238
    %v1242 = vmul.f32 %v1241, %v1240
    %v1243 = vmul.f32 0.5, %v1242
    %v1244 = vsub.f32 1.5, %v1243
    %v1245 = vmul.f32 %v1240, %v1244
    %v1246 = vmul.f32 %v1238, %v1245
    %vm1247 = vcmp.eq.f32.partialorder %v1238, inf
    %v1248 = vsel %vm1247, %v1238, %v1246
    %vm1249 = vcmp.eq.f32.partialorder %v1238, 0.0
    %v1250 = vand.u32 %v1238, 2147483648
    %v1251 = vsel %vm1249, %v1250, %v1248
    %v1252 = vrsqrt.pop %v1239
    %v1253 = vmul.f32 %v1252, %v1239
    %v1254 = vmul.f32 %v1253, %v1252
    %v1255 = vmul.f32 0.5, %v1254
    %v1256 = vsub.f32 1.5, %v1255
    %v1257 = vmul.f32 %v1252, %v1256
    %v1258 = vmul.f32 %v1239, %v1257
    %vm1259 = vcmp.eq.f32.partialorder %v1239, inf
    %v1260 = vsel %vm1259, %v1239, %v1258
    %vm1261 = vcmp.eq.f32.partialorder %v1239, 0.0
    %v1262 = vand.u32 %v1239, 2147483648
    %v1263 = vsel %vm1261, %v1262, %v1260
    %v1264 = vadd.f32 %v1251, 1e-06
    %v1265 = vadd.f32 %v1263, 1e-06
    %v1266 = vrcp.pop %v1264
    %v1267 = vmul.f32 %v1264, %v1266
    %v1268 = vsub.f32 1.0, %v1267
    %v1269 = vmul.f32 %v1266, %v1268
    %v1270 = vadd.f32 %v1266, %v1269
    %vm1271 = vweird.f32 %v1264
    %vm1272 = vweird.f32 %v1266
    %vm1273 = vmor %vm1271, %vm1272
    %v1274 = vsel %vm1273, %v1266, %v1270
    %v1275 = vand.u32 2147483647, %v1264
    %vm1276 = vcmp.eq.f32.partialorder %v1275, 8.507059e+37
    %v1277 = vand.u32 %v1264, 2147483648
    %v1278 = vor.u32 1.1754944e-38, %v1277
    %v1279 = vsel %vm1276, %v1278, %v1274
    %v1280 = vmul.f32 1.0, %v1279
    %v1281 = vrcp.pop %v1265
    %v1282 = vmul.f32 %v1265, %v1281
    %v1283 = vsub.f32 1.0, %v1282
    %v1284 = vmul.f32 %v1281, %v1283
    %v1285 = vadd.f32 %v1281, %v1284
    %vm1286 = vweird.f32 %v1265
    %vm1287 = vweird.f32 %v1281
    %vm1288 = vmor %vm1286, %vm1287
    %v1289 = vsel %vm1288, %v1281, %v1285
    %v1290 = vand.u32 2147483647, %v1265
    %vm1291 = vcmp.eq.f32.partialorder %v1290, 8.507059e+37
    %v1292 = vand.u32 %v1265, 2147483648
    %v1293 = vor.u32 1.1754944e-38, %v1292
    %v1294 = vsel %vm1291, %v1293, %v1289
    %v1295 = vmul.f32 1.0, %v1294
    %v1296 = vmul.f32 %v1228, %v1280
    %v1297 = vmul.f32 %v1229, %v1295
    %v1298 = vperm.slane %v1218, 0
    %v1299 = vmul.f32 %v1298, %v1296
    %v1300 = vmul.f32 %v1298, %v1297
    %v1301 = vperm.slane %v1219, 0
    %v1302 = vadd.f32 %v1299, %v1301
    %v1303 = vadd.f32 %v1300, %v1301
    %v1304 = vld [vmem:[%s4 + $0x40] sm:$0xff]
    %v1305 = vld [vmem:[%s4 + $0x48] sm:$0xff]
    %v1306 = vld [vmem:[%s4 + $0x50] sm:$0xff]
    %v1307 = vld [vmem:[%s4 + $0x58] sm:$0xff]
    %v1308 = vld [vmem:[%s4 + $0xa8] sm:$0x1]
    %v1309 = vperm.slane %v1308, 0
    %v1311 = vsel %vm304, %v1302, 0
    %v1314 = vsel %vm304, %v1303, 0
    %1316 = vmatpush.msra.mxu0 0.0
    %1317 = vmatpush.msra.mxu0 0.0
    %1318 = vmatpush.msra.mxu0 0.0
    %1319 = vmatpush.msra.mxu0 0.0
    %1320 = vmatpush.msra.mxu0 0.0
    %1321 = vmatpush.msra.mxu0 0.0
    %1322 = vmatpush.msra.mxu0 0.0
    %1323 = vmatpush.msra.mxu0 0.0
    %1324 = vmatpush.msra.mxu0 0.0
    %1325 = vmatpush.msra.mxu0 0.0
    %1326 = vmatpush.msra.mxu0 0.0
    %1327 = vmatpush.msra.mxu0 0.0
    %1328 = vmatpush.msra.mxu0 %v1307
    %1329 = vmatpush.msra.mxu0 %v1306
    %1330 = vmatpush.msra.mxu0 %v1305
    %1331 = vmatpush.msra.mxu0 %v1304
    %1332 = vmatmul.f32.gmra.mxu0 %v1311
    %v1333 = vpop.f32.mrf.mxu0
    %v1334 = vadd.f32 %v1309, %v1333
    %1335 = vmatmul.f32.gmra.mxu0 %v1314
    %v1336 = vpop.f32.mrf.mxu0
    %v1337 = vadd.f32 %v1309, %v1336
    %1338 = vdwg.mxu0
    %v1339 = vmax.f32 %v1334, 0.0
    %v1340 = vmax.f32 %v1337, 0.0
    %v1341 = vld [vmem:[%s4 + $0x60] sm:$0xff]
    %v1342 = vld [vmem:[%s4 + $0x68] sm:$0xff]
    %v1343 = vld [vmem:[%s4 + $0x70] sm:$0xff]
    %v1344 = vld [vmem:[%s4 + $0x78] sm:$0xff]
    %v1345 = vld [vmem:[%s4 + $0x80] sm:$0xff]
    %v1346 = vld [vmem:[%s4 + $0x88] sm:$0xff]
    %v1347 = vld [vmem:[%s4 + $0x90] sm:$0xff]
    %v1348 = vld [vmem:[%s4 + $0x98] sm:$0xff]
    %v1350 = vsel %vm654, %v1339, 0
    %v1353 = vsel %vm654, %v1340, 0
    %1355 = vmatpush.msra.mxu0 0.0
    %1356 = vmatpush.msra.mxu0 0.0
    %1357 = vmatpush.msra.mxu0 0.0
    %1358 = vmatpush.msra.mxu0 0.0
    %1359 = vmatpush.msra.mxu0 0.0
    %1360 = vmatpush.msra.mxu0 0.0
    %1361 = vmatpush.msra.mxu0 0.0
    %1362 = vmatpush.msra.mxu0 0.0
    %1363 = vmatpush.msra.mxu0 %v1348
    %1364 = vmatpush.msra.mxu0 %v1347
    %1365 = vmatpush.msra.mxu0 %v1346
    %1366 = vmatpush.msra.mxu0 %v1345
    %1367 = vmatpush.msra.mxu0 %v1344
    %1368 = vmatpush.msra.mxu0 %v1343
    %1369 = vmatpush.msra.mxu0 %v1342
    %1370 = vmatpush.msra.mxu0 %v1341
    %1371 = vmatmul.f32.gmra.mxu0 %v1350
    %v1372 = vpop.f32.mrf.mxu0
    %v1373 = vadd.f32 0.0, %v1372
    %1374 = vmatmul.f32.gmra.mxu0 %v1353
    %v1375 = vpop.f32.mrf.mxu0
    %v1376 = vadd.f32 0.0, %v1375
    %1377 = vdwg.mxu0
    %v1378 = vadd.f32 %v1216, %v1373
    %v1379 = vadd.f32 %v1217, %v1376
    %v1380 = vld [vmem:[%s4 + $0xa9] sm:$0x1]
    %v1381 = vperm.slane %v1380, 0
    %v1382 = vadd.f32 %v1378, %v1381
    %v1383 = vadd.f32 %v1379, %v1381
    %v1384 = vld [vmem:[%s4 + $0x15a] sm:$0x1]
    %v1385 = vld [vmem:[%s4 + $0x15b] sm:$0x1]
    %v1386 = vsel %vm304, %v1382, 0.0
    %1387 = vadd.xlane.f32.xlu0 %v1386
    %v1388 = vpop.xlane.xlu0 %1387
    %v1389 = vsel %vm304, %v1383, 0.0
    %1390 = vadd.xlane.f32.xlu0 %v1389
    %v1391 = vpop.xlane.xlu0 %1390
    %v1392 = vmul.f32 %v1388, %v392
    %v1393 = vmul.f32 %v1391, %v392
    %v1394 = vsub.f32 %v1382, %v1392
    %v1395 = vsub.f32 %v1383, %v1393
    %v1396 = vmul.f32 %v1394, %v1394
    %v1397 = vmul.f32 %v1395, %v1395
    %v1398 = vsel %vm304, %v1396, 0.0
    %1399 = vadd.xlane.f32.xlu0 %v1398
    %v1400 = vpop.xlane.xlu0 %1399
    %v1401 = vsel %vm304, %v1397, 0.0
    %1402 = vadd.xlane.f32.xlu0 %v1401
    %v1403 = vpop.xlane.xlu0 %1402
    %v1404 = vmul.f32 %v1400, 0.032258064
    %v1405 = vmul.f32 %v1403, 0.032258064
    %v1406 = vrsqrt.pop %v1404
    %v1407 = vmul.f32 %v1406, %v1404
    %v1408 = vmul.f32 %v1407, %v1406
    %v1409 = vmul.f32 0.5, %v1408
    %v1410 = vsub.f32 1.5, %v1409
    %v1411 = vmul.f32 %v1406, %v1410
    %v1412 = vmul.f32 %v1404, %v1411
    %vm1413 = vcmp.eq.f32.partialorder %v1404, inf
    %v1414 = vsel %vm1413, %v1404, %v1412
    %vm1415 = vcmp.eq.f32.partialorder %v1404, 0.0
    %v1416 = vand.u32 %v1404, 2147483648
    %v1417 = vsel %vm1415, %v1416, %v1414
    %v1418 = vrsqrt.pop %v1405
    %v1419 = vmul.f32 %v1418, %v1405
    %v1420 = vmul.f32 %v1419, %v1418
    %v1421 = vmul.f32 0.5, %v1420
    %v1422 = vsub.f32 1.5, %v1421
    %v1423 = vmul.f32 %v1418, %v1422
    %v1424 = vmul.f32 %v1405, %v1423
    %vm1425 = vcmp.eq.f32.partialorder %v1405, inf
    %v1426 = vsel %vm1425, %v1405, %v1424
    %vm1427 = vcmp.eq.f32.partialorder %v1405, 0.0
    %v1428 = vand.u32 %v1405, 2147483648
    %v1429 = vsel %vm1427, %v1428, %v1426
    %v1430 = vadd.f32 %v1417, 1e-06
    %v1431 = vadd.f32 %v1429, 1e-06
    %v1432 = vrcp.pop %v1430
    %v1433 = vmul.f32 %v1430, %v1432
    %v1434 = vsub.f32 1.0, %v1433
    %v1435 = vmul.f32 %v1432, %v1434
    %v1436 = vadd.f32 %v1432, %v1435
    %vm1437 = vweird.f32 %v1430
    %vm1438 = vweird.f32 %v1432
    %vm1439 = vmor %vm1437, %vm1438
    %v1440 = vsel %vm1439, %v1432, %v1436
    %v1441 = vand.u32 2147483647, %v1430
    %vm1442 = vcmp.eq.f32.partialorder %v1441, 8.507059e+37
    %v1443 = vand.u32 %v1430, 2147483648
    %v1444 = vor.u32 1.1754944e-38, %v1443
    %v1445 = vsel %vm1442, %v1444, %v1440
    %v1446 = vmul.f32 1.0, %v1445
    %v1447 = vrcp.pop %v1431
    %v1448 = vmul.f32 %v1431, %v1447
    %v1449 = vsub.f32 1.0, %v1448
    %v1450 = vmul.f32 %v1447, %v1449
    %v1451 = vadd.f32 %v1447, %v1450
    %vm1452 = vweird.f32 %v1431
    %vm1453 = vweird.f32 %v1447
    %vm1454 = vmor %vm1452, %vm1453
    %v1455 = vsel %vm1454, %v1447, %v1451
    %v1456 = vand.u32 2147483647, %v1431
    %vm1457 = vcmp.eq.f32.partialorder %v1456, 8.507059e+37
    %v1458 = vand.u32 %v1431, 2147483648
    %v1459 = vor.u32 1.1754944e-38, %v1458
    %v1460 = vsel %vm1457, %v1459, %v1455
    %v1461 = vmul.f32 1.0, %v1460
    %v1462 = vmul.f32 %v1394, %v1446
    %v1463 = vmul.f32 %v1395, %v1461
    %v1464 = vperm.slane %v1384, 0
    %v1465 = vmul.f32 %v1464, %v1462
    %v1466 = vmul.f32 %v1464, %v1463
    %v1467 = vperm.slane %v1385, 0
    %v1468 = vadd.f32 %v1465, %v1467
    %v1469 = vadd.f32 %v1466, %v1467
    %v1470 = vld [vmem:[%s4 + $0xb0] sm:$0xff]
    %v1471 = vld [vmem:[%s4 + $0xb8] sm:$0xff]
    %v1472 = vld [vmem:[%s4 + $0xc0] sm:$0xff]
    %v1473 = vld [vmem:[%s4 + $0xc8] sm:$0xff]
    %v1474 = vld [vmem:[%s4 + $0x150] sm:$0x1]
    %v1475 = vperm.slane %v1474, 0
    %v1477 = vsel %vm304, %v1468, 0
    %v1480 = vsel %vm304, %v1469, 0
    %1482 = vmatpush.msra.mxu0 0.0
    %1483 = vmatpush.msra.mxu0 0.0
    %1484 = vmatpush.msra.mxu0 0.0
    %1485 = vmatpush.msra.mxu0 0.0
    %1486 = vmatpush.msra.mxu0 0.0
    %1487 = vmatpush.msra.mxu0 0.0
    %1488 = vmatpush.msra.mxu0 0.0
    %1489 = vmatpush.msra.mxu0 0.0
    %1490 = vmatpush.msra.mxu0 0.0
    %1491 = vmatpush.msra.mxu0 0.0
    %1492 = vmatpush.msra.mxu0 0.0
    %1493 = vmatpush.msra.mxu0 0.0
    %1494 = vmatpush.msra.mxu0 %v1473
    %1495 = vmatpush.msra.mxu0 %v1472
    %1496 = vmatpush.msra.mxu0 %v1471
    %1497 = vmatpush.msra.mxu0 %v1470
    %1498 = vmatmul.f32.gmra.mxu0 %v1477
    %v1499 = vpop.f32.mrf.mxu0
    %v1500 = vadd.f32 %v1475, %v1499
    %1501 = vmatmul.f32.gmra.mxu0 %v1480
    %v1502 = vpop.f32.mrf.mxu0
    %v1503 = vadd.f32 %v1475, %v1502
    %1504 = vdwg.mxu0
    %v1505 = vld [vmem:[%s4 + $0x151] sm:$0x1]
    %v1506 = vperm.slane %v1505, 0
    %1511 = vrot.lane.b32.xlu0 %v1470, 96
    %v1512 = vpop.permute.xlu0 %1511
    %1513 = vrot.lane.b32.xlu0 %v1471, 96
    %v1514 = vpop.permute.xlu0 %1513
    %1515 = vrot.lane.b32.xlu0 %v1472, 96
    %v1516 = vpop.permute.xlu0 %1515
    %1517 = vrot.lane.b32.xlu0 %v1473, 96
    %v1518 = vpop.permute.xlu0 %1517
    %1523 = vmatpush.msra.mxu0 0.0
    %1524 = vmatpush.msra.mxu0 0.0
    %1525 = vmatpush.msra.mxu0 0.0
    %1526 = vmatpush.msra.mxu0 0.0
    %1527 = vmatpush.msra.mxu0 0.0
    %1528 = vmatpush.msra.mxu0 0.0
    %1529 = vmatpush.msra.mxu0 0.0
    %1530 = vmatpush.msra.mxu0 0.0
    %1531 = vmatpush.msra.mxu0 0.0
    %1532 = vmatpush.msra.mxu0 0.0
    %1533 = vmatpush.msra.mxu0 0.0
    %1534 = vmatpush.msra.mxu0 0.0
    %1535 = vmatpush.msra.mxu0 %v1518
    %1536 = vmatpush.msra.mxu0 %v1516
    %1537 = vmatpush.msra.mxu0 %v1514
    %1538 = vmatpush.msra.mxu0 %v1512
    %1539 = vmatmul.f32.gmra.mxu0 %v1477
    %v1540 = vpop.f32.mrf.mxu0
    %v1541 = vadd.f32 %v1506, %v1540
    %1542 = vmatmul.f32.gmra.mxu0 %v1480
    %v1543 = vpop.f32.mrf.mxu0
    %v1544 = vadd.f32 %v1506, %v1543
    %1545 = vdwg.mxu0
    %v1546 = vld [vmem:[%s4 + $0x152] sm:$0x1]
    %v1547 = vperm.slane %v1546, 0
    %1548 = vrot.lane.b32.xlu0 %v1470, 64
    %v1549 = vpop.permute.xlu0 %1548
    %1550 = vrot.lane.b32.xlu0 %v1471, 64
    %v1551 = vpop.permute.xlu0 %1550
    %1552 = vrot.lane.b32.xlu0 %v1472, 64
    %v1553 = vpop.permute.xlu0 %1552
    %1554 = vrot.lane.b32.xlu0 %v1473, 64
    %v1555 = vpop.permute.xlu0 %1554
    %1560 = vmatpush.msra.mxu0 0.0
    %1561 = vmatpush.msra.mxu0 0.0
    %1562 = vmatpush.msra.mxu0 0.0
    %1563 = vmatpush.msra.mxu0 0.0
    %1564 = vmatpush.msra.mxu0 0.0
    %1565 = vmatpush.msra.mxu0 0.0
    %1566 = vmatpush.msra.mxu0 0.0
    %1567 = vmatpush.msra.mxu0 0.0
    %1568 = vmatpush.msra.mxu0 0.0
    %1569 = vmatpush.msra.mxu0 0.0
    %1570 = vmatpush.msra.mxu0 0.0
    %1571 = vmatpush.msra.mxu0 0.0
    %1572 = vmatpush.msra.mxu0 %v1555
    %1573 = vmatpush.msra.mxu0 %v1553
    %1574 = vmatpush.msra.mxu0 %v1551
    %1575 = vmatpush.msra.mxu0 %v1549
    %1576 = vmatmul.f32.gmra.mxu0 %v1477
    %v1577 = vpop.f32.mrf.mxu0
    %v1578 = vadd.f32 %v1547, %v1577
    %1579 = vmatmul.f32.gmra.mxu0 %v1480
    %v1580 = vpop.f32.mrf.mxu0
    %v1581 = vadd.f32 %v1547, %v1580
    %1582 = vdwg.mxu0
    %v1583 = vld [vmem:[%s4 + $0x153] sm:$0x1]
    %v1584 = vmul.f32 %v1541, %v296
    %v1585 = vmul.f32 %v1544, %v297
    %v1586 = vmul.f32 %v1541, %v298
    %v1587 = vmul.f32 %v1544, %v299
    %v1588 = vmul.f32 %v1541, %v300
    %v1589 = vmul.f32 %v1544, %v301
    %v1590 = vmul.f32 %v1541, %v302
    %v1591 = vmul.f32 %v1544, %v303
    %v1592 = vmul.f32 %v1578, %v296
    %v1593 = vmul.f32 %v1581, %v297
    %v1594 = vmul.f32 %v1578, %v298
    %v1595 = vmul.f32 %v1581, %v299
    %v1596 = vmul.f32 %v1578, %v300
    %v1597 = vmul.f32 %v1581, %v301
    %v1598 = vmul.f32 %v1578, %v302
    %v1599 = vmul.f32 %v1581, %v303
    %v1601 = vsel %vm304, %v1500, 0
    %v1604 = vsel %vm304, %v1503, 0
    %v1607 = vsel %vm304, %v1584, 0
    %v1610 = vsel %vm304, %v1585, 0
    %v1613 = vsel %vm304, %v1586, 0
    %v1616 = vsel %vm304, %v1587, 0
    %v1619 = vsel %vm304, %v1588, 0
    %v1622 = vsel %vm304, %v1589, 0
    %v1625 = vsel %vm304, %v1590, 0
    %v1628 = vsel %vm304, %v1591, 0
    %1630 = vmatpush.xpose.msra.mxu0 0.0
    %1631 = vmatpush.xpose.msra.mxu0 0.0
    %1632 = vmatpush.xpose.msra.mxu0 0.0
    %1633 = vmatpush.xpose.msra.mxu0 0.0
    %1634 = vmatpush.xpose.msra.mxu0 0.0
    %1635 = vmatpush.xpose.msra.mxu0 0.0
    %1636 = vmatpush.xpose.msra.mxu0 0.0
    %1637 = vmatpush.xpose.msra.mxu0 0.0
    %1638 = vmatpush.xpose.msra.mxu0 %v1628
    %1639 = vmatpush.xpose.msra.mxu0 %v1625
    %1640 = vmatpush.xpose.msra.mxu0 %v1622
    %1641 = vmatpush.xpose.msra.mxu0 %v1619
    %1642 = vmatpush.xpose.msra.mxu0 %v1616
    %1643 = vmatpush.xpose.msra.mxu0 %v1613
    %1644 = vmatpush.xpose.msra.mxu0 %v1610
    %1645 = vmatpush.xpose.msra.mxu0 %v1607
    %1646 = vmatmul.f32.gmra.mxu0 %v1601
    %v1647 = vpop.f32.mrf.mxu0
    %v1648 = vadd.f32 %v25, %v1647
    %1649 = vmatmul.f32.gmra.mxu0 %v1604
    %v1650 = vpop.f32.mrf.mxu0
    %v1651 = vadd.f32 %v26, %v1650
    %1652 = vdwg.mxu0
    %v1653 = vsel %vm654, %v1648, -inf
    %1654 = vmax.xlane.f32.xlu0 %v1653
    %v1655 = vpop.xlane.xlu0 %1654
    %v1656 = vsel %vm654, %v1651, -inf
    %1657 = vmax.xlane.f32.xlu0 %v1656
    %v1658 = vpop.xlane.xlu0 %1657
    %v1659 = vsub.f32 %v1648, %v1655
    %v1660 = vsub.f32 %v1651, %v1658
    %v1661 = vmul.f32 %v1659, 1.442695
    %v1662 = vpow.pop %v1661
    %v1663 = vmul.f32 %v1660, 1.442695
    %v1664 = vpow.pop %v1663
    %v1666 = vsel %vm654, %v1662, 0
    %v1669 = vsel %vm654, %v1664, 0
    %1671 = vmatpush.msra.mxu0 0.0
    %1672 = vmatpush.msra.mxu0 0.0
    %1673 = vmatpush.msra.mxu0 0.0
    %1674 = vmatpush.msra.mxu0 0.0
    %1675 = vmatpush.msra.mxu0 0.0
    %1676 = vmatpush.msra.mxu0 0.0
    %1677 = vmatpush.msra.mxu0 0.0
    %1678 = vmatpush.msra.mxu0 0.0
    %1679 = vmatpush.msra.mxu0 %v377
    %1680 = vmatpush.msra.mxu0 %v376
    %1681 = vmatpush.msra.mxu0 %v375
    %1682 = vmatpush.msra.mxu0 %v374
    %1683 = vmatpush.msra.mxu0 %v373
    %1684 = vmatpush.msra.mxu0 %v372
    %1685 = vmatpush.msra.mxu0 %v371
    %1686 = vmatpush.msra.mxu0 %v370
    %1687 = vmatmul.f32.gmra.mxu0 %v1666
    %v1688 = vpop.f32.mrf.mxu0
    %v1689 = vadd.f32 0.0, %v1688
    %1690 = vmatmul.f32.gmra.mxu0 %v1669
    %v1691 = vpop.f32.mrf.mxu0
    %v1692 = vadd.f32 0.0, %v1691
    %1693 = vdwg.mxu0
    %v1694 = vrcp.pop %v1689
    %v1695 = vmul.f32 %v1689, %v1694
    %v1696 = vsub.f32 1.0, %v1695
    %v1697 = vmul.f32 %v1694, %v1696
    %v1698 = vadd.f32 %v1694, %v1697
    %vm1699 = vweird.f32 %v1689
    %vm1700 = vweird.f32 %v1694
    %vm1701 = vmor %vm1699, %vm1700
    %v1702 = vsel %vm1701, %v1694, %v1698
    %v1703 = vand.u32 2147483647, %v1689
    %vm1704 = vcmp.eq.f32.partialorder %v1703, 8.507059e+37
    %v1705 = vand.u32 %v1689, 2147483648
    %v1706 = vor.u32 1.1754944e-38, %v1705
    %v1707 = vsel %vm1704, %v1706, %v1702
    %v1708 = vmul.f32 %v1662, %v1707
    %v1709 = vrcp.pop %v1692
    %v1710 = vmul.f32 %v1692, %v1709
    %v1711 = vsub.f32 1.0, %v1710
    %v1712 = vmul.f32 %v1709, %v1711
    %v1713 = vadd.f32 %v1709, %v1712
    %vm1714 = vweird.f32 %v1692
    %vm1715 = vweird.f32 %v1709
    %vm1716 = vmor %vm1714, %vm1715
    %v1717 = vsel %vm1716, %v1709, %v1713
    %v1718 = vand.u32 2147483647, %v1692
    %vm1719 = vcmp.eq.f32.partialorder %v1718, 8.507059e+37
    %v1720 = vand.u32 %v1692, 2147483648
    %v1721 = vor.u32 1.1754944e-38, %v1720
    %v1722 = vsel %vm1719, %v1721, %v1717
    %v1723 = vmul.f32 %v1664, %v1722
    %v1725 = vsel %vm654, %v1708, 0
    %v1728 = vsel %vm654, %v1723, 0
    %1730 = vmatpush.msra.mxu0 0.0
    %1731 = vmatpush.msra.mxu0 0.0
    %1732 = vmatpush.msra.mxu0 0.0
    %1733 = vmatpush.msra.mxu0 0.0
    %1734 = vmatpush.msra.mxu0 0.0
    %1735 = vmatpush.msra.mxu0 0.0
    %1736 = vmatpush.msra.mxu0 0.0
    %1737 = vmatpush.msra.mxu0 0.0
    %1738 = vmatpush.msra.mxu0 %v1599
    %1739 = vmatpush.msra.mxu0 %v1598
    %1740 = vmatpush.msra.mxu0 %v1597
    %1741 = vmatpush.msra.mxu0 %v1596
    %1742 = vmatpush.msra.mxu0 %v1595
    %1743 = vmatpush.msra.mxu0 %v1594
    %1744 = vmatpush.msra.mxu0 %v1593
    %1745 = vmatpush.msra.mxu0 %v1592
    %1746 = vmatmul.f32.gmra.mxu0 %v1725
    %v1747 = vpop.f32.mrf.mxu0
    %v1748 = vadd.f32 0.0, %v1747
    %1749 = vmatmul.f32.gmra.mxu0 %v1728
    %v1750 = vpop.f32.mrf.mxu0
    %v1751 = vadd.f32 0.0, %v1750
    %1752 = vdwg.mxu0
    %v1753 = vperm.slane %v1583, 0
    %1754 = vrot.lane.b32.xlu0 %v1470, 32
    %v1755 = vpop.permute.xlu0 %1754
    %1756 = vrot.lane.b32.xlu0 %v1471, 32
    %v1757 = vpop.permute.xlu0 %1756
    %1758 = vrot.lane.b32.xlu0 %v1472, 32
    %v1759 = vpop.permute.xlu0 %1758
    %1760 = vrot.lane.b32.xlu0 %v1473, 32
    %v1761 = vpop.permute.xlu0 %1760
    %v1767 = vsel %vm304, %v1748, 0
    %v1770 = vsel %vm304, %v1751, 0
    %1772 = vmatpush.msra.mxu0 0.0
    %1773 = vmatpush.msra.mxu0 0.0
    %1774 = vmatpush.msra.mxu0 0.0
    %1775 = vmatpush.msra.mxu0 0.0
    %1776 = vmatpush.msra.mxu0 0.0
    %1777 = vmatpush.msra.mxu0 0.0
    %1778 = vmatpush.msra.mxu0 0.0
    %1779 = vmatpush.msra.mxu0 0.0
    %1780 = vmatpush.msra.mxu0 0.0
    %1781 = vmatpush.msra.mxu0 0.0
    %1782 = vmatpush.msra.mxu0 0.0
    %1783 = vmatpush.msra.mxu0 0.0
    %1784 = vmatpush.msra.mxu0 %v1761
    %1785 = vmatpush.msra.mxu0 %v1759
    %1786 = vmatpush.msra.mxu0 %v1757
    %1787 = vmatpush.msra.mxu0 %v1755
    %1788 = vmatmul.f32.gmra.mxu0 %v1767
    %v1789 = vpop.f32.mrf.mxu0
    %v1790 = vadd.f32 %v1753, %v1789
    %1791 = vmatmul.f32.gmra.mxu0 %v1770
    %v1792 = vpop.f32.mrf.mxu0
    %v1793 = vadd.f32 %v1753, %v1792
    %1794 = vdwg.mxu0
    %v1795 = vadd.f32 %v1382, %v1790
    %v1796 = vadd.f32 %v1383, %v1793
    %v1797 = vld [vmem:[%s4 + $0x15c] sm:$0x1]
    %v1798 = vld [vmem:[%s4 + $0x15d] sm:$0x1]
    %v1799 = vsel %vm304, %v1795, 0.0
    %1800 = vadd.xlane.f32.xlu0 %v1799
    %v1801 = vpop.xlane.xlu0 %1800
    %v1802 = vsel %vm304, %v1796, 0.0
    %1803 = vadd.xlane.f32.xlu0 %v1802
    %v1804 = vpop.xlane.xlu0 %1803
    %v1805 = vmul.f32 %v1801, %v392
    %v1806 = vmul.f32 %v1804, %v392
    %v1807 = vsub.f32 %v1795, %v1805
    %v1808 = vsub.f32 %v1796, %v1806
    %v1809 = vmul.f32 %v1807, %v1807
    %v1810 = vmul.f32 %v1808, %v1808
    %v1811 = vsel %vm304, %v1809, 0.0
    %1812 = vadd.xlane.f32.xlu0 %v1811
    %v1813 = vpop.xlane.xlu0 %1812
    %v1814 = vsel %vm304, %v1810, 0.0
    %1815 = vadd.xlane.f32.xlu0 %v1814
    %v1816 = vpop.xlane.xlu0 %1815
    %v1817 = vmul.f32 %v1813, 0.032258064
    %v1818 = vmul.f32 %v1816, 0.032258064
    %v1819 = vrsqrt.pop %v1817
    %v1820 = vmul.f32 %v1819, %v1817
    %v1821 = vmul.f32 %v1820, %v1819
    %v1822 = vmul.f32 0.5, %v1821
    %v1823 = vsub.f32 1.5, %v1822
    %v1824 = vmul.f32 %v1819, %v1823
    %v1825 = vmul.f32 %v1817, %v1824
    %vm1826 = vcmp.eq.f32.partialorder %v1817, inf
    %v1827 = vsel %vm1826, %v1817, %v1825
    %vm1828 = vcmp.eq.f32.partialorder %v1817, 0.0
    %v1829 = vand.u32 %v1817, 2147483648
    %v1830 = vsel %vm1828, %v1829, %v1827
    %v1831 = vrsqrt.pop %v1818
    %v1832 = vmul.f32 %v1831, %v1818
    %v1833 = vmul.f32 %v1832, %v1831
    %v1834 = vmul.f32 0.5, %v1833
    %v1835 = vsub.f32 1.5, %v1834
    %v1836 = vmul.f32 %v1831, %v1835
    %v1837 = vmul.f32 %v1818, %v1836
    %vm1838 = vcmp.eq.f32.partialorder %v1818, inf
    %v1839 = vsel %vm1838, %v1818, %v1837
    %vm1840 = vcmp.eq.f32.partialorder %v1818, 0.0
    %v1841 = vand.u32 %v1818, 2147483648
    %v1842 = vsel %vm1840, %v1841, %v1839
    %v1843 = vadd.f32 %v1830, 1e-06
    %v1844 = vadd.f32 %v1842, 1e-06
    %v1845 = vrcp.pop %v1843
    %v1846 = vmul.f32 %v1843, %v1845
    %v1847 = vsub.f32 1.0, %v1846
    %v1848 = vmul.f32 %v1845, %v1847
    %v1849 = vadd.f32 %v1845, %v1848
    %vm1850 = vweird.f32 %v1843
    %vm1851 = vweird.f32 %v1845
    %vm1852 = vmor %vm1850, %vm1851
    %v1853 = vsel %vm1852, %v1845, %v1849
    %v1854 = vand.u32 2147483647, %v1843
    %vm1855 = vcmp.eq.f32.partialorder %v1854, 8.507059e+37
    %v1856 = vand.u32 %v1843, 2147483648
    %v1857 = vor.u32 1.1754944e-38, %v1856
    %v1858 = vsel %vm1855, %v1857, %v1853
    %v1859 = vmul.f32 1.0, %v1858
    %v1860 = vrcp.pop %v1844
    %v1861 = vmul.f32 %v1844, %v1860
    %v1862 = vsub.f32 1.0, %v1861
    %v1863 = vmul.f32 %v1860, %v1862
    %v1864 = vadd.f32 %v1860, %v1863
    %vm1865 = vweird.f32 %v1844
    %vm1866 = vweird.f32 %v1860
    %vm1867 = vmor %vm1865, %vm1866
    %v1868 = vsel %vm1867, %v1860, %v1864
    %v1869 = vand.u32 2147483647, %v1844
    %vm1870 = vcmp.eq.f32.partialorder %v1869, 8.507059e+37
    %v1871 = vand.u32 %v1844, 2147483648
    %v1872 = vor.u32 1.1754944e-38, %v1871
    %v1873 = vsel %vm1870, %v1872, %v1868
    %v1874 = vmul.f32 1.0, %v1873
    %v1875 = vmul.f32 %v1807, %v1859
    %v1876 = vmul.f32 %v1808, %v1874
    %v1877 = vperm.slane %v1797, 0
    %v1878 = vmul.f32 %v1877, %v1875
    %v1879 = vmul.f32 %v1877, %v1876
    %v1880 = vperm.slane %v1798, 0
    %v1881 = vadd.f32 %v1878, %v1880
    %v1882 = vadd.f32 %v1879, %v1880
    %v1883 = vld [vmem:[%s4 + $0xd0] sm:$0xff]
    %v1884 = vld [vmem:[%s4 + $0xd8] sm:$0xff]
    %v1885 = vld [vmem:[%s4 + $0xe0] sm:$0xff]
    %v1886 = vld [vmem:[%s4 + $0xe8] sm:$0xff]
    %v1887 = vld [vmem:[%s4 + $0x154] sm:$0x1]
    %v1888 = vperm.slane %v1887, 0
    %v1890 = vsel %vm304, %v1881, 0
    %v1893 = vsel %vm304, %v1882, 0
    %1895 = vmatpush.msra.mxu0 0.0
    %1896 = vmatpush.msra.mxu0 0.0
    %1897 = vmatpush.msra.mxu0 0.0
    %1898 = vmatpush.msra.mxu0 0.0
    %1899 = vmatpush.msra.mxu0 0.0
    %1900 = vmatpush.msra.mxu0 0.0
    %1901 = vmatpush.msra.mxu0 0.0
    %1902 = vmatpush.msra.mxu0 0.0
    %1903 = vmatpush.msra.mxu0 0.0
    %1904 = vmatpush.msra.mxu0 0.0
    %1905 = vmatpush.msra.mxu0 0.0
    %1906 = vmatpush.msra.mxu0 0.0
    %1907 = vmatpush.msra.mxu0 %v1886
    %1908 = vmatpush.msra.mxu0 %v1885
    %1909 = vmatpush.msra.mxu0 %v1884
    %1910 = vmatpush.msra.mxu0 %v1883
    %1911 = vmatmul.f32.gmra.mxu0 %v1890
    %v1912 = vpop.f32.mrf.mxu0
    %v1913 = vadd.f32 %v1888, %v1912
    %1914 = vmatmul.f32.gmra.mxu0 %v1893
    %v1915 = vpop.f32.mrf.mxu0
    %v1916 = vadd.f32 %v1888, %v1915
    %1917 = vdwg.mxu0
    %v1918 = vld [vmem:[%s4 + $0x155] sm:$0x1]
    %v1919 = vperm.slane %v1918, 0
    %1924 = vrot.lane.b32.xlu0 %v1883, 96
    %v1925 = vpop.permute.xlu0 %1924
    %1926 = vrot.lane.b32.xlu0 %v1884, 96
    %v1927 = vpop.permute.xlu0 %1926
    %1928 = vrot.lane.b32.xlu0 %v1885, 96
    %v1929 = vpop.permute.xlu0 %1928
    %1930 = vrot.lane.b32.xlu0 %v1886, 96
    %v1931 = vpop.permute.xlu0 %1930
    %1936 = vmatpush.msra.mxu0 0.0
    %1937 = vmatpush.msra.mxu0 0.0
    %1938 = vmatpush.msra.mxu0 0.0
    %1939 = vmatpush.msra.mxu0 0.0
    %1940 = vmatpush.msra.mxu0 0.0
    %1941 = vmatpush.msra.mxu0 0.0
    %1942 = vmatpush.msra.mxu0 0.0
    %1943 = vmatpush.msra.mxu0 0.0
    %1944 = vmatpush.msra.mxu0 0.0
    %1945 = vmatpush.msra.mxu0 0.0
    %1946 = vmatpush.msra.mxu0 0.0
    %1947 = vmatpush.msra.mxu0 0.0
    %1948 = vmatpush.msra.mxu0 %v1931
    %1949 = vmatpush.msra.mxu0 %v1929
    %1950 = vmatpush.msra.mxu0 %v1927
    %1951 = vmatpush.msra.mxu0 %v1925
    %1952 = vmatmul.f32.gmra.mxu0 %v939
    %v1953 = vpop.f32.mrf.mxu0
    %v1954 = vadd.f32 %v1919, %v1953
    %1955 = vmatmul.f32.gmra.mxu0 %v942
    %v1956 = vpop.f32.mrf.mxu0
    %v1957 = vadd.f32 %v1919, %v1956
    %1958 = vdwg.mxu0
    %v1959 = vld [vmem:[%s4 + $0x156] sm:$0x1]
    %v1960 = vperm.slane %v1959, 0
    %1961 = vrot.lane.b32.xlu0 %v1883, 64
    %v1962 = vpop.permute.xlu0 %1961
    %1963 = vrot.lane.b32.xlu0 %v1884, 64
    %v1964 = vpop.permute.xlu0 %1963
    %1965 = vrot.lane.b32.xlu0 %v1885, 64
    %v1966 = vpop.permute.xlu0 %1965
    %1967 = vrot.lane.b32.xlu0 %v1886, 64
    %v1968 = vpop.permute.xlu0 %1967
    %1973 = vmatpush.msra.mxu0 0.0
    %1974 = vmatpush.msra.mxu0 0.0
    %1975 = vmatpush.msra.mxu0 0.0
    %1976 = vmatpush.msra.mxu0 0.0
    %1977 = vmatpush.msra.mxu0 0.0
    %1978 = vmatpush.msra.mxu0 0.0
    %1979 = vmatpush.msra.mxu0 0.0
    %1980 = vmatpush.msra.mxu0 0.0
    %1981 = vmatpush.msra.mxu0 0.0
    %1982 = vmatpush.msra.mxu0 0.0
    %1983 = vmatpush.msra.mxu0 0.0
    %1984 = vmatpush.msra.mxu0 0.0
    %1985 = vmatpush.msra.mxu0 %v1968
    %1986 = vmatpush.msra.mxu0 %v1966
    %1987 = vmatpush.msra.mxu0 %v1964
    %1988 = vmatpush.msra.mxu0 %v1962
    %1989 = vmatmul.f32.gmra.mxu0 %v939
    %v1990 = vpop.f32.mrf.mxu0
    %v1991 = vadd.f32 %v1960, %v1990
    %1992 = vmatmul.f32.gmra.mxu0 %v942
    %v1993 = vpop.f32.mrf.mxu0
    %v1994 = vadd.f32 %v1960, %v1993
    %1995 = vdwg.mxu0
    %v1996 = vld [vmem:[%s4 + $0x157] sm:$0x1]
    %v1997 = vmul.f32 %v1954, %v296
    %v1998 = vmul.f32 %v1957, %v297
    %v1999 = vmul.f32 %v1954, %v298
    %v2000 = vmul.f32 %v1957, %v299
    %v2001 = vmul.f32 %v1954, %v300
    %v2002 = vmul.f32 %v1957, %v301
    %v2003 = vmul.f32 %v1954, %v302
    %v2004 = vmul.f32 %v1957, %v303
    %v2005 = vmul.f32 %v1991, %v296
    %v2006 = vmul.f32 %v1994, %v297
    %v2007 = vmul.f32 %v1991, %v298
    %v2008 = vmul.f32 %v1994, %v299
    %v2009 = vmul.f32 %v1991, %v300
    %v2010 = vmul.f32 %v1994, %v301
    %v2011 = vmul.f32 %v1991, %v302
    %v2012 = vmul.f32 %v1994, %v303
    %v2014 = vsel %vm304, %v1913, 0
    %v2017 = vsel %vm304, %v1916, 0
    %v2020 = vsel %vm304, %v1997, 0
    %v2023 = vsel %vm304, %v1998, 0
    %v2026 = vsel %vm304, %v1999, 0
    %v2029 = vsel %vm304, %v2000, 0
    %v2032 = vsel %vm304, %v2001, 0
    %v2035 = vsel %vm304, %v2002, 0
    %v2038 = vsel %vm304, %v2003, 0
    %v2041 = vsel %vm304, %v2004, 0
    %2043 = vmatpush.xpose.msra.mxu0 0.0
    %2044 = vmatpush.xpose.msra.mxu0 0.0
    %2045 = vmatpush.xpose.msra.mxu0 0.0
    %2046 = vmatpush.xpose.msra.mxu0 0.0
    %2047 = vmatpush.xpose.msra.mxu0 0.0
    %2048 = vmatpush.xpose.msra.mxu0 0.0
    %2049 = vmatpush.xpose.msra.mxu0 0.0
    %2050 = vmatpush.xpose.msra.mxu0 0.0
    %2051 = vmatpush.xpose.msra.mxu0 %v2041
    %2052 = vmatpush.xpose.msra.mxu0 %v2038
    %2053 = vmatpush.xpose.msra.mxu0 %v2035
    %2054 = vmatpush.xpose.msra.mxu0 %v2032
    %2055 = vmatpush.xpose.msra.mxu0 %v2029
    %2056 = vmatpush.xpose.msra.mxu0 %v2026
    %2057 = vmatpush.xpose.msra.mxu0 %v2023
    %2058 = vmatpush.xpose.msra.mxu0 %v2020
    %2059 = vmatmul.f32.gmra.mxu0 %v2014
    %v2060 = vpop.f32.mrf.mxu0
    %v2061 = vadd.f32 %v27, %v2060
    %2062 = vmatmul.f32.gmra.mxu0 %v2017
    %v2063 = vpop.f32.mrf.mxu0
    %v2064 = vadd.f32 %v28, %v2063
    %2065 = vdwg.mxu0
    %v2066 = vsel %vm654, %v2061, -inf
    %2067 = vmax.xlane.f32.xlu0 %v2066
    %v2068 = vpop.xlane.xlu0 %2067
    %v2069 = vsel %vm654, %v2064, -inf
    %2070 = vmax.xlane.f32.xlu0 %v2069
    %v2071 = vpop.xlane.xlu0 %2070
    %v2072 = vsub.f32 %v2061, %v2068
    %v2073 = vsub.f32 %v2064, %v2071
    %v2074 = vmul.f32 %v2072, 1.442695
    %v2075 = vpow.pop %v2074
    %v2076 = vmul.f32 %v2073, 1.442695
    %v2077 = vpow.pop %v2076
    %v2079 = vsel %vm654, %v2075, 0
    %v2082 = vsel %vm654, %v2077, 0
    %2084 = vmatpush.msra.mxu0 0.0
    %2085 = vmatpush.msra.mxu0 0.0
    %2086 = vmatpush.msra.mxu0 0.0
    %2087 = vmatpush.msra.mxu0 0.0
    %2088 = vmatpush.msra.mxu0 0.0
    %2089 = vmatpush.msra.mxu0 0.0
    %2090 = vmatpush.msra.mxu0 0.0
    %2091 = vmatpush.msra.mxu0 0.0
    %2092 = vmatpush.msra.mxu0 %v377
    %2093 = vmatpush.msra.mxu0 %v376
    %2094 = vmatpush.msra.mxu0 %v375
    %2095 = vmatpush.msra.mxu0 %v374
    %2096 = vmatpush.msra.mxu0 %v373
    %2097 = vmatpush.msra.mxu0 %v372
    %2098 = vmatpush.msra.mxu0 %v371
    %2099 = vmatpush.msra.mxu0 %v370
    %2100 = vmatmul.f32.gmra.mxu0 %v2079
    %v2101 = vpop.f32.mrf.mxu0
    %v2102 = vadd.f32 0.0, %v2101
    %2103 = vmatmul.f32.gmra.mxu0 %v2082
    %v2104 = vpop.f32.mrf.mxu0
    %v2105 = vadd.f32 0.0, %v2104
    %2106 = vdwg.mxu0
    %v2107 = vrcp.pop %v2102
    %v2108 = vmul.f32 %v2102, %v2107
    %v2109 = vsub.f32 1.0, %v2108
    %v2110 = vmul.f32 %v2107, %v2109
    %v2111 = vadd.f32 %v2107, %v2110
    %vm2112 = vweird.f32 %v2102
    %vm2113 = vweird.f32 %v2107
    %vm2114 = vmor %vm2112, %vm2113
    %v2115 = vsel %vm2114, %v2107, %v2111
    %v2116 = vand.u32 2147483647, %v2102
    %vm2117 = vcmp.eq.f32.partialorder %v2116, 8.507059e+37
    %v2118 = vand.u32 %v2102, 2147483648
    %v2119 = vor.u32 1.1754944e-38, %v2118
    %v2120 = vsel %vm2117, %v2119, %v2115
    %v2121 = vmul.f32 %v2075, %v2120
    %v2122 = vrcp.pop %v2105
    %v2123 = vmul.f32 %v2105, %v2122
    %v2124 = vsub.f32 1.0, %v2123
    %v2125 = vmul.f32 %v2122, %v2124
    %v2126 = vadd.f32 %v2122, %v2125
    %vm2127 = vweird.f32 %v2105
    %vm2128 = vweird.f32 %v2122
    %vm2129 = vmor %vm2127, %vm2128
    %v2130 = vsel %vm2129, %v2122, %v2126
    %v2131 = vand.u32 2147483647, %v2105
    %vm2132 = vcmp.eq.f32.partialorder %v2131, 8.507059e+37
    %v2133 = vand.u32 %v2105, 2147483648
    %v2134 = vor.u32 1.1754944e-38, %v2133
    %v2135 = vsel %vm2132, %v2134, %v2130
    %v2136 = vmul.f32 %v2077, %v2135
    %v2138 = vsel %vm654, %v2121, 0
    %v2141 = vsel %vm654, %v2136, 0
    %2143 = vmatpush.msra.mxu0 0.0
    %2144 = vmatpush.msra.mxu0 0.0
    %2145 = vmatpush.msra.mxu0 0.0
    %2146 = vmatpush.msra.mxu0 0.0
    %2147 = vmatpush.msra.mxu0 0.0
    %2148 = vmatpush.msra.mxu0 0.0
    %2149 = vmatpush.msra.mxu0 0.0
    %2150 = vmatpush.msra.mxu0 0.0
    %2151 = vmatpush.msra.mxu0 %v2012
    %2152 = vmatpush.msra.mxu0 %v2011
    %2153 = vmatpush.msra.mxu0 %v2010
    %2154 = vmatpush.msra.mxu0 %v2009
    %2155 = vmatpush.msra.mxu0 %v2008
    %2156 = vmatpush.msra.mxu0 %v2007
    %2157 = vmatpush.msra.mxu0 %v2006
    %2158 = vmatpush.msra.mxu0 %v2005
    %2159 = vmatmul.f32.gmra.mxu0 %v2138
    %v2160 = vpop.f32.mrf.mxu0
    %v2161 = vadd.f32 0.0, %v2160
    %2162 = vmatmul.f32.gmra.mxu0 %v2141
    %v2163 = vpop.f32.mrf.mxu0
    %v2164 = vadd.f32 0.0, %v2163
    %2165 = vdwg.mxu0
    %v2166 = vperm.slane %v1996, 0
    %2167 = vrot.lane.b32.xlu0 %v1883, 32
    %v2168 = vpop.permute.xlu0 %2167
    %2169 = vrot.lane.b32.xlu0 %v1884, 32
    %v2170 = vpop.permute.xlu0 %2169
    %2171 = vrot.lane.b32.xlu0 %v1885, 32
    %v2172 = vpop.permute.xlu0 %2171
    %2173 = vrot.lane.b32.xlu0 %v1886, 32
    %v2174 = vpop.permute.xlu0 %2173
    %v2180 = vsel %vm304, %v2161, 0
    %v2183 = vsel %vm304, %v2164, 0
    %2185 = vmatpush.msra.mxu0 0.0
    %2186 = vmatpush.msra.mxu0 0.0
    %2187 = vmatpush.msra.mxu0 0.0
    %2188 = vmatpush.msra.mxu0 0.0
    %2189 = vmatpush.msra.mxu0 0.0
    %2190 = vmatpush.msra.mxu0 0.0
    %2191 = vmatpush.msra.mxu0 0.0
    %2192 = vmatpush.msra.mxu0 0.0
    %2193 = vmatpush.msra.mxu0 0.0
    %2194 = vmatpush.msra.mxu0 0.0
    %2195 = vmatpush.msra.mxu0 0.0
    %2196 = vmatpush.msra.mxu0 0.0
    %2197 = vmatpush.msra.mxu0 %v2174
    %2198 = vmatpush.msra.mxu0 %v2172
    %2199 = vmatpush.msra.mxu0 %v2170
    %2200 = vmatpush.msra.mxu0 %v2168
    %2201 = vmatmul.f32.gmra.mxu0 %v2180
    %v2202 = vpop.f32.mrf.mxu0
    %v2203 = vadd.f32 %v2166, %v2202
    %2204 = vmatmul.f32.gmra.mxu0 %v2183
    %v2205 = vpop.f32.mrf.mxu0
    %v2206 = vadd.f32 %v2166, %v2205
    %2207 = vdwg.mxu0
    %v2208 = vadd.f32 %v1795, %v2203
    %v2209 = vadd.f32 %v1796, %v2206
    %v2210 = vld [vmem:[%s4 + $0x15e] sm:$0x1]
    %v2211 = vld [vmem:[%s4 + $0x15f] sm:$0x1]
    %v2212 = vsel %vm304, %v2208, 0.0
    %2213 = vadd.xlane.f32.xlu0 %v2212
    %v2214 = vpop.xlane.xlu0 %2213
    %v2215 = vsel %vm304, %v2209, 0.0
    %2216 = vadd.xlane.f32.xlu0 %v2215
    %v2217 = vpop.xlane.xlu0 %2216
    %v2218 = vmul.f32 %v2214, %v392
    %v2219 = vmul.f32 %v2217, %v392
    %v2220 = vsub.f32 %v2208, %v2218
    %v2221 = vsub.f32 %v2209, %v2219
    %v2222 = vmul.f32 %v2220, %v2220
    %v2223 = vmul.f32 %v2221, %v2221
    %v2224 = vsel %vm304, %v2222, 0.0
    %2225 = vadd.xlane.f32.xlu0 %v2224
    %v2226 = vpop.xlane.xlu0 %2225
    %v2227 = vsel %vm304, %v2223, 0.0
    %2228 = vadd.xlane.f32.xlu0 %v2227
    %v2229 = vpop.xlane.xlu0 %2228
    %v2230 = vmul.f32 %v2226, 0.032258064
    %v2231 = vmul.f32 %v2229, 0.032258064
    %v2232 = vrsqrt.pop %v2230
    %v2233 = vmul.f32 %v2232, %v2230
    %v2234 = vmul.f32 %v2233, %v2232
    %v2235 = vmul.f32 0.5, %v2234
    %v2236 = vsub.f32 1.5, %v2235
    %v2237 = vmul.f32 %v2232, %v2236
    %v2238 = vmul.f32 %v2230, %v2237
    %vm2239 = vcmp.eq.f32.partialorder %v2230, inf
    %v2240 = vsel %vm2239, %v2230, %v2238
    %vm2241 = vcmp.eq.f32.partialorder %v2230, 0.0
    %v2242 = vand.u32 %v2230, 2147483648
    %v2243 = vsel %vm2241, %v2242, %v2240
    %v2244 = vrsqrt.pop %v2231
    %v2245 = vmul.f32 %v2244, %v2231
    %v2246 = vmul.f32 %v2245, %v2244
    %v2247 = vmul.f32 0.5, %v2246
    %v2248 = vsub.f32 1.5, %v2247
    %v2249 = vmul.f32 %v2244, %v2248
    %v2250 = vmul.f32 %v2231, %v2249
    %vm2251 = vcmp.eq.f32.partialorder %v2231, inf
    %v2252 = vsel %vm2251, %v2231, %v2250
    %vm2253 = vcmp.eq.f32.partialorder %v2231, 0.0
    %v2254 = vand.u32 %v2231, 2147483648
    %v2255 = vsel %vm2253, %v2254, %v2252
    %v2256 = vadd.f32 %v2243, 1e-06
    %v2257 = vadd.f32 %v2255, 1e-06
    %v2258 = vrcp.pop %v2256
    %v2259 = vmul.f32 %v2256, %v2258
    %v2260 = vsub.f32 1.0, %v2259
    %v2261 = vmul.f32 %v2258, %v2260
    %v2262 = vadd.f32 %v2258, %v2261
    %vm2263 = vweird.f32 %v2256
    %vm2264 = vweird.f32 %v2258
    %vm2265 = vmor %vm2263, %vm2264
    %v2266 = vsel %vm2265, %v2258, %v2262
    %v2267 = vand.u32 2147483647, %v2256
    %vm2268 = vcmp.eq.f32.partialorder %v2267, 8.507059e+37
    %v2269 = vand.u32 %v2256, 2147483648
    %v2270 = vor.u32 1.1754944e-38, %v2269
    %v2271 = vsel %vm2268, %v2270, %v2266
    %v2272 = vmul.f32 1.0, %v2271
    %v2273 = vrcp.pop %v2257
    %v2274 = vmul.f32 %v2257, %v2273
    %v2275 = vsub.f32 1.0, %v2274
    %v2276 = vmul.f32 %v2273, %v2275
    %v2277 = vadd.f32 %v2273, %v2276
    %vm2278 = vweird.f32 %v2257
    %vm2279 = vweird.f32 %v2273
    %vm2280 = vmor %vm2278, %vm2279
    %v2281 = vsel %vm2280, %v2273, %v2277
    %v2282 = vand.u32 2147483647, %v2257
    %vm2283 = vcmp.eq.f32.partialorder %v2282, 8.507059e+37
    %v2284 = vand.u32 %v2257, 2147483648
    %v2285 = vor.u32 1.1754944e-38, %v2284
    %v2286 = vsel %vm2283, %v2285, %v2281
    %v2287 = vmul.f32 1.0, %v2286
    %v2288 = vmul.f32 %v2220, %v2272
    %v2289 = vmul.f32 %v2221, %v2287
    %v2290 = vperm.slane %v2210, 0
    %v2291 = vmul.f32 %v2290, %v2288
    %v2292 = vmul.f32 %v2290, %v2289
    %v2293 = vperm.slane %v2211, 0
    %v2294 = vadd.f32 %v2291, %v2293
    %v2295 = vadd.f32 %v2292, %v2293
    %v2296 = vld [vmem:[%s4 + $0xf0] sm:$0xff]
    %v2297 = vld [vmem:[%s4 + $0xf8] sm:$0xff]
    %v2298 = vld [vmem:[%s4 + $0x100] sm:$0xff]
    %v2299 = vld [vmem:[%s4 + $0x108] sm:$0xff]
    %v2300 = vld [vmem:[%s4 + $0x158] sm:$0x1]
    %v2301 = vperm.slane %v2300, 0
    %v2303 = vsel %vm304, %v2294, 0
    %v2306 = vsel %vm304, %v2295, 0
    %2308 = vmatpush.msra.mxu0 0.0
    %2309 = vmatpush.msra.mxu0 0.0
    %2310 = vmatpush.msra.mxu0 0.0
    %2311 = vmatpush.msra.mxu0 0.0
    %2312 = vmatpush.msra.mxu0 0.0
    %2313 = vmatpush.msra.mxu0 0.0
    %2314 = vmatpush.msra.mxu0 0.0
    %2315 = vmatpush.msra.mxu0 0.0
    %2316 = vmatpush.msra.mxu0 0.0
    %2317 = vmatpush.msra.mxu0 0.0
    %2318 = vmatpush.msra.mxu0 0.0
    %2319 = vmatpush.msra.mxu0 0.0
    %2320 = vmatpush.msra.mxu0 %v2299
    %2321 = vmatpush.msra.mxu0 %v2298
    %2322 = vmatpush.msra.mxu0 %v2297
    %2323 = vmatpush.msra.mxu0 %v2296
    %2324 = vmatmul.f32.gmra.mxu0 %v2303
    %v2325 = vpop.f32.mrf.mxu0
    %v2326 = vadd.f32 %v2301, %v2325
    %2327 = vmatmul.f32.gmra.mxu0 %v2306
    %v2328 = vpop.f32.mrf.mxu0
    %v2329 = vadd.f32 %v2301, %v2328
    %2330 = vdwg.mxu0
    %v2331 = vmax.f32 %v2326, 0.0
    %v2332 = vmax.f32 %v2329, 0.0
    %v2333 = vld [vmem:[%s4 + $0x110] sm:$0xff]
    %v2334 = vld [vmem:[%s4 + $0x118] sm:$0xff]
    %v2335 = vld [vmem:[%s4 + $0x120] sm:$0xff]
    %v2336 = vld [vmem:[%s4 + $0x128] sm:$0xff]
    %v2337 = vld [vmem:[%s4 + $0x130] sm:$0xff]
    %v2338 = vld [vmem:[%s4 + $0x138] sm:$0xff]
    %v2339 = vld [vmem:[%s4 + $0x140] sm:$0xff]
    %v2340 = vld [vmem:[%s4 + $0x148] sm:$0xff]
    %v2342 = vsel %vm654, %v2331, 0
    %v2345 = vsel %vm654, %v2332, 0
    %2347 = vmatpush.msra.mxu0 0.0
    %2348 = vmatpush.msra.mxu0 0.0
    %2349 = vmatpush.msra.mxu0 0.0
    %2350 = vmatpush.msra.mxu0 0.0
    %2351 = vmatpush.msra.mxu0 0.0
    %2352 = vmatpush.msra.mxu0 0.0
    %2353 = vmatpush.msra.mxu0 0.0
    %2354 = vmatpush.msra.mxu0 0.0
    %2355 = vmatpush.msra.mxu0 %v2340
    %2356 = vmatpush.msra.mxu0 %v2339
    %2357 = vmatpush.msra.mxu0 %v2338
    %2358 = vmatpush.msra.mxu0 %v2337
    %2359 = vmatpush.msra.mxu0 %v2336
    %2360 = vmatpush.msra.mxu0 %v2335
    %2361 = vmatpush.msra.mxu0 %v2334
    %2362 = vmatpush.msra.mxu0 %v2333
    %2363 = vmatmul.f32.gmra.mxu0 %v2342
    %v2364 = vpop.f32.mrf.mxu0
    %v2365 = vadd.f32 0.0, %v2364
    %2366 = vmatmul.f32.gmra.mxu0 %v2345
    %v2367 = vpop.f32.mrf.mxu0
    %v2368 = vadd.f32 0.0, %v2367
    %2369 = vdwg.mxu0
    %v2370 = vadd.f32 %v2208, %v2365
    %v2371 = vadd.f32 %v2209, %v2368
    %v2372 = vld [vmem:[%s4 + $0x159] sm:$0x1]
    %v2373 = vperm.slane %v2372, 0
    %v2374 = vadd.f32 %v2370, %v2373
    %v2375 = vadd.f32 %v2371, %v2373
    %v2376 = vld [vmem:[%s4 + $0x160] sm:$0x1]
    %v2377 = vld [vmem:[%s4 + $0x161] sm:$0x1]
    %v2378 = vsel %vm304, %v2374, 0.0
    %2379 = vadd.xlane.f32.xlu0 %v2378
    %v2380 = vpop.xlane.xlu0 %2379
    %v2381 = vsel %vm304, %v2375, 0.0
    %2382 = vadd.xlane.f32.xlu0 %v2381
    %v2383 = vpop.xlane.xlu0 %2382
    %v2384 = vmul.f32 %v2380, %v392
    %v2385 = vmul.f32 %v2383, %v392
    %v2386 = vsub.f32 %v2374, %v2384
    %v2387 = vsub.f32 %v2375, %v2385
    %v2388 = vmul.f32 %v2386, %v2386
    %v2389 = vmul.f32 %v2387, %v2387
    %v2390 = vsel %vm304, %v2388, 0.0
    %2391 = vadd.xlane.f32.xlu0 %v2390
    %v2392 = vpop.xlane.xlu0 %2391
    %v2393 = vsel %vm304, %v2389, 0.0
    %2394 = vadd.xlane.f32.xlu0 %v2393
    %v2395 = vpop.xlane.xlu0 %2394
    %v2396 = vmul.f32 %v2392, 0.032258064
    %v2397 = vmul.f32 %v2395, 0.032258064
    %v2398 = vrsqrt.pop %v2396
    %v2399 = vmul.f32 %v2398, %v2396
    %v2400 = vmul.f32 %v2399, %v2398
    %v2401 = vmul.f32 0.5, %v2400
    %v2402 = vsub.f32 1.5, %v2401
    %v2403 = vmul.f32 %v2398, %v2402
    %v2404 = vmul.f32 %v2396, %v2403
    %vm2405 = vcmp.eq.f32.partialorder %v2396, inf
    %v2406 = vsel %vm2405, %v2396, %v2404
    %vm2407 = vcmp.eq.f32.partialorder %v2396, 0.0
    %v2408 = vand.u32 %v2396, 2147483648
    %v2409 = vsel %vm2407, %v2408, %v2406
    %v2410 = vrsqrt.pop %v2397
    %v2411 = vmul.f32 %v2410, %v2397
    %v2412 = vmul.f32 %v2411, %v2410
    %v2413 = vmul.f32 0.5, %v2412
    %v2414 = vsub.f32 1.5, %v2413
    %v2415 = vmul.f32 %v2410, %v2414
    %v2416 = vmul.f32 %v2397, %v2415
    %vm2417 = vcmp.eq.f32.partialorder %v2397, inf
    %v2418 = vsel %vm2417, %v2397, %v2416
    %vm2419 = vcmp.eq.f32.partialorder %v2397, 0.0
    %v2420 = vand.u32 %v2397, 2147483648
    %v2421 = vsel %vm2419, %v2420, %v2418
    %v2422 = vadd.f32 %v2409, 1e-06
    %v2423 = vadd.f32 %v2421, 1e-06
    %v2424 = vrcp.pop %v2422
    %v2425 = vmul.f32 %v2422, %v2424
    %v2426 = vsub.f32 1.0, %v2425
    %v2427 = vmul.f32 %v2424, %v2426
    %v2428 = vadd.f32 %v2424, %v2427
    %vm2429 = vweird.f32 %v2422
    %vm2430 = vweird.f32 %v2424
    %vm2431 = vmor %vm2429, %vm2430
    %v2432 = vsel %vm2431, %v2424, %v2428
    %v2433 = vand.u32 2147483647, %v2422
    %vm2434 = vcmp.eq.f32.partialorder %v2433, 8.507059e+37
    %v2435 = vand.u32 %v2422, 2147483648
    %v2436 = vor.u32 1.1754944e-38, %v2435
    %v2437 = vsel %vm2434, %v2436, %v2432
    %v2438 = vmul.f32 1.0, %v2437
    %v2439 = vrcp.pop %v2423
    %v2440 = vmul.f32 %v2423, %v2439
    %v2441 = vsub.f32 1.0, %v2440
    %v2442 = vmul.f32 %v2439, %v2441
    %v2443 = vadd.f32 %v2439, %v2442
    %vm2444 = vweird.f32 %v2423
    %vm2445 = vweird.f32 %v2439
    %vm2446 = vmor %vm2444, %vm2445
    %v2447 = vsel %vm2446, %v2439, %v2443
    %v2448 = vand.u32 2147483647, %v2423
    %vm2449 = vcmp.eq.f32.partialorder %v2448, 8.507059e+37
    %v2450 = vand.u32 %v2423, 2147483648
    %v2451 = vor.u32 1.1754944e-38, %v2450
    %v2452 = vsel %vm2449, %v2451, %v2447
    %v2453 = vmul.f32 1.0, %v2452
    %v2454 = vmul.f32 %v2386, %v2438
    %v2455 = vmul.f32 %v2387, %v2453
    %v2456 = vperm.slane %v2376, 0
    %v2457 = vmul.f32 %v2456, %v2454
    %v2458 = vmul.f32 %v2456, %v2455
    %v2459 = vperm.slane %v2377, 0
    %v2460 = vadd.f32 %v2457, %v2459
    %v2461 = vadd.f32 %v2458, %v2459
    %2462 = vst.msk [vmem:[#allocation2] sm:$0xff] %vm304, %v2460
    %2463 = vst.msk [vmem:[#allocation2 + $0x8] sm:$0xff] %vm304, %v2461
    // Predicated region
    $region22: #{decoder_forward.1} parent=1 // pred_check
      _
    $region23: #{decoder_forward.1} parent=1 // pred_check_branch
      %2465 = sbr.rel (0) target = $region25
    $region24: #{decoder_forward.1} parent=1 // pred_region
      %2467 = vsyncadd [#allocation3], 0
      %s2468 = sshll.u32 [#allocation2], 4
      %s2469 = int_to_ptr.vmem [resolvable:$true] %s2468
      %s2470 = sshll.u32 %s5, 4
      %s2471 = int_to_ptr.hbm [resolvable:$true] %s2470
      %2476 = dma.vmem_to_hbm [thread:$0]  %s2469, 256, %s2471, [#allocation3], 128, 128, 8
    $region25: #{decoder_forward.1} parent=1 // pred_fallthru
      _
    // Predicated region
    $region26: #{decoder_forward.1} parent=1 // pred_check
      _
    $region27: #{decoder_forward.1} parent=1 // pred_check_branch
      %2478 = sbr.rel (0) target = $region29
    $region28: #{decoder_forward.1} parent=1 // pred_region
      %2480 = dma.done [#allocation3], 256
    $region29: #{decoder_forward.1} parent=1 // pred_fallthru
      _
    %2481 = vsyncpa [#allocation3], 1

</llo_original>
